<compile_context>
chip_gen: v5e
topology: v5e:2x2
jax: 0.10.0
libtpu: 0.0.40
codegen_flags: <defaults>
</compile_context>

<pallas_src>
import functools
import math

import jax
import jax.numpy as jnp
from jax.experimental import pallas as pl
from jax.experimental.pallas import tpu as pltpu


_LAYER_PARAM_ORDER = ("wq", "wk", "wv", "bq", "bk", "bv", "wo", "bo",
                      "ln1w", "ln1b", "w1", "b1", "w2", "b2", "ln2w", "ln2b")


# ----------------------------------------------------------------------------
# Fully fused kernel: all encoder layers + collapsed MLP head.
# Grid = (num_layers,); activation lives in VMEM scratch across grid steps.
# ----------------------------------------------------------------------------
def _fused_transformer_kernel(
        x_ref, qv_ref,
        wq_ref, wk_ref, wv_ref, bq_ref, bk_ref, bv_ref,
        wo_ref, bo_ref, ln1w_ref, ln1b_ref,
        w1_ref, b1_ref, w2_ref, b2_ref, ln2w_ref, ln2b_ref,
        hwx_ref, hwq_ref, hb_ref,
        out_ref,
        acc_ref,
        *, nhead, eps=1e-5):
    layer = pl.program_id(0)
    num_layers = pl.num_programs(0)

    B, S, D = x_ref.shape
    N = B * S
    dh = D // nhead
    scale = 1.0 / math.sqrt(dh)

    # Load the input activation into the resident VMEM scratch on the first step.
    @pl.when(layer == 0)
    def _():
        acc_ref[...] = x_ref[...].reshape(N, D)

    x2 = acc_ref[...]                                   # (B*S, D) activation

    # --- self attention: Q/K/V projections (weights stored (in, out)) ---
    wo = wo_ref[0]
    q = jnp.dot(x2, wq_ref[0], preferred_element_type=jnp.float32) + bq_ref[0]
    k = jnp.dot(x2, wk_ref[0], preferred_element_type=jnp.float32) + bk_ref[0]
    v = jnp.dot(x2, wv_ref[0], preferred_element_type=jnp.float32) + bv_ref[0]
    q = q * scale

    q3 = q.reshape(B, S, D)
    k3 = k.reshape(B, S, D)
    v3 = v.reshape(B, S, D)

    # Heads: batched-over-batch einsums; fold each head straight into the output
    # projection (sum_h head_h @ Wo[h*dh:(h+1)*dh, :]) -> no concatenate.
    attn = jnp.zeros((N, D), jnp.float32)
    for h in range(nhead):                              # static unroll (nhead=4)
        qh = q3[:, :, h * dh:(h + 1) * dh]
        kh = k3[:, :, h * dh:(h + 1) * dh]
        vh = v3[:, :, h * dh:(h + 1) * dh]
        logits = jnp.einsum('bqd,bkd->bqk', qh, kh,
                            preferred_element_type=jnp.float32)   # (B, S, S)
        logits = logits - jnp.max(logits, axis=-1, keepdims=True)
        p = jnp.exp(logits)
        p = p * pl.reciprocal(jnp.sum(p, axis=-1, keepdims=True), approx=True)
        oh = jnp.einsum('bqk,bkd->bqd', p, vh,
                        preferred_element_type=jnp.float32)       # (B, S, dh)
        attn += jnp.dot(oh.reshape(N, dh), wo[h * dh:(h + 1) * dh, :],
                        preferred_element_type=jnp.float32)
    attn = attn + bo_ref[0]

    # --- residual + LayerNorm 1 (post-norm) ---
    h1 = x2 + attn
    mu1 = jnp.mean(h1, axis=-1, keepdims=True)
    var1 = jnp.mean(jnp.square(h1 - mu1), axis=-1, keepdims=True)
    h1 = (h1 - mu1) * jax.lax.rsqrt(var1 + eps) * ln1w_ref[0] + ln1b_ref[0]

    # --- feed-forward: linear2(relu(linear1(x))) ---
    ff = jnp.dot(h1, w1_ref[0], preferred_element_type=jnp.float32) + b1_ref[0]
    ff = jnp.maximum(ff, 0.0)
    ff = jnp.dot(ff, w2_ref[0], preferred_element_type=jnp.float32) + b2_ref[0]

    # --- residual + LayerNorm 2 ---
    h2 = h1 + ff
    mu2 = jnp.mean(h2, axis=-1, keepdims=True)
    var2 = jnp.mean(jnp.square(h2 - mu2), axis=-1, keepdims=True)
    h2 = (h2 - mu2) * jax.lax.rsqrt(var2 + eps) * ln2w_ref[0] + ln2b_ref[0]

    acc_ref[...] = h2                                   # stays resident in VMEM

    # --- collapsed fc1->fc2->fc3 head, fused into the last layer step ---
    @pl.when(layer == num_layers - 1)
    def _():
        out = jnp.dot(qv_ref[...], hwq_ref[...],
                      preferred_element_type=jnp.float32) + hb_ref[...]
        h23 = h2.reshape(B, S, D)
        for s_idx in range(S):   # per-seq-position slices of the combined weight
            out += jnp.dot(h23[:, s_idx, :], hwx_ref[s_idx],
                           preferred_element_type=jnp.float32)
        out_ref[...] = out


def fused_forward(x, qv, layers, hwx, hwq, hb, *, nhead):
    """x: (B, S, D), qv: (B, q_size) -> (B, out_dim); one pallas_call total."""
    B, S, D = x.shape
    L = layers["wq"].shape[0]
    out_dim = hb.shape[-1]
    lw = [layers[k] for k in _LAYER_PARAM_ORDER]

    def const_spec(a):
        nd = a.ndim
        return pl.BlockSpec(a.shape, lambda l, _nd=nd: (0,) * _nd)

    def layer_spec(a):
        nd = a.ndim
        block = (1,) + a.shape[1:]
        return pl.BlockSpec(block, lambda l, _nd=nd: (l,) + (0,) * (_nd - 1))

    in_specs = [const_spec(x), const_spec(qv)]
    in_specs += [layer_spec(w) for w in lw]
    in_specs += [const_spec(hwx), const_spec(hwq), const_spec(hb)]

    return pl.pallas_call(
        functools.partial(_fused_transformer_kernel, nhead=nhead),
        out_shape=jax.ShapeDtypeStruct((B, out_dim), jnp.float32),
        grid=(L,),
        in_specs=in_specs,
        out_specs=pl.BlockSpec((B, out_dim), lambda l: (0, 0)),
        scratch_shapes=[pltpu.VMEM((B * S, D), jnp.float32)],
        compiler_params=pltpu.CompilerParams(
            dimension_semantics=("arbitrary",)),     # layers are sequential
    )(x, qv, *lw, hwx, hwq, hb)


# ----------------------------------------------------------------------------
# Parameter init (deterministic, synthetic) + full forward
# ----------------------------------------------------------------------------
def init_params(key, input_dim, output_dim, nhead, num_layers, seq_len, q_size,
                dim_feedforward=2048):
    keys = iter(jax.random.split(key, 12 * num_layers + 6))

    def linear(fan_in, fan_out):
        # weight stored as (in, out) — transpose of PyTorch's (out, in).
        w = (jax.random.normal(next(keys), (fan_in, fan_out), jnp.float32)
             / math.sqrt(fan_in))
        b = jax.random.normal(next(keys), (1, fan_out), jnp.float32) * 0.01
        return w, b

    layer_list = []
    for _ in range(num_layers):
        wq, bq = linear(input_dim, input_dim)
        wk, bk = linear(input_dim, input_dim)
        wv, bv = linear(input_dim, input_dim)
        wo, bo = linear(input_dim, input_dim)
        w1, b1 = linear(input_dim, dim_feedforward)
        w2, b2 = linear(dim_feedforward, input_dim)
        layer_list.append(dict(
            wq=wq, wk=wk, wv=wv, bq=bq, bk=bk, bv=bv, wo=wo, bo=bo,
            ln1w=jnp.ones((1, input_dim), jnp.float32),
            ln1b=jnp.zeros((1, input_dim), jnp.float32),
            w1=w1, b1=b1, w2=w2, b2=b2,
            ln2w=jnp.ones((1, input_dim), jnp.float32),
            ln2b=jnp.zeros((1, input_dim), jnp.float32),
        ))
    # Stack every per-layer parameter on a leading `num_layers` axis.
    layers = jax.tree_util.tree_map(lambda *xs: jnp.stack(xs, axis=0),
                                    *layer_list)

    d_flat = input_dim * seq_len
    fc1w, fc1b = linear(d_flat + q_size, d_flat // 2)
    fc2w, fc2b = linear(d_flat // 2, d_flat // 10)
    fc3w, fc3b = linear(d_flat // 10, output_dim)
    head = dict(w1=fc1w, b1=fc1b, w2=fc2w, b2=fc2b, w3=fc3w, b3=fc3b)
    return layers, head


def transformer_forward(src, q, layers, head, *, nhead):
    x = src.astype(jnp.float32)
    B, S, D = x.shape
    d_flat = S * D
    out_dim = head["w3"].shape[1]

    # fc1 -> fc2 -> fc3 has no nonlinearity in the reference module, so it is a
    # single linear: W = W1 @ W2 @ W3, b = (b1 @ W2 + b2) @ W3 + b3.  (glue)
    w_comb = head["w1"] @ head["w2"] @ head["w3"]               # (d_flat+q, out)
    b_comb = (head["b1"] @ head["w2"] + head["b2"]) @ head["w3"] + head["b3"]
    hwx = w_comb[:d_flat].reshape(S, D, out_dim)                # x-part, (S,D,out)
    hwq = w_comb[d_flat:]                                       # q-part, (q,out)

    return fused_forward(x, q.astype(jnp.float32), layers, hwx, hwq, b_comb,
                         nhead=nhead)


# ----------------------------------------------------------------------------
if __name__ == "__main__":
    # small shapes consistent with the module
    input_dim, output_dim = 16, 4
    nhead, num_layers = 4, 2
    seq_len, q_size = 8, 8
    batch = 2

    key = jax.random.PRNGKey(0)
    k_src, k_q, k_param = jax.random.split(key, 3)
    src = jax.random.normal(k_src, (batch, seq_len, input_dim), jnp.float32)
    qv = jax.random.normal(k_q, (batch, q_size), jnp.float32)

    layers, head = init_params(k_param, input_dim, output_dim, nhead,
                               num_layers, seq_len, q_size)

    fwd = jax.jit(functools.partial(transformer_forward, nhead=nhead))
    out = fwd(src, qv, layers, head)
    jax.block_until_ready(out)

    assert out.shape == (batch, output_dim), out.shape
    assert out.dtype == jnp.float32
    print("KERNEL_OK")
</pallas_src>

<mosaic_0001>
module attributes {stable_mosaic.version = 11 : i64} {
  func.func @_fused_transformer_kernel(%arg0: i32, %arg1: memref<2x8x16xf32, #tpu.memory_space<vmem>>, %arg2: memref<2x8xf32, #tpu.memory_space<vmem>>, %arg3: memref<1x16x16xf32, #tpu.memory_space<vmem>>, %arg4: memref<1x16x16xf32, #tpu.memory_space<vmem>>, %arg5: memref<1x16x16xf32, #tpu.memory_space<vmem>>, %arg6: memref<1x1x16xf32, #tpu.memory_space<vmem>>, %arg7: memref<1x1x16xf32, #tpu.memory_space<vmem>>, %arg8: memref<1x1x16xf32, #tpu.memory_space<vmem>>, %arg9: memref<1x16x16xf32, #tpu.memory_space<vmem>>, %arg10: memref<1x1x16xf32, #tpu.memory_space<vmem>>, %arg11: memref<1x1x16xf32, #tpu.memory_space<vmem>>, %arg12: memref<1x1x16xf32, #tpu.memory_space<vmem>>, %arg13: memref<1x16x2048xf32, #tpu.memory_space<vmem>>, %arg14: memref<1x1x2048xf32, #tpu.memory_space<vmem>>, %arg15: memref<1x2048x16xf32, #tpu.memory_space<vmem>>, %arg16: memref<1x1x16xf32, #tpu.memory_space<vmem>>, %arg17: memref<1x1x16xf32, #tpu.memory_space<vmem>>, %arg18: memref<1x1x16xf32, #tpu.memory_space<vmem>>, %arg19: memref<8x16x4xf32, #tpu.memory_space<vmem>>, %arg20: memref<8x4xf32, #tpu.memory_space<vmem>>, %arg21: memref<1x4xf32, #tpu.memory_space<vmem>>, %arg22: memref<2x4xf32, #tpu.memory_space<vmem>>, %arg23: memref<16x16xf32, #tpu.memory_space<vmem>>) attributes {dimension_semantics = [#tpu.dimension_semantics<arbitrary>], iteration_bounds = array<i64: 2>, scalar_prefetch = 0 : i64, scratch_operands = 1 : i64, tpu.core_type = #tpu.core_type<tc>, window_params = [{pipeline_mode = #tpu.pipeline_mode<synchronous>, transform_indices = @transform_0, window_bounds = array<i64: 2, 8, 16>}, {pipeline_mode = #tpu.pipeline_mode<synchronous>, transform_indices = @transform_1, window_bounds = array<i64: 2, 8>}, {transform_indices = @transform_2, window_bounds = array<i64: 1, 16, 16>}, {transform_indices = @transform_3, window_bounds = array<i64: 1, 16, 16>}, {transform_indices = @transform_4, window_bounds = array<i64: 1, 16, 16>}, {transform_indices = @transform_5, window_bounds = array<i64: 1, 1, 16>}, {transform_indices = @transform_6, window_bounds = array<i64: 1, 1, 16>}, {transform_indices = @transform_7, window_bounds = array<i64: 1, 1, 16>}, {transform_indices = @transform_8, window_bounds = array<i64: 1, 16, 16>}, {transform_indices = @transform_9, window_bounds = array<i64: 1, 1, 16>}, {transform_indices = @transform_10, window_bounds = array<i64: 1, 1, 16>}, {transform_indices = @transform_11, window_bounds = array<i64: 1, 1, 16>}, {transform_indices = @transform_12, window_bounds = array<i64: 1, 16, 2048>}, {transform_indices = @transform_13, window_bounds = array<i64: 1, 1, 2048>}, {transform_indices = @transform_14, window_bounds = array<i64: 1, 2048, 16>}, {transform_indices = @transform_15, window_bounds = array<i64: 1, 1, 16>}, {transform_indices = @transform_16, window_bounds = array<i64: 1, 1, 16>}, {transform_indices = @transform_17, window_bounds = array<i64: 1, 1, 16>}, {pipeline_mode = #tpu.pipeline_mode<synchronous>, transform_indices = @transform_18, window_bounds = array<i64: 8, 16, 4>}, {pipeline_mode = #tpu.pipeline_mode<synchronous>, transform_indices = @transform_19, window_bounds = array<i64: 8, 4>}, {pipeline_mode = #tpu.pipeline_mode<synchronous>, transform_indices = @transform_20, window_bounds = array<i64: 1, 4>}, {pipeline_mode = #tpu.pipeline_mode<synchronous>, transform_indices = @transform_21, window_bounds = array<i64: 2, 4>}]} {
    %c0_i32 = arith.constant 0 : i32
    %0 = arith.cmpi eq, %arg0, %c0_i32 : i32
    %1 = arith.extui %0 : i1 to i32
    %c0_i32_0 = arith.constant 0 : i32
    %2 = arith.cmpi ne, %1, %c0_i32_0 : i32
    scf.if %2 {
      %c0_90 = arith.constant 0 : index
      %c0_91 = arith.constant 0 : index
      %c0_92 = arith.constant 0 : index
      %187 = vector.load %arg1[%c0_90, %c0_91, %c0_92] : memref<2x8x16xf32, #tpu.memory_space<vmem>>, vector<2x8x16xf32>
      %188 = vector.shape_cast %187 : vector<2x8x16xf32> to vector<16x16xf32>
      %c0_93 = arith.constant 0 : index
      %c0_94 = arith.constant 0 : index
      %189 = vector.load %arg23[%c0_93, %c0_94] : memref<16x16xf32, #tpu.memory_space<vmem>>, vector<16x16xf32>
      tpu.vector_store %arg23[%c0_93, %c0_94], %188 {strides = array<i32>} : memref<16x16xf32, #tpu.memory_space<vmem>>, vector<16x16xf32>,
    } else {
    }
    %c0 = arith.constant 0 : index
    %c0_1 = arith.constant 0 : index
    %3 = vector.load %arg23[%c0, %c0_1] : memref<16x16xf32, #tpu.memory_space<vmem>>, vector<16x16xf32>
    %c0_2 = arith.constant 0 : index
    %c0_3 = arith.constant 0 : index
    %c0_4 = arith.constant 0 : index
    %4 = vector.load %arg9[%c0_2, %c0_3, %c0_4] : memref<1x16x16xf32, #tpu.memory_space<vmem>>, vector<1x16x16xf32>
    %5 = vector.shape_cast %4 : vector<1x16x16xf32> to vector<16x16xf32>
    %c0_5 = arith.constant 0 : index
    %c0_6 = arith.constant 0 : index
    %c0_7 = arith.constant 0 : index
    %6 = vector.load %arg3[%c0_5, %c0_6, %c0_7] : memref<1x16x16xf32, #tpu.memory_space<vmem>>, vector<1x16x16xf32>
    %7 = vector.shape_cast %6 : vector<1x16x16xf32> to vector<16x16xf32>
    %cst = arith.constant dense<0.000000e+00> : vector<16x16xf32>
    %8 = tpu.matmul %3, %7, %cst {dimension_numbers = #tpu.dot_dimension_numbers<[1], [0], [0], [1], [0, 0, 1, 1], [], []>} : vector<16x16xf32>, vector<16x16xf32>, vector<16x16xf32> -> vector<16x16xf32>
    %c0_8 = arith.constant 0 : index
    %c0_9 = arith.constant 0 : index
    %c0_10 = arith.constant 0 : index
    %9 = vector.load %arg6[%c0_8, %c0_9, %c0_10] : memref<1x1x16xf32, #tpu.memory_space<vmem>>, vector<1x1x16xf32>
    %10 = vector.shape_cast %9 : vector<1x1x16xf32> to vector<1x16xf32>
    %11 = vector.broadcast %10 : vector<1x16xf32> to vector<16x16xf32>
    %12 = arith.addf %8, %11 : vector<16x16xf32>
    %c0_11 = arith.constant 0 : index
    %c0_12 = arith.constant 0 : index
    %c0_13 = arith.constant 0 : index
    %13 = vector.load %arg4[%c0_11, %c0_12, %c0_13] : memref<1x16x16xf32, #tpu.memory_space<vmem>>, vector<1x16x16xf32>
    %14 = vector.shape_cast %13 : vector<1x16x16xf32> to vector<16x16xf32>
    %cst_14 = arith.constant dense<0.000000e+00> : vector<16x16xf32>
    %15 = tpu.matmul %3, %14, %cst_14 {dimension_numbers = #tpu.dot_dimension_numbers<[1], [0], [0], [1], [0, 0, 1, 1], [], []>} : vector<16x16xf32>, vector<16x16xf32>, vector<16x16xf32> -> vector<16x16xf32>
    %c0_15 = arith.constant 0 : index
    %c0_16 = arith.constant 0 : index
    %c0_17 = arith.constant 0 : index
    %16 = vector.load %arg7[%c0_15, %c0_16, %c0_17] : memref<1x1x16xf32, #tpu.memory_space<vmem>>, vector<1x1x16xf32>
    %17 = vector.shape_cast %16 : vector<1x1x16xf32> to vector<1x16xf32>
    %18 = vector.broadcast %17 : vector<1x16xf32> to vector<16x16xf32>
    %19 = arith.addf %15, %18 : vector<16x16xf32>
    %c0_18 = arith.constant 0 : index
    %c0_19 = arith.constant 0 : index
    %c0_20 = arith.constant 0 : index
    %20 = vector.load %arg5[%c0_18, %c0_19, %c0_20] : memref<1x16x16xf32, #tpu.memory_space<vmem>>, vector<1x16x16xf32>
    %21 = vector.shape_cast %20 : vector<1x16x16xf32> to vector<16x16xf32>
    %cst_21 = arith.constant dense<0.000000e+00> : vector<16x16xf32>
    %22 = tpu.matmul %3, %21, %cst_21 {dimension_numbers = #tpu.dot_dimension_numbers<[1], [0], [0], [1], [0, 0, 1, 1], [], []>} : vector<16x16xf32>, vector<16x16xf32>, vector<16x16xf32> -> vector<16x16xf32>
    %c0_22 = arith.constant 0 : index
    %c0_23 = arith.constant 0 : index
    %c0_24 = arith.constant 0 : index
    %23 = vector.load %arg8[%c0_22, %c0_23, %c0_24] : memref<1x1x16xf32, #tpu.memory_space<vmem>>, vector<1x1x16xf32>
    %24 = vector.shape_cast %23 : vector<1x1x16xf32> to vector<1x16xf32>
    %25 = vector.broadcast %24 : vector<1x16xf32> to vector<16x16xf32>
    %26 = arith.addf %22, %25 : vector<16x16xf32>
    %cst_25 = arith.constant 5.000000e-01 : f32
    %27 = vector.broadcast %cst_25 : f32 to vector<16x16xf32>
    %28 = arith.mulf %12, %27 : vector<16x16xf32>
    %29 = vector.shape_cast %28 : vector<16x16xf32> to vector<2x8x16xf32>
    %30 = vector.shape_cast %19 : vector<16x16xf32> to vector<2x8x16xf32>
    %31 = vector.shape_cast %26 : vector<16x16xf32> to vector<2x8x16xf32>
    %cst_26 = arith.constant 0.000000e+00 : f32
    %32 = vector.broadcast %cst_26 : f32 to vector<16x16xf32>
    %33 = vector.extract_strided_slice %29 {offsets = [0, 0, 0], sizes = [2, 8, 4], strides = [1, 1, 1]} : vector<2x8x16xf32> to vector<2x8x4xf32>
    %34 = vector.extract_strided_slice %30 {offsets = [0, 0, 0], sizes = [2, 8, 4], strides = [1, 1, 1]} : vector<2x8x16xf32> to vector<2x8x4xf32>
    %35 = vector.extract_strided_slice %31 {offsets = [0, 0, 0], sizes = [2, 8, 4], strides = [1, 1, 1]} : vector<2x8x16xf32> to vector<2x8x4xf32>
    "tpu.trace_start"() <{level = 10 : i32, message = "bqd,bkd->bqk"}> : () -> ()
    %cst_27 = arith.constant dense<0.000000e+00> : vector<2x8x8xf32>
    %36 = tpu.matmul %33, %34, %cst_27 {dimension_numbers = #tpu.dot_dimension_numbers<[2], [2], [1], [1], [0, 0, 0, 1, 1, 1], [0], [0]>} : vector<2x8x4xf32>, vector<2x8x4xf32>, vector<2x8x8xf32> -> vector<2x8x8xf32>
    "tpu.trace_stop"() : () -> ()
    %cst_28 = arith.constant dense<0xFF800000> : vector<2x8xf32>
    %37 = vector.multi_reduction <maximumf>, %36, %cst_28 [2] : vector<2x8x8xf32> to vector<2x8xf32>
    %38 = vector.shape_cast %37 : vector<2x8xf32> to vector<2x8x1xf32>
    %39 = vector.broadcast %38 : vector<2x8x1xf32> to vector<2x8x8xf32>
    %40 = arith.subf %36, %39 : vector<2x8x8xf32>
    %41 = math.exp %40 : vector<2x8x8xf32>
    %cst_29 = arith.constant dense<0.000000e+00> : vector<2x8xf32>
    %42 = vector.multi_reduction <add>, %41, %cst_29 [2] : vector<2x8x8xf32> to vector<2x8xf32>
    %43 = vector.shape_cast %42 : vector<2x8xf32> to vector<2x8x1xf32>
    %44 = tpu.reciprocal %43 {approx = true} : vector<2x8x1xf32> -> vector<2x8x1xf32>
    %45 = vector.broadcast %44 : vector<2x8x1xf32> to vector<2x8x8xf32>
    %46 = arith.mulf %41, %45 : vector<2x8x8xf32>
    "tpu.trace_start"() <{level = 10 : i32, message = "bqk,bkd->bqd"}> : () -> ()
    %cst_30 = arith.constant dense<0.000000e+00> : vector<2x8x4xf32>
    %47 = tpu.matmul %46, %35, %cst_30 {dimension_numbers = #tpu.dot_dimension_numbers<[2], [1], [1], [2], [0, 0, 0, 1, 1, 2], [0], [0]>} : vector<2x8x8xf32>, vector<2x8x4xf32>, vector<2x8x4xf32> -> vector<2x8x4xf32>
    "tpu.trace_stop"() : () -> ()
    %48 = vector.shape_cast %47 : vector<2x8x4xf32> to vector<16x4xf32>
    %49 = vector.extract_strided_slice %5 {offsets = [0, 0], sizes = [4, 16], strides = [1, 1]} : vector<16x16xf32> to vector<4x16xf32>
    %cst_31 = arith.constant dense<0.000000e+00> : vector<16x16xf32>
    %50 = tpu.matmul %48, %49, %cst_31 {dimension_numbers = #tpu.dot_dimension_numbers<[1], [0], [0], [1], [0, 0, 1, 1], [], []>} : vector<16x4xf32>, vector<4x16xf32>, vector<16x16xf32> -> vector<16x16xf32>
    %51 = arith.addf %32, %50 : vector<16x16xf32>
    %52 = vector.extract_strided_slice %29 {offsets = [0, 0, 4], sizes = [2, 8, 4], strides = [1, 1, 1]} : vector<2x8x16xf32> to vector<2x8x4xf32>
    %53 = vector.extract_strided_slice %30 {offsets = [0, 0, 4], sizes = [2, 8, 4], strides = [1, 1, 1]} : vector<2x8x16xf32> to vector<2x8x4xf32>
    %54 = vector.extract_strided_slice %31 {offsets = [0, 0, 4], sizes = [2, 8, 4], strides = [1, 1, 1]} : vector<2x8x16xf32> to vector<2x8x4xf32>
    "tpu.trace_start"() <{level = 10 : i32, message = "bqd,bkd->bqk"}> : () -> ()
    %cst_32 = arith.constant dense<0.000000e+00> : vector<2x8x8xf32>
    %55 = tpu.matmul %52, %53, %cst_32 {dimension_numbers = #tpu.dot_dimension_numbers<[2], [2], [1], [1], [0, 0, 0, 1, 1, 1], [0], [0]>} : vector<2x8x4xf32>, vector<2x8x4xf32>, vector<2x8x8xf32> -> vector<2x8x8xf32>
    "tpu.trace_stop"() : () -> ()
    %cst_33 = arith.constant dense<0xFF800000> : vector<2x8xf32>
    %56 = vector.multi_reduction <maximumf>, %55, %cst_33 [2] : vector<2x8x8xf32> to vector<2x8xf32>
    %57 = vector.shape_cast %56 : vector<2x8xf32> to vector<2x8x1xf32>
    %58 = vector.broadcast %57 : vector<2x8x1xf32> to vector<2x8x8xf32>
    %59 = arith.subf %55, %58 : vector<2x8x8xf32>
    %60 = math.exp %59 : vector<2x8x8xf32>
    %cst_34 = arith.constant dense<0.000000e+00> : vector<2x8xf32>
    %61 = vector.multi_reduction <add>, %60, %cst_34 [2] : vector<2x8x8xf32> to vector<2x8xf32>
    %62 = vector.shape_cast %61 : vector<2x8xf32> to vector<2x8x1xf32>
    %63 = tpu.reciprocal %62 {approx = true} : vector<2x8x1xf32> -> vector<2x8x1xf32>
    %64 = vector.broadcast %63 : vector<2x8x1xf32> to vector<2x8x8xf32>
    %65 = arith.mulf %60, %64 : vector<2x8x8xf32>
    "tpu.trace_start"() <{level = 10 : i32, message = "bqk,bkd->bqd"}> : () -> ()
    %cst_35 = arith.constant dense<0.000000e+00> : vector<2x8x4xf32>
    %66 = tpu.matmul %65, %54, %cst_35 {dimension_numbers = #tpu.dot_dimension_numbers<[2], [1], [1], [2], [0, 0, 0, 1, 1, 2], [0], [0]>} : vector<2x8x8xf32>, vector<2x8x4xf32>, vector<2x8x4xf32> -> vector<2x8x4xf32>
    "tpu.trace_stop"() : () -> ()
    %67 = vector.shape_cast %66 : vector<2x8x4xf32> to vector<16x4xf32>
    %68 = vector.extract_strided_slice %5 {offsets = [4, 0], sizes = [4, 16], strides = [1, 1]} : vector<16x16xf32> to vector<4x16xf32>
    %cst_36 = arith.constant dense<0.000000e+00> : vector<16x16xf32>
    %69 = tpu.matmul %67, %68, %cst_36 {dimension_numbers = #tpu.dot_dimension_numbers<[1], [0], [0], [1], [0, 0, 1, 1], [], []>} : vector<16x4xf32>, vector<4x16xf32>, vector<16x16xf32> -> vector<16x16xf32>
    %70 = arith.addf %51, %69 : vector<16x16xf32>
    %71 = vector.extract_strided_slice %29 {offsets = [0, 0, 8], sizes = [2, 8, 4], strides = [1, 1, 1]} : vector<2x8x16xf32> to vector<2x8x4xf32>
    %72 = vector.extract_strided_slice %30 {offsets = [0, 0, 8], sizes = [2, 8, 4], strides = [1, 1, 1]} : vector<2x8x16xf32> to vector<2x8x4xf32>
    %73 = vector.extract_strided_slice %31 {offsets = [0, 0, 8], sizes = [2, 8, 4], strides = [1, 1, 1]} : vector<2x8x16xf32> to vector<2x8x4xf32>
    "tpu.trace_start"() <{level = 10 : i32, message = "bqd,bkd->bqk"}> : () -> ()
    %cst_37 = arith.constant dense<0.000000e+00> : vector<2x8x8xf32>
    %74 = tpu.matmul %71, %72, %cst_37 {dimension_numbers = #tpu.dot_dimension_numbers<[2], [2], [1], [1], [0, 0, 0, 1, 1, 1], [0], [0]>} : vector<2x8x4xf32>, vector<2x8x4xf32>, vector<2x8x8xf32> -> vector<2x8x8xf32>
    "tpu.trace_stop"() : () -> ()
    %cst_38 = arith.constant dense<0xFF800000> : vector<2x8xf32>
    %75 = vector.multi_reduction <maximumf>, %74, %cst_38 [2] : vector<2x8x8xf32> to vector<2x8xf32>
    %76 = vector.shape_cast %75 : vector<2x8xf32> to vector<2x8x1xf32>
    %77 = vector.broadcast %76 : vector<2x8x1xf32> to vector<2x8x8xf32>
    %78 = arith.subf %74, %77 : vector<2x8x8xf32>
    %79 = math.exp %78 : vector<2x8x8xf32>
    %cst_39 = arith.constant dense<0.000000e+00> : vector<2x8xf32>
    %80 = vector.multi_reduction <add>, %79, %cst_39 [2] : vector<2x8x8xf32> to vector<2x8xf32>
    %81 = vector.shape_cast %80 : vector<2x8xf32> to vector<2x8x1xf32>
    %82 = tpu.reciprocal %81 {approx = true} : vector<2x8x1xf32> -> vector<2x8x1xf32>
    %83 = vector.broadcast %82 : vector<2x8x1xf32> to vector<2x8x8xf32>
    %84 = arith.mulf %79, %83 : vector<2x8x8xf32>
    "tpu.trace_start"() <{level = 10 : i32, message = "bqk,bkd->bqd"}> : () -> ()
    %cst_40 = arith.constant dense<0.000000e+00> : vector<2x8x4xf32>
    %85 = tpu.matmul %84, %73, %cst_40 {dimension_numbers = #tpu.dot_dimension_numbers<[2], [1], [1], [2], [0, 0, 0, 1, 1, 2], [0], [0]>} : vector<2x8x8xf32>, vector<2x8x4xf32>, vector<2x8x4xf32> -> vector<2x8x4xf32>
    "tpu.trace_stop"() : () -> ()
    %86 = vector.shape_cast %85 : vector<2x8x4xf32> to vector<16x4xf32>
    %87 = vector.extract_strided_slice %5 {offsets = [8, 0], sizes = [4, 16], strides = [1, 1]} : vector<16x16xf32> to vector<4x16xf32>
    %cst_41 = arith.constant dense<0.000000e+00> : vector<16x16xf32>
    %88 = tpu.matmul %86, %87, %cst_41 {dimension_numbers = #tpu.dot_dimension_numbers<[1], [0], [0], [1], [0, 0, 1, 1], [], []>} : vector<16x4xf32>, vector<4x16xf32>, vector<16x16xf32> -> vector<16x16xf32>
    %89 = arith.addf %70, %88 : vector<16x16xf32>
    %90 = vector.extract_strided_slice %29 {offsets = [0, 0, 12], sizes = [2, 8, 4], strides = [1, 1, 1]} : vector<2x8x16xf32> to vector<2x8x4xf32>
    %91 = vector.extract_strided_slice %30 {offsets = [0, 0, 12], sizes = [2, 8, 4], strides = [1, 1, 1]} : vector<2x8x16xf32> to vector<2x8x4xf32>
    %92 = vector.extract_strided_slice %31 {offsets = [0, 0, 12], sizes = [2, 8, 4], strides = [1, 1, 1]} : vector<2x8x16xf32> to vector<2x8x4xf32>
    "tpu.trace_start"() <{level = 10 : i32, message = "bqd,bkd->bqk"}> : () -> ()
    %cst_42 = arith.constant dense<0.000000e+00> : vector<2x8x8xf32>
    %93 = tpu.matmul %90, %91, %cst_42 {dimension_numbers = #tpu.dot_dimension_numbers<[2], [2], [1], [1], [0, 0, 0, 1, 1, 1], [0], [0]>} : vector<2x8x4xf32>, vector<2x8x4xf32>, vector<2x8x8xf32> -> vector<2x8x8xf32>
    "tpu.trace_stop"() : () -> ()
    %cst_43 = arith.constant dense<0xFF800000> : vector<2x8xf32>
    %94 = vector.multi_reduction <maximumf>, %93, %cst_43 [2] : vector<2x8x8xf32> to vector<2x8xf32>
    %95 = vector.shape_cast %94 : vector<2x8xf32> to vector<2x8x1xf32>
    %96 = vector.broadcast %95 : vector<2x8x1xf32> to vector<2x8x8xf32>
    %97 = arith.subf %93, %96 : vector<2x8x8xf32>
    %98 = math.exp %97 : vector<2x8x8xf32>
    %cst_44 = arith.constant dense<0.000000e+00> : vector<2x8xf32>
    %99 = vector.multi_reduction <add>, %98, %cst_44 [2] : vector<2x8x8xf32> to vector<2x8xf32>
    %100 = vector.shape_cast %99 : vector<2x8xf32> to vector<2x8x1xf32>
    %101 = tpu.reciprocal %100 {approx = true} : vector<2x8x1xf32> -> vector<2x8x1xf32>
    %102 = vector.broadcast %101 : vector<2x8x1xf32> to vector<2x8x8xf32>
    %103 = arith.mulf %98, %102 : vector<2x8x8xf32>
    "tpu.trace_start"() <{level = 10 : i32, message = "bqk,bkd->bqd"}> : () -> ()
    %cst_45 = arith.constant dense<0.000000e+00> : vector<2x8x4xf32>
    %104 = tpu.matmul %103, %92, %cst_45 {dimension_numbers = #tpu.dot_dimension_numbers<[2], [1], [1], [2], [0, 0, 0, 1, 1, 2], [0], [0]>} : vector<2x8x8xf32>, vector<2x8x4xf32>, vector<2x8x4xf32> -> vector<2x8x4xf32>
    "tpu.trace_stop"() : () -> ()
    %105 = vector.shape_cast %104 : vector<2x8x4xf32> to vector<16x4xf32>
    %106 = vector.extract_strided_slice %5 {offsets = [12, 0], sizes = [4, 16], strides = [1, 1]} : vector<16x16xf32> to vector<4x16xf32>
    %cst_46 = arith.constant dense<0.000000e+00> : vector<16x16xf32>
    %107 = tpu.matmul %105, %106, %cst_46 {dimension_numbers = #tpu.dot_dimension_numbers<[1], [0], [0], [1], [0, 0, 1, 1], [], []>} : vector<16x4xf32>, vector<4x16xf32>, vector<16x16xf32> -> vector<16x16xf32>
    %108 = arith.addf %89, %107 : vector<16x16xf32>
    %c0_47 = arith.constant 0 : index
    %c0_48 = arith.constant 0 : index
    %c0_49 = arith.constant 0 : index
    %109 = vector.load %arg10[%c0_47, %c0_48, %c0_49] : memref<1x1x16xf32, #tpu.memory_space<vmem>>, vector<1x1x16xf32>
    %110 = vector.shape_cast %109 : vector<1x1x16xf32> to vector<1x16xf32>
    %111 = vector.broadcast %110 : vector<1x16xf32> to vector<16x16xf32>
    %112 = arith.addf %108, %111 : vector<16x16xf32>
    %113 = arith.addf %3, %112 : vector<16x16xf32>
    %cst_50 = arith.constant dense<0.000000e+00> : vector<16xf32>
    %114 = vector.multi_reduction <add>, %113, %cst_50 [1] : vector<16x16xf32> to vector<16xf32>
    %115 = vector.shape_cast %114 : vector<16xf32> to vector<16x1xf32>
    %cst_51 = arith.constant 1.600000e+01 : f32
    %116 = vector.broadcast %cst_51 : f32 to vector<16x1xf32>
    %117 = arith.divf %115, %116 : vector<16x1xf32>
    %118 = vector.broadcast %117 : vector<16x1xf32> to vector<16x16xf32>
    %119 = arith.subf %113, %118 : vector<16x16xf32>
    %120 = arith.mulf %119, %119 : vector<16x16xf32>
    %cst_52 = arith.constant dense<0.000000e+00> : vector<16xf32>
    %121 = vector.multi_reduction <add>, %120, %cst_52 [1] : vector<16x16xf32> to vector<16xf32>
    %122 = vector.shape_cast %121 : vector<16xf32> to vector<16x1xf32>
    %cst_53 = arith.constant 1.600000e+01 : f32
    %123 = vector.broadcast %cst_53 : f32 to vector<16x1xf32>
    %124 = arith.divf %122, %123 : vector<16x1xf32>
    %125 = vector.broadcast %117 : vector<16x1xf32> to vector<16x16xf32>
    %126 = arith.subf %113, %125 : vector<16x16xf32>
    %cst_54 = arith.constant 9.99999974E-6 : f32
    %127 = vector.broadcast %cst_54 : f32 to vector<16x1xf32>
    %128 = arith.addf %124, %127 : vector<16x1xf32>
    %129 = math.rsqrt %128 : vector<16x1xf32>
    %130 = vector.broadcast %129 : vector<16x1xf32> to vector<16x16xf32>
    %131 = arith.mulf %126, %130 : vector<16x16xf32>
    %c0_55 = arith.constant 0 : index
    %c0_56 = arith.constant 0 : index
    %c0_57 = arith.constant 0 : index
    %132 = vector.load %arg11[%c0_55, %c0_56, %c0_57] : memref<1x1x16xf32, #tpu.memory_space<vmem>>, vector<1x1x16xf32>
    %133 = vector.shape_cast %132 : vector<1x1x16xf32> to vector<1x16xf32>
    %134 = vector.broadcast %133 : vector<1x16xf32> to vector<16x16xf32>
    %135 = arith.mulf %131, %134 : vector<16x16xf32>
    %c0_58 = arith.constant 0 : index
    %c0_59 = arith.constant 0 : index
    %c0_60 = arith.constant 0 : index
    %136 = vector.load %arg12[%c0_58, %c0_59, %c0_60] : memref<1x1x16xf32, #tpu.memory_space<vmem>>, vector<1x1x16xf32>
    %137 = vector.shape_cast %136 : vector<1x1x16xf32> to vector<1x16xf32>
    %138 = vector.broadcast %137 : vector<1x16xf32> to vector<16x16xf32>
    %139 = arith.addf %135, %138 : vector<16x16xf32>
    %c0_61 = arith.constant 0 : index
    %c0_62 = arith.constant 0 : index
    %c0_63 = arith.constant 0 : index
    %140 = vector.load %arg13[%c0_61, %c0_62, %c0_63] : memref<1x16x2048xf32, #tpu.memory_space<vmem>>, vector<1x16x2048xf32>
    %141 = vector.shape_cast %140 : vector<1x16x2048xf32> to vector<16x2048xf32>
    %cst_64 = arith.constant dense<0.000000e+00> : vector<16x2048xf32>
    %142 = tpu.matmul %139, %141, %cst_64 {dimension_numbers = #tpu.dot_dimension_numbers<[1], [0], [0], [1], [0, 0, 1, 1], [], []>} : vector<16x16xf32>, vector<16x2048xf32>, vector<16x2048xf32> -> vector<16x2048xf32>
    %c0_65 = arith.constant 0 : index
    %c0_66 = arith.constant 0 : index
    %c0_67 = arith.constant 0 : index
    %143 = vector.load %arg14[%c0_65, %c0_66, %c0_67] : memref<1x1x2048xf32, #tpu.memory_space<vmem>>, vector<1x1x2048xf32>
    %144 = vector.shape_cast %143 : vector<1x1x2048xf32> to vector<1x2048xf32>
    %145 = vector.broadcast %144 : vector<1x2048xf32> to vector<16x2048xf32>
    %146 = arith.addf %142, %145 : vector<16x2048xf32>
    %cst_68 = arith.constant 0.000000e+00 : f32
    %147 = vector.broadcast %cst_68 : f32 to vector<16x2048xf32>
    %148 = arith.maximumf %146, %147 : vector<16x2048xf32>
    %c0_69 = arith.constant 0 : index
    %c0_70 = arith.constant 0 : index
    %c0_71 = arith.constant 0 : index
    %149 = vector.load %arg15[%c0_69, %c0_70, %c0_71] : memref<1x2048x16xf32, #tpu.memory_space<vmem>>, vector<1x2048x16xf32>
    %150 = vector.shape_cast %149 : vector<1x2048x16xf32> to vector<2048x16xf32>
    %cst_72 = arith.constant dense<0.000000e+00> : vector<16x16xf32>
    %151 = tpu.matmul %148, %150, %cst_72 {dimension_numbers = #tpu.dot_dimension_numbers<[1], [0], [0], [1], [0, 0, 1, 1], [], []>} : vector<16x2048xf32>, vector<2048x16xf32>, vector<16x16xf32> -> vector<16x16xf32>
    %c0_73 = arith.constant 0 : index
    %c0_74 = arith.constant 0 : index
    %c0_75 = arith.constant 0 : index
    %152 = vector.load %arg16[%c0_73, %c0_74, %c0_75] : memref<1x1x16xf32, #tpu.memory_space<vmem>>, vector<1x1x16xf32>
    %153 = vector.shape_cast %152 : vector<1x1x16xf32> to vector<1x16xf32>
    %154 = vector.broadcast %153 : vector<1x16xf32> to vector<16x16xf32>
    %155 = arith.addf %151, %154 : vector<16x16xf32>
    %156 = arith.addf %139, %155 : vector<16x16xf32>
    %cst_76 = arith.constant dense<0.000000e+00> : vector<16xf32>
    %157 = vector.multi_reduction <add>, %156, %cst_76 [1] : vector<16x16xf32> to vector<16xf32>
    %158 = vector.shape_cast %157 : vector<16xf32> to vector<16x1xf32>
    %cst_77 = arith.constant 1.600000e+01 : f32
    %159 = vector.broadcast %cst_77 : f32 to vector<16x1xf32>
    %160 = arith.divf %158, %159 : vector<16x1xf32>
    %161 = vector.broadcast %160 : vector<16x1xf32> to vector<16x16xf32>
    %162 = arith.subf %156, %161 : vector<16x16xf32>
    %163 = arith.mulf %162, %162 : vector<16x16xf32>
    %cst_78 = arith.constant dense<0.000000e+00> : vector<16xf32>
    %164 = vector.multi_reduction <add>, %163, %cst_78 [1] : vector<16x16xf32> to vector<16xf32>
    %165 = vector.shape_cast %164 : vector<16xf32> to vector<16x1xf32>
    %cst_79 = arith.constant 1.600000e+01 : f32
    %166 = vector.broadcast %cst_79 : f32 to vector<16x1xf32>
    %167 = arith.divf %165, %166 : vector<16x1xf32>
    %168 = vector.broadcast %160 : vector<16x1xf32> to vector<16x16xf32>
    %169 = arith.subf %156, %168 : vector<16x16xf32>
    %cst_80 = arith.constant 9.99999974E-6 : f32
    %170 = vector.broadcast %cst_80 : f32 to vector<16x1xf32>
    %171 = arith.addf %167, %170 : vector<16x1xf32>
    %172 = math.rsqrt %171 : vector<16x1xf32>
    %173 = vector.broadcast %172 : vector<16x1xf32> to vector<16x16xf32>
    %174 = arith.mulf %169, %173 : vector<16x16xf32>
    %c0_81 = arith.constant 0 : index
    %c0_82 = arith.constant 0 : index
    %c0_83 = arith.constant 0 : index
    %175 = vector.load %arg17[%c0_81, %c0_82, %c0_83] : memref<1x1x16xf32, #tpu.memory_space<vmem>>, vector<1x1x16xf32>
    %176 = vector.shape_cast %175 : vector<1x1x16xf32> to vector<1x16xf32>
    %177 = vector.broadcast %176 : vector<1x16xf32> to vector<16x16xf32>
    %178 = arith.mulf %174, %177 : vector<16x16xf32>
    %c0_84 = arith.constant 0 : index
    %c0_85 = arith.constant 0 : index
    %c0_86 = arith.constant 0 : index
    %179 = vector.load %arg18[%c0_84, %c0_85, %c0_86] : memref<1x1x16xf32, #tpu.memory_space<vmem>>, vector<1x1x16xf32>
    %180 = vector.shape_cast %179 : vector<1x1x16xf32> to vector<1x16xf32>
    %181 = vector.broadcast %180 : vector<1x16xf32> to vector<16x16xf32>
    %182 = arith.addf %178, %181 : vector<16x16xf32>
    %c0_87 = arith.constant 0 : index
    %c0_88 = arith.constant 0 : index
    %183 = vector.load %arg23[%c0_87, %c0_88] : memref<16x16xf32, #tpu.memory_space<vmem>>, vector<16x16xf32>
    tpu.vector_store %arg23[%c0_87, %c0_88], %182 {strides = array<i32>} : memref<16x16xf32, #tpu.memory_space<vmem>>, vector<16x16xf32>,
    %c1_i32 = arith.constant 1 : i32
    %184 = arith.cmpi eq, %arg0, %c1_i32 : i32
    %185 = arith.extui %184 : i1 to i32
    %c0_i32_89 = arith.constant 0 : i32
    %186 = arith.cmpi ne, %185, %c0_i32_89 : i32
    scf.if %186 {
      %c0_90 = arith.constant 0 : index
      %c0_91 = arith.constant 0 : index
      %187 = vector.load %arg2[%c0_90, %c0_91] : memref<2x8xf32, #tpu.memory_space<vmem>>, vector<2x8xf32>
      %c0_92 = arith.constant 0 : index
      %c0_93 = arith.constant 0 : index
      %188 = vector.load %arg20[%c0_92, %c0_93] : memref<8x4xf32, #tpu.memory_space<vmem>>, vector<8x4xf32>
      %cst_94 = arith.constant dense<0.000000e+00> : vector<2x4xf32>
      %189 = tpu.matmul %187, %188, %cst_94 {dimension_numbers = #tpu.dot_dimension_numbers<[1], [0], [0], [1], [0, 0, 1, 1], [], []>} : vector<2x8xf32>, vector<8x4xf32>, vector<2x4xf32> -> vector<2x4xf32>
      %c0_95 = arith.constant 0 : index
      %c0_96 = arith.constant 0 : index
      %190 = vector.load %arg21[%c0_95, %c0_96] : memref<1x4xf32, #tpu.memory_space<vmem>>, vector<1x4xf32>
      %191 = vector.broadcast %190 : vector<1x4xf32> to vector<2x4xf32>
      %192 = arith.addf %189, %191 : vector<2x4xf32>
      %193 = vector.shape_cast %182 : vector<16x16xf32> to vector<2x8x16xf32>
      %194 = vector.extract_strided_slice %193 {offsets = [0, 0, 0], sizes = [2, 1, 16], strides = [1, 1, 1]} : vector<2x8x16xf32> to vector<2x1x16xf32>
      %195 = vector.shape_cast %194 : vector<2x1x16xf32> to vector<2x16xf32>
      %c0_97 = arith.constant 0 : index
      %c0_98 = arith.constant 0 : index
      %c0_99 = arith.constant 0 : index
      %196 = vector.load %arg19[%c0_97, %c0_98, %c0_99] : memref<8x16x4xf32, #tpu.memory_space<vmem>>, vector<1x16x4xf32>
      %197 = vector.shape_cast %196 : vector<1x16x4xf32> to vector<16x4xf32>
      %cst_100 = arith.constant dense<0.000000e+00> : vector<2x4xf32>
      %198 = tpu.matmul %195, %197, %cst_100 {dimension_numbers = #tpu.dot_dimension_numbers<[1], [0], [0], [1], [0, 0, 1, 1], [], []>} : vector<2x16xf32>, vector<16x4xf32>, vector<2x4xf32> -> vector<2x4xf32>
      %199 = arith.addf %192, %198 : vector<2x4xf32>
      %200 = vector.extract_strided_slice %193 {offsets = [0, 1, 0], sizes = [2, 1, 16], strides = [1, 1, 1]} : vector<2x8x16xf32> to vector<2x1x16xf32>
      %201 = vector.shape_cast %200 : vector<2x1x16xf32> to vector<2x16xf32>
      %c1 = arith.constant 1 : index
      %c0_101 = arith.constant 0 : index
      %c0_102 = arith.constant 0 : index
      %202 = vector.load %arg19[%c1, %c0_101, %c0_102] : memref<8x16x4xf32, #tpu.memory_space<vmem>>, vector<1x16x4xf32>
      %203 = vector.shape_cast %202 : vector<1x16x4xf32> to vector<16x4xf32>
      %cst_103 = arith.constant dense<0.000000e+00> : vector<2x4xf32>
      %204 = tpu.matmul %201, %203, %cst_103 {dimension_numbers = #tpu.dot_dimension_numbers<[1], [0], [0], [1], [0, 0, 1, 1], [], []>} : vector<2x16xf32>, vector<16x4xf32>, vector<2x4xf32> -> vector<2x4xf32>
      %205 = arith.addf %199, %204 : vector<2x4xf32>
      %206 = vector.extract_strided_slice %193 {offsets = [0, 2, 0], sizes = [2, 1, 16], strides = [1, 1, 1]} : vector<2x8x16xf32> to vector<2x1x16xf32>
      %207 = vector.shape_cast %206 : vector<2x1x16xf32> to vector<2x16xf32>
      %c2 = arith.constant 2 : index
      %c0_104 = arith.constant 0 : index
      %c0_105 = arith.constant 0 : index
      %208 = vector.load %arg19[%c2, %c0_104, %c0_105] : memref<8x16x4xf32, #tpu.memory_space<vmem>>, vector<1x16x4xf32>
      %209 = vector.shape_cast %208 : vector<1x16x4xf32> to vector<16x4xf32>
      %cst_106 = arith.constant dense<0.000000e+00> : vector<2x4xf32>
      %210 = tpu.matmul %207, %209, %cst_106 {dimension_numbers = #tpu.dot_dimension_numbers<[1], [0], [0], [1], [0, 0, 1, 1], [], []>} : vector<2x16xf32>, vector<16x4xf32>, vector<2x4xf32> -> vector<2x4xf32>
      %211 = arith.addf %205, %210 : vector<2x4xf32>
      %212 = vector.extract_strided_slice %193 {offsets = [0, 3, 0], sizes = [2, 1, 16], strides = [1, 1, 1]} : vector<2x8x16xf32> to vector<2x1x16xf32>
      %213 = vector.shape_cast %212 : vector<2x1x16xf32> to vector<2x16xf32>
      %c3 = arith.constant 3 : index
      %c0_107 = arith.constant 0 : index
      %c0_108 = arith.constant 0 : index
      %214 = vector.load %arg19[%c3, %c0_107, %c0_108] : memref<8x16x4xf32, #tpu.memory_space<vmem>>, vector<1x16x4xf32>
      %215 = vector.shape_cast %214 : vector<1x16x4xf32> to vector<16x4xf32>
      %cst_109 = arith.constant dense<0.000000e+00> : vector<2x4xf32>
      %216 = tpu.matmul %213, %215, %cst_109 {dimension_numbers = #tpu.dot_dimension_numbers<[1], [0], [0], [1], [0, 0, 1, 1], [], []>} : vector<2x16xf32>, vector<16x4xf32>, vector<2x4xf32> -> vector<2x4xf32>
      %217 = arith.addf %211, %216 : vector<2x4xf32>
      %218 = vector.extract_strided_slice %193 {offsets = [0, 4, 0], sizes = [2, 1, 16], strides = [1, 1, 1]} : vector<2x8x16xf32> to vector<2x1x16xf32>
      %219 = vector.shape_cast %218 : vector<2x1x16xf32> to vector<2x16xf32>
      %c4 = arith.constant 4 : index
      %c0_110 = arith.constant 0 : index
      %c0_111 = arith.constant 0 : index
      %220 = vector.load %arg19[%c4, %c0_110, %c0_111] : memref<8x16x4xf32, #tpu.memory_space<vmem>>, vector<1x16x4xf32>
      %221 = vector.shape_cast %220 : vector<1x16x4xf32> to vector<16x4xf32>
      %cst_112 = arith.constant dense<0.000000e+00> : vector<2x4xf32>
      %222 = tpu.matmul %219, %221, %cst_112 {dimension_numbers = #tpu.dot_dimension_numbers<[1], [0], [0], [1], [0, 0, 1, 1], [], []>} : vector<2x16xf32>, vector<16x4xf32>, vector<2x4xf32> -> vector<2x4xf32>
      %223 = arith.addf %217, %222 : vector<2x4xf32>
      %224 = vector.extract_strided_slice %193 {offsets = [0, 5, 0], sizes = [2, 1, 16], strides = [1, 1, 1]} : vector<2x8x16xf32> to vector<2x1x16xf32>
      %225 = vector.shape_cast %224 : vector<2x1x16xf32> to vector<2x16xf32>
      %c5 = arith.constant 5 : index
      %c0_113 = arith.constant 0 : index
      %c0_114 = arith.constant 0 : index
      %226 = vector.load %arg19[%c5, %c0_113, %c0_114] : memref<8x16x4xf32, #tpu.memory_space<vmem>>, vector<1x16x4xf32>
      %227 = vector.shape_cast %226 : vector<1x16x4xf32> to vector<16x4xf32>
      %cst_115 = arith.constant dense<0.000000e+00> : vector<2x4xf32>
      %228 = tpu.matmul %225, %227, %cst_115 {dimension_numbers = #tpu.dot_dimension_numbers<[1], [0], [0], [1], [0, 0, 1, 1], [], []>} : vector<2x16xf32>, vector<16x4xf32>, vector<2x4xf32> -> vector<2x4xf32>
      %229 = arith.addf %223, %228 : vector<2x4xf32>
      %230 = vector.extract_strided_slice %193 {offsets = [0, 6, 0], sizes = [2, 1, 16], strides = [1, 1, 1]} : vector<2x8x16xf32> to vector<2x1x16xf32>
      %231 = vector.shape_cast %230 : vector<2x1x16xf32> to vector<2x16xf32>
      %c6 = arith.constant 6 : index
      %c0_116 = arith.constant 0 : index
      %c0_117 = arith.constant 0 : index
      %232 = vector.load %arg19[%c6, %c0_116, %c0_117] : memref<8x16x4xf32, #tpu.memory_space<vmem>>, vector<1x16x4xf32>
      %233 = vector.shape_cast %232 : vector<1x16x4xf32> to vector<16x4xf32>
      %cst_118 = arith.constant dense<0.000000e+00> : vector<2x4xf32>
      %234 = tpu.matmul %231, %233, %cst_118 {dimension_numbers = #tpu.dot_dimension_numbers<[1], [0], [0], [1], [0, 0, 1, 1], [], []>} : vector<2x16xf32>, vector<16x4xf32>, vector<2x4xf32> -> vector<2x4xf32>
      %235 = arith.addf %229, %234 : vector<2x4xf32>
      %236 = vector.extract_strided_slice %193 {offsets = [0, 7, 0], sizes = [2, 1, 16], strides = [1, 1, 1]} : vector<2x8x16xf32> to vector<2x1x16xf32>
      %237 = vector.shape_cast %236 : vector<2x1x16xf32> to vector<2x16xf32>
      %c7 = arith.constant 7 : index
      %c0_119 = arith.constant 0 : index
      %c0_120 = arith.constant 0 : index
      %238 = vector.load %arg19[%c7, %c0_119, %c0_120] : memref<8x16x4xf32, #tpu.memory_space<vmem>>, vector<1x16x4xf32>
      %239 = vector.shape_cast %238 : vector<1x16x4xf32> to vector<16x4xf32>
      %cst_121 = arith.constant dense<0.000000e+00> : vector<2x4xf32>
      %240 = tpu.matmul %237, %239, %cst_121 {dimension_numbers = #tpu.dot_dimension_numbers<[1], [0], [0], [1], [0, 0, 1, 1], [], []>} : vector<2x16xf32>, vector<16x4xf32>, vector<2x4xf32> -> vector<2x4xf32>
      %241 = arith.addf %235, %240 : vector<2x4xf32>
      %c0_122 = arith.constant 0 : index
      %c0_123 = arith.constant 0 : index
      %242 = vector.load %arg22[%c0_122, %c0_123] : memref<2x4xf32, #tpu.memory_space<vmem>>, vector<2x4xf32>
      tpu.vector_store %arg22[%c0_122, %c0_123], %241 {strides = array<i32>} : memref<2x4xf32, #tpu.memory_space<vmem>>, vector<2x4xf32>,
    } else {
    }
    return
  }
  func.func @transform_0(%arg0: i32) -> (i32, i32, i32) {
    %c0_i32 = arith.constant 0 : i32
    %c0_i32_0 = arith.constant 0 : i32
    %c0_i32_1 = arith.constant 0 : i32
    %c0_i32_2 = arith.constant 0 : i32
    return %c0_i32, %c0_i32_0, %c0_i32_1 : i32, i32, i32
  }
  func.func @transform_1(%arg0: i32) -> (i32, i32) {
    %c0_i32 = arith.constant 0 : i32
    %c0_i32_0 = arith.constant 0 : i32
    %c0_i32_1 = arith.constant 0 : i32
    return %c0_i32, %c0_i32_0 : i32, i32
  }
  func.func @transform_2(%arg0: i32) -> (i32, i32, i32) {
    %c0_i32 = arith.constant 0 : i32
    %c0_i32_0 = arith.constant 0 : i32
    %c0_i32_1 = arith.constant 0 : i32
    return %arg0, %c0_i32, %c0_i32_0 : i32, i32, i32
  }
  func.func @transform_3(%arg0: i32) -> (i32, i32, i32) {
    %c0_i32 = arith.constant 0 : i32
    %c0_i32_0 = arith.constant 0 : i32
    %c0_i32_1 = arith.constant 0 : i32
    return %arg0, %c0_i32, %c0_i32_0 : i32, i32, i32
  }
  func.func @transform_4(%arg0: i32) -> (i32, i32, i32) {
    %c0_i32 = arith.constant 0 : i32
    %c0_i32_0 = arith.constant 0 : i32
    %c0_i32_1 = arith.constant 0 : i32
    return %arg0, %c0_i32, %c0_i32_0 : i32, i32, i32
  }
  func.func @transform_5(%arg0: i32) -> (i32, i32, i32) {
    %c0_i32 = arith.constant 0 : i32
    %c0_i32_0 = arith.constant 0 : i32
    %c0_i32_1 = arith.constant 0 : i32
    return %arg0, %c0_i32, %c0_i32_0 : i32, i32, i32
  }
  func.func @transform_6(%arg0: i32) -> (i32, i32, i32) {
    %c0_i32 = arith.constant 0 : i32
    %c0_i32_0 = arith.constant 0 : i32
    %c0_i32_1 = arith.constant 0 : i32
    return %arg0, %c0_i32, %c0_i32_0 : i32, i32, i32
  }
  func.func @transform_7(%arg0: i32) -> (i32, i32, i32) {
    %c0_i32 = arith.constant 0 : i32
    %c0_i32_0 = arith.constant 0 : i32
    %c0_i32_1 = arith.constant 0 : i32
    return %arg0, %c0_i32, %c0_i32_0 : i32, i32, i32
  }
  func.func @transform_8(%arg0: i32) -> (i32, i32, i32) {
    %c0_i32 = arith.constant 0 : i32
    %c0_i32_0 = arith.constant 0 : i32
    %c0_i32_1 = arith.constant 0 : i32
    return %arg0, %c0_i32, %c0_i32_0 : i32, i32, i32
  }
  func.func @transform_9(%arg0: i32) -> (i32, i32, i32) {
    %c0_i32 = arith.constant 0 : i32
    %c0_i32_0 = arith.constant 0 : i32
    %c0_i32_1 = arith.constant 0 : i32
    return %arg0, %c0_i32, %c0_i32_0 : i32, i32, i32
  }
  func.func @transform_10(%arg0: i32) -> (i32, i32, i32) {
    %c0_i32 = arith.constant 0 : i32
    %c0_i32_0 = arith.constant 0 : i32
    %c0_i32_1 = arith.constant 0 : i32
    return %arg0, %c0_i32, %c0_i32_0 : i32, i32, i32
  }
  func.func @transform_11(%arg0: i32) -> (i32, i32, i32) {
    %c0_i32 = arith.constant 0 : i32
    %c0_i32_0 = arith.constant 0 : i32
    %c0_i32_1 = arith.constant 0 : i32
    return %arg0, %c0_i32, %c0_i32_0 : i32, i32, i32
  }
  func.func @transform_12(%arg0: i32) -> (i32, i32, i32) {
    %c0_i32 = arith.constant 0 : i32
    %c0_i32_0 = arith.constant 0 : i32
    %c0_i32_1 = arith.constant 0 : i32
    return %arg0, %c0_i32, %c0_i32_0 : i32, i32, i32
  }
  func.func @transform_13(%arg0: i32) -> (i32, i32, i32) {
    %c0_i32 = arith.constant 0 : i32
    %c0_i32_0 = arith.constant 0 : i32
    %c0_i32_1 = arith.constant 0 : i32
    return %arg0, %c0_i32, %c0_i32_0 : i32, i32, i32
  }
  func.func @transform_14(%arg0: i32) -> (i32, i32, i32) {
    %c0_i32 = arith.constant 0 : i32
    %c0_i32_0 = arith.constant 0 : i32
    %c0_i32_1 = arith.constant 0 : i32
    return %arg0, %c0_i32, %c0_i32_0 : i32, i32, i32
  }
  func.func @transform_15(%arg0: i32) -> (i32, i32, i32) {
    %c0_i32 = arith.constant 0 : i32
    %c0_i32_0 = arith.constant 0 : i32
    %c0_i32_1 = arith.constant 0 : i32
    return %arg0, %c0_i32, %c0_i32_0 : i32, i32, i32
  }
  func.func @transform_16(%arg0: i32) -> (i32, i32, i32) {
    %c0_i32 = arith.constant 0 : i32
    %c0_i32_0 = arith.constant 0 : i32
    %c0_i32_1 = arith.constant 0 : i32
    return %arg0, %c0_i32, %c0_i32_0 : i32, i32, i32
  }
  func.func @transform_17(%arg0: i32) -> (i32, i32, i32) {
    %c0_i32 = arith.constant 0 : i32
    %c0_i32_0 = arith.constant 0 : i32
    %c0_i32_1 = arith.constant 0 : i32
    return %arg0, %c0_i32, %c0_i32_0 : i32, i32, i32
  }
  func.func @transform_18(%arg0: i32) -> (i32, i32, i32) {
    %c0_i32 = arith.constant 0 : i32
    %c0_i32_0 = arith.constant 0 : i32
    %c0_i32_1 = arith.constant 0 : i32
    %c0_i32_2 = arith.constant 0 : i32
    return %c0_i32, %c0_i32_0, %c0_i32_1 : i32, i32, i32
  }
  func.func @transform_19(%arg0: i32) -> (i32, i32) {
    %c0_i32 = arith.constant 0 : i32
    %c0_i32_0 = arith.constant 0 : i32
    %c0_i32_1 = arith.constant 0 : i32
    return %c0_i32, %c0_i32_0 : i32, i32
  }
  func.func @transform_20(%arg0: i32) -> (i32, i32) {
    %c0_i32 = arith.constant 0 : i32
    %c0_i32_0 = arith.constant 0 : i32
    %c0_i32_1 = arith.constant 0 : i32
    return %c0_i32, %c0_i32_0 : i32, i32
  }
  func.func @transform_21(%arg0: i32) -> (i32, i32) {
    %c0_i32 = arith.constant 0 : i32
    %c0_i32_0 = arith.constant 0 : i32
    %c0_i32_1 = arith.constant 0 : i32
    return %c0_i32, %c0_i32_0 : i32, i32
  }
}

</mosaic_0001>

<llo_original>
// kernel: transformer_forward.1
$region0: #{transformer_forward.1}
  #allocation0 [shape = 'u32[]', space=smem, size = 0x4, offset = 0x4, fixed_abs, tag = 'smem constant byte address 0x4 - core index']
  #allocation1 [shape = 'u32[72,128]{1,0:T(1,128)}', space=vmem, size = 0x9000, scoped, tag = 'internal scratch']
  #allocation2 [shape = 'f32[16,16]{1,0:T(8,128)}', space=vmem, size = 0x2000, scoped, tag = 'scratch operand']
  %s0 = inlined_call_operand.vmem [shape: f32[2,8,16], index: 0, kind: input, shape index: {}]
  %s1 = inlined_call_operand.vmem [shape: f32[2,8], index: 1, kind: input, shape index: {}]
  %s2 = inlined_call_operand.vmem [shape: f32[2,16,16], index: 2, kind: input, shape index: {}]
  %s3 = inlined_call_operand.vmem [shape: f32[2,16,16], index: 3, kind: input, shape index: {}]
  %s4 = inlined_call_operand.vmem [shape: f32[2,16,16], index: 4, kind: input, shape index: {}]
  %s5 = inlined_call_operand.vmem [shape: f32[2,1,16], index: 5, kind: input, shape index: {}]
  %s6 = inlined_call_operand.vmem [shape: f32[2,1,16], index: 6, kind: input, shape index: {}]
  %s7 = inlined_call_operand.vmem [shape: f32[2,1,16], index: 7, kind: input, shape index: {}]
  %s8 = inlined_call_operand.vmem [shape: f32[2,16,16], index: 8, kind: input, shape index: {}]
  %s9 = inlined_call_operand.vmem [shape: f32[2,1,16], index: 9, kind: input, shape index: {}]
  %s10 = inlined_call_operand.vmem [shape: f32[2,1,16], index: 10, kind: input, shape index: {}]
  %s11 = inlined_call_operand.vmem [shape: f32[2,1,16], index: 11, kind: input, shape index: {}]
  %s12 = inlined_call_operand.vmem [shape: f32[2,16,2048], index: 12, kind: input, shape index: {}]
  %s13 = inlined_call_operand.vmem [shape: f32[2,1,2048], index: 13, kind: input, shape index: {}]
  %s14 = inlined_call_operand.vmem [shape: f32[2,2048,16], index: 14, kind: input, shape index: {}]
  %s15 = inlined_call_operand.vmem [shape: f32[2,1,16], index: 15, kind: input, shape index: {}]
  %s16 = inlined_call_operand.vmem [shape: f32[2,1,16], index: 16, kind: input, shape index: {}]
  %s17 = inlined_call_operand.vmem [shape: f32[2,1,16], index: 17, kind: input, shape index: {}]
  %s18 = inlined_call_operand.vmem [shape: f32[8,16,4], index: 18, kind: input, shape index: {}]
  %s19 = inlined_call_operand.vmem [shape: f32[8,4], index: 19, kind: input, shape index: {}]
  %s20 = inlined_call_operand.vmem [shape: f32[1,4], index: 20, kind: input, shape index: {}]
  %s21 = inlined_call_operand.hbm [shape: f32[2,4], index: 21, kind: output, shape index: {}]
  %s22 = sld [smem:[#allocation0]]
  $region125: #{transformer_forward.1} parent=0
    _
  %s24 = ssub.s32 1, %s22
  %s25 = scalar_select 0, %s24, %s22
  $region1: #{transformer_forward.1} parent=0
    #allocation3 [shape = 'u8[1024]{0}', space=vmem, size = 0x400, scoped, tag = 'output window, operand 0, single buffered']
    #allocation4 [shape = 's32[2]{0}', space=sflag, size = 0x8, scoped, tag = 'scoped memory for transformer_forward.1']
    %26 = vsyncpa [#allocation4], 0
    loop: start=0, step=1, limit=4
    $region2: #{transformer_forward.1} parent=1 // loop_pre_header
      _
    $region3: #{transformer_forward.1} parent=1 // loop_header
      %s28 = sphi 0, %s32
      %p29 = scmp.ge.s32.totalorder %s28, 4
      %s36 = sphi 0, %s36
      %s38 = sphi 0, %s36
      %s39 = sphi 0, %s38
      %s53 = sphi 0, %s39
      %s57 = sphi 0, %s57
      %s59 = sphi 0, %s57
      %s60 = sphi 0, %s59
      %s74 = sphi 0, %s60
      %s80 = sphi 0, %s82
      %s83 = sphi 0, %s80
      %s84 = sphi 0, %s83
      %s100 = sphi 0, %s84
      %s106 = sphi 0, %s108
      %s109 = sphi 0, %s106
      %s110 = sphi 0, %s109
      %s126 = sphi 0, %s110
      %s132 = sphi 0, %s134
      %s135 = sphi 0, %s132
      %s136 = sphi 0, %s135
      %s152 = sphi 0, %s136
      %s158 = sphi 0, %s160
      %s161 = sphi 0, %s158
      %s162 = sphi 0, %s161
      %s178 = sphi 0, %s162
      %s184 = sphi 0, %s186
      %s187 = sphi 0, %s184
      %s188 = sphi 0, %s187
      %s204 = sphi 0, %s188
      %s210 = sphi 0, %s212
      %s213 = sphi 0, %s210
      %s214 = sphi 0, %s213
      %s230 = sphi 0, %s214
      %s236 = sphi 0, %s238
      %s239 = sphi 0, %s236
      %s240 = sphi 0, %s239
      %s256 = sphi 0, %s240
      %s262 = sphi 0, %s264
      %s265 = sphi 0, %s262
      %s266 = sphi 0, %s265
      %s282 = sphi 0, %s266
      %s288 = sphi 0, %s290
      %s291 = sphi 0, %s288
      %s292 = sphi 0, %s291
      %s308 = sphi 0, %s292
      %s314 = sphi 0, %s316
      %s317 = sphi 0, %s314
      %s318 = sphi 0, %s317
      %s334 = sphi 0, %s318
      %s340 = sphi 0, %s342
      %s343 = sphi 0, %s340
      %s344 = sphi 0, %s343
      %s360 = sphi 0, %s344
      %s366 = sphi 0, %s368
      %s369 = sphi 0, %s366
      %s370 = sphi 0, %s369
      %s386 = sphi 0, %s370
      %s392 = sphi 0, %s394
      %s395 = sphi 0, %s392
      %s396 = sphi 0, %s395
      %s412 = sphi 0, %s396
      %s418 = sphi 0, %s420
      %s421 = sphi 0, %s418
      %s422 = sphi 0, %s421
      %s438 = sphi 0, %s422
      %s444 = sphi 0, %s446
      %s447 = sphi 0, %s444
      %s448 = sphi 0, %s447
      %s464 = sphi 0, %s448
      %s470 = sphi 0, %s472
      %s473 = sphi 0, %s470
      %s474 = sphi 0, %s473
      %s490 = sphi 0, %s474
      %s494 = sphi 0, %s494
      %s496 = sphi 0, %s494
      %s497 = sphi 0, %s496
      %s511 = sphi 0, %s497
      %s515 = sphi 0, %s515
      %s517 = sphi 0, %s515
      %s518 = sphi 0, %s517
      %s532 = sphi 0, %s518
      %s536 = sphi 0, %s536
      %s538 = sphi 0, %s536
      %s539 = sphi 0, %s538
      %s553 = sphi 0, %s539
      %s557 = sphi 0, %s557
      %s559 = sphi 0, %s557
      %s560 = sphi 0, %s559
      %s574 = sphi 0, %s560
    $region4: #{transformer_forward.1} parent=1 // loop_header_branch
      %31 = sbr.rel (%p29) target = $region8
    $region5: #{transformer_forward.1} parent=1 // loop_body
      %s33 = ssub.s32 %s28, 1
      %s34 = ssub.s32 %s28, 2
      %s35 = sadd.s32 %s28, 1
      %s37 = sadd.s32 %s36, 1
      %p40 = scmp.eq.s32.totalorder %s28, 1
      %p41 = scmp.ne.s32.totalorder %s36, %s38
      %p42 = scmp.eq.s32.totalorder %s28, 0
      %p43 = por %p41, %p42
      %p44 = scmp.ne.s32.totalorder %s36, %s38
      %p45 = scmp.eq.s32.totalorder %s33, 1
      %p46 = por %p44, %p45
      %p47 = scmp.ne.s32.totalorder %s38, %s39
      %p48 = scmp.eq.s32.totalorder %s33, 0
      %p49 = por %p47, %p48
      %p50 = scmp.ne.s32.totalorder %s38, %s39
      %p51 = scmp.eq.s32.totalorder %s34, 1
      %p52 = por %p50, %p51
      %p54 = scmp.ne.s32.totalorder %s39, %s53
      %p55 = scmp.eq.s32.totalorder %s34, 0
      %p56 = por %p54, %p55
      %s58 = sadd.s32 %s57, 1
      %p61 = scmp.eq.s32.totalorder %s28, 1
      %p62 = scmp.ne.s32.totalorder %s57, %s59
      %p63 = scmp.eq.s32.totalorder %s28, 0
      %p64 = por %p62, %p63
      %p65 = scmp.ne.s32.totalorder %s57, %s59
      %p66 = scmp.eq.s32.totalorder %s33, 1
      %p67 = por %p65, %p66
      %p68 = scmp.ne.s32.totalorder %s59, %s60
      %p69 = scmp.eq.s32.totalorder %s33, 0
      %p70 = por %p68, %p69
      %p71 = scmp.ne.s32.totalorder %s59, %s60
      %p72 = scmp.eq.s32.totalorder %s34, 1
      %p73 = por %p71, %p72
      %p75 = scmp.ne.s32.totalorder %s60, %s74
      %p76 = scmp.eq.s32.totalorder %s34, 0
      %p77 = por %p75, %p76
      %s78 = ssub.s32 %s28, %s35
      %p79 = scmp.eq.s32.totalorder %s78, 0
      %s81 = sadd.s32 %s80, 1
      %s82 = scalar_select %p79, %s80, %s81
      %p85 = pneg %p79
      %p86 = scmp.eq.s32.totalorder %s28, 1
      %p87 = por %p85, %p86
      %p88 = scmp.ne.s32.totalorder %s80, %s83
      %p89 = scmp.eq.s32.totalorder %s28, 0
      %p90 = por %p88, %p89
      %p91 = scmp.ne.s32.totalorder %s80, %s83
      %p92 = scmp.eq.s32.totalorder %s33, 1
      %p93 = por %p91, %p92
      %p94 = scmp.ne.s32.totalorder %s83, %s84
      %p95 = scmp.eq.s32.totalorder %s33, 0
      %p96 = por %p94, %p95
      %p97 = scmp.ne.s32.totalorder %s83, %s84
      %p98 = scmp.eq.s32.totalorder %s34, 1
      %p99 = por %p97, %p98
      %p101 = scmp.ne.s32.totalorder %s84, %s100
      %p102 = scmp.eq.s32.totalorder %s34, 0
      %p103 = por %p101, %p102
      %s104 = ssub.s32 %s28, %s35
      %p105 = scmp.eq.s32.totalorder %s104, 0
      %s107 = sadd.s32 %s106, 1
      %s108 = scalar_select %p105, %s106, %s107
      %p111 = pneg %p105
      %p112 = scmp.eq.s32.totalorder %s28, 1
      %p113 = por %p111, %p112
      %p114 = scmp.ne.s32.totalorder %s106, %s109
      %p115 = scmp.eq.s32.totalorder %s28, 0
      %p116 = por %p114, %p115
      %p117 = scmp.ne.s32.totalorder %s106, %s109
      %p118 = scmp.eq.s32.totalorder %s33, 1
      %p119 = por %p117, %p118
      %p120 = scmp.ne.s32.totalorder %s109, %s110
      %p121 = scmp.eq.s32.totalorder %s33, 0
      %p122 = por %p120, %p121
      %p123 = scmp.ne.s32.totalorder %s109, %s110
      %p124 = scmp.eq.s32.totalorder %s34, 1
      %p125 = por %p123, %p124
      %p127 = scmp.ne.s32.totalorder %s110, %s126
      %p128 = scmp.eq.s32.totalorder %s34, 0
      %p129 = por %p127, %p128
      %s130 = ssub.s32 %s28, %s35
      %p131 = scmp.eq.s32.totalorder %s130, 0
      %s133 = sadd.s32 %s132, 1
      %s134 = scalar_select %p131, %s132, %s133
      %p137 = pneg %p131
      %p138 = scmp.eq.s32.totalorder %s28, 1
      %p139 = por %p137, %p138
      %p140 = scmp.ne.s32.totalorder %s132, %s135
      %p141 = scmp.eq.s32.totalorder %s28, 0
      %p142 = por %p140, %p141
      %p143 = scmp.ne.s32.totalorder %s132, %s135
      %p144 = scmp.eq.s32.totalorder %s33, 1
      %p145 = por %p143, %p144
      %p146 = scmp.ne.s32.totalorder %s135, %s136
      %p147 = scmp.eq.s32.totalorder %s33, 0
      %p148 = por %p146, %p147
      %p149 = scmp.ne.s32.totalorder %s135, %s136
      %p150 = scmp.eq.s32.totalorder %s34, 1
      %p151 = por %p149, %p150
      %p153 = scmp.ne.s32.totalorder %s136, %s152
      %p154 = scmp.eq.s32.totalorder %s34, 0
      %p155 = por %p153, %p154
      %s156 = ssub.s32 %s28, %s35
      %p157 = scmp.eq.s32.totalorder %s156, 0
      %s159 = sadd.s32 %s158, 1
      %s160 = scalar_select %p157, %s158, %s159
      %p163 = pneg %p157
      %p164 = scmp.eq.s32.totalorder %s28, 1
      %p165 = por %p163, %p164
      %p166 = scmp.ne.s32.totalorder %s158, %s161
      %p167 = scmp.eq.s32.totalorder %s28, 0
      %p168 = por %p166, %p167
      %p169 = scmp.ne.s32.totalorder %s158, %s161
      %p170 = scmp.eq.s32.totalorder %s33, 1
      %p171 = por %p169, %p170
      %p172 = scmp.ne.s32.totalorder %s161, %s162
      %p173 = scmp.eq.s32.totalorder %s33, 0
      %p174 = por %p172, %p173
      %p175 = scmp.ne.s32.totalorder %s161, %s162
      %p176 = scmp.eq.s32.totalorder %s34, 1
      %p177 = por %p175, %p176
      %p179 = scmp.ne.s32.totalorder %s162, %s178
      %p180 = scmp.eq.s32.totalorder %s34, 0
      %p181 = por %p179, %p180
      %s182 = ssub.s32 %s28, %s35
      %p183 = scmp.eq.s32.totalorder %s182, 0
      %s185 = sadd.s32 %s184, 1
      %s186 = scalar_select %p183, %s184, %s185
      %p189 = pneg %p183
      %p190 = scmp.eq.s32.totalorder %s28, 1
      %p191 = por %p189, %p190
      %p192 = scmp.ne.s32.totalorder %s184, %s187
      %p193 = scmp.eq.s32.totalorder %s28, 0
      %p194 = por %p192, %p193
      %p195 = scmp.ne.s32.totalorder %s184, %s187
      %p196 = scmp.eq.s32.totalorder %s33, 1
      %p197 = por %p195, %p196
      %p198 = scmp.ne.s32.totalorder %s187, %s188
      %p199 = scmp.eq.s32.totalorder %s33, 0
      %p200 = por %p198, %p199
      %p201 = scmp.ne.s32.totalorder %s187, %s188
      %p202 = scmp.eq.s32.totalorder %s34, 1
      %p203 = por %p201, %p202
      %p205 = scmp.ne.s32.totalorder %s188, %s204
      %p206 = scmp.eq.s32.totalorder %s34, 0
      %p207 = por %p205, %p206
      %s208 = ssub.s32 %s28, %s35
      %p209 = scmp.eq.s32.totalorder %s208, 0
      %s211 = sadd.s32 %s210, 1
      %s212 = scalar_select %p209, %s210, %s211
      %p215 = pneg %p209
      %p216 = scmp.eq.s32.totalorder %s28, 1
      %p217 = por %p215, %p216
      %p218 = scmp.ne.s32.totalorder %s210, %s213
      %p219 = scmp.eq.s32.totalorder %s28, 0
      %p220 = por %p218, %p219
      %p221 = scmp.ne.s32.totalorder %s210, %s213
      %p222 = scmp.eq.s32.totalorder %s33, 1
      %p223 = por %p221, %p222
      %p224 = scmp.ne.s32.totalorder %s213, %s214
      %p225 = scmp.eq.s32.totalorder %s33, 0
      %p226 = por %p224, %p225
      %p227 = scmp.ne.s32.totalorder %s213, %s214
      %p228 = scmp.eq.s32.totalorder %s34, 1
      %p229 = por %p227, %p228
      %p231 = scmp.ne.s32.totalorder %s214, %s230
      %p232 = scmp.eq.s32.totalorder %s34, 0
      %p233 = por %p231, %p232
      %s234 = ssub.s32 %s28, %s35
      %p235 = scmp.eq.s32.totalorder %s234, 0
      %s237 = sadd.s32 %s236, 1
      %s238 = scalar_select %p235, %s236, %s237
      %p241 = pneg %p235
      %p242 = scmp.eq.s32.totalorder %s28, 1
      %p243 = por %p241, %p242
      %p244 = scmp.ne.s32.totalorder %s236, %s239
      %p245 = scmp.eq.s32.totalorder %s28, 0
      %p246 = por %p244, %p245
      %p247 = scmp.ne.s32.totalorder %s236, %s239
      %p248 = scmp.eq.s32.totalorder %s33, 1
      %p249 = por %p247, %p248
      %p250 = scmp.ne.s32.totalorder %s239, %s240
      %p251 = scmp.eq.s32.totalorder %s33, 0
      %p252 = por %p250, %p251
      %p253 = scmp.ne.s32.totalorder %s239, %s240
      %p254 = scmp.eq.s32.totalorder %s34, 1
      %p255 = por %p253, %p254
      %p257 = scmp.ne.s32.totalorder %s240, %s256
      %p258 = scmp.eq.s32.totalorder %s34, 0
      %p259 = por %p257, %p258
      %s260 = ssub.s32 %s28, %s35
      %p261 = scmp.eq.s32.totalorder %s260, 0
      %s263 = sadd.s32 %s262, 1
      %s264 = scalar_select %p261, %s262, %s263
      %p267 = pneg %p261
      %p268 = scmp.eq.s32.totalorder %s28, 1
      %p269 = por %p267, %p268
      %p270 = scmp.ne.s32.totalorder %s262, %s265
      %p271 = scmp.eq.s32.totalorder %s28, 0
      %p272 = por %p270, %p271
      %p273 = scmp.ne.s32.totalorder %s262, %s265
      %p274 = scmp.eq.s32.totalorder %s33, 1
      %p275 = por %p273, %p274
      %p276 = scmp.ne.s32.totalorder %s265, %s266
      %p277 = scmp.eq.s32.totalorder %s33, 0
      %p278 = por %p276, %p277
      %p279 = scmp.ne.s32.totalorder %s265, %s266
      %p280 = scmp.eq.s32.totalorder %s34, 1
      %p281 = por %p279, %p280
      %p283 = scmp.ne.s32.totalorder %s266, %s282
      %p284 = scmp.eq.s32.totalorder %s34, 0
      %p285 = por %p283, %p284
      %s286 = ssub.s32 %s28, %s35
      %p287 = scmp.eq.s32.totalorder %s286, 0
      %s289 = sadd.s32 %s288, 1
      %s290 = scalar_select %p287, %s288, %s289
      %p293 = pneg %p287
      %p294 = scmp.eq.s32.totalorder %s28, 1
      %p295 = por %p293, %p294
      %p296 = scmp.ne.s32.totalorder %s288, %s291
      %p297 = scmp.eq.s32.totalorder %s28, 0
      %p298 = por %p296, %p297
      %p299 = scmp.ne.s32.totalorder %s288, %s291
      %p300 = scmp.eq.s32.totalorder %s33, 1
      %p301 = por %p299, %p300
      %p302 = scmp.ne.s32.totalorder %s291, %s292
      %p303 = scmp.eq.s32.totalorder %s33, 0
      %p304 = por %p302, %p303
      %p305 = scmp.ne.s32.totalorder %s291, %s292
      %p306 = scmp.eq.s32.totalorder %s34, 1
      %p307 = por %p305, %p306
      %p309 = scmp.ne.s32.totalorder %s292, %s308
      %p310 = scmp.eq.s32.totalorder %s34, 0
      %p311 = por %p309, %p310
      %s312 = ssub.s32 %s28, %s35
      %p313 = scmp.eq.s32.totalorder %s312, 0
      %s315 = sadd.s32 %s314, 1
      %s316 = scalar_select %p313, %s314, %s315
      %p319 = pneg %p313
      %p320 = scmp.eq.s32.totalorder %s28, 1
      %p321 = por %p319, %p320
      %p322 = scmp.ne.s32.totalorder %s314, %s317
      %p323 = scmp.eq.s32.totalorder %s28, 0
      %p324 = por %p322, %p323
      %p325 = scmp.ne.s32.totalorder %s314, %s317
      %p326 = scmp.eq.s32.totalorder %s33, 1
      %p327 = por %p325, %p326
      %p328 = scmp.ne.s32.totalorder %s317, %s318
      %p329 = scmp.eq.s32.totalorder %s33, 0
      %p330 = por %p328, %p329
      %p331 = scmp.ne.s32.totalorder %s317, %s318
      %p332 = scmp.eq.s32.totalorder %s34, 1
      %p333 = por %p331, %p332
      %p335 = scmp.ne.s32.totalorder %s318, %s334
      %p336 = scmp.eq.s32.totalorder %s34, 0
      %p337 = por %p335, %p336
      %s338 = ssub.s32 %s28, %s35
      %p339 = scmp.eq.s32.totalorder %s338, 0
      %s341 = sadd.s32 %s340, 1
      %s342 = scalar_select %p339, %s340, %s341
      %p345 = pneg %p339
      %p346 = scmp.eq.s32.totalorder %s28, 1
      %p347 = por %p345, %p346
      %p348 = scmp.ne.s32.totalorder %s340, %s343
      %p349 = scmp.eq.s32.totalorder %s28, 0
      %p350 = por %p348, %p349
      %p351 = scmp.ne.s32.totalorder %s340, %s343
      %p352 = scmp.eq.s32.totalorder %s33, 1
      %p353 = por %p351, %p352
      %p354 = scmp.ne.s32.totalorder %s343, %s344
      %p355 = scmp.eq.s32.totalorder %s33, 0
      %p356 = por %p354, %p355
      %p357 = scmp.ne.s32.totalorder %s343, %s344
      %p358 = scmp.eq.s32.totalorder %s34, 1
      %p359 = por %p357, %p358
      %p361 = scmp.ne.s32.totalorder %s344, %s360
      %p362 = scmp.eq.s32.totalorder %s34, 0
      %p363 = por %p361, %p362
      %s364 = ssub.s32 %s28, %s35
      %p365 = scmp.eq.s32.totalorder %s364, 0
      %s367 = sadd.s32 %s366, 1
      %s368 = scalar_select %p365, %s366, %s367
      %p371 = pneg %p365
      %p372 = scmp.eq.s32.totalorder %s28, 1
      %p373 = por %p371, %p372
      %p374 = scmp.ne.s32.totalorder %s366, %s369
      %p375 = scmp.eq.s32.totalorder %s28, 0
      %p376 = por %p374, %p375
      %p377 = scmp.ne.s32.totalorder %s366, %s369
      %p378 = scmp.eq.s32.totalorder %s33, 1
      %p379 = por %p377, %p378
      %p380 = scmp.ne.s32.totalorder %s369, %s370
      %p381 = scmp.eq.s32.totalorder %s33, 0
      %p382 = por %p380, %p381
      %p383 = scmp.ne.s32.totalorder %s369, %s370
      %p384 = scmp.eq.s32.totalorder %s34, 1
      %p385 = por %p383, %p384
      %p387 = scmp.ne.s32.totalorder %s370, %s386
      %p388 = scmp.eq.s32.totalorder %s34, 0
      %p389 = por %p387, %p388
      %s390 = ssub.s32 %s28, %s35
      %p391 = scmp.eq.s32.totalorder %s390, 0
      %s393 = sadd.s32 %s392, 1
      %s394 = scalar_select %p391, %s392, %s393
      %p397 = pneg %p391
      %p398 = scmp.eq.s32.totalorder %s28, 1
      %p399 = por %p397, %p398
      %p400 = scmp.ne.s32.totalorder %s392, %s395
      %p401 = scmp.eq.s32.totalorder %s28, 0
      %p402 = por %p400, %p401
      %p403 = scmp.ne.s32.totalorder %s392, %s395
      %p404 = scmp.eq.s32.totalorder %s33, 1
      %p405 = por %p403, %p404
      %p406 = scmp.ne.s32.totalorder %s395, %s396
      %p407 = scmp.eq.s32.totalorder %s33, 0
      %p408 = por %p406, %p407
      %p409 = scmp.ne.s32.totalorder %s395, %s396
      %p410 = scmp.eq.s32.totalorder %s34, 1
      %p411 = por %p409, %p410
      %p413 = scmp.ne.s32.totalorder %s396, %s412
      %p414 = scmp.eq.s32.totalorder %s34, 0
      %p415 = por %p413, %p414
      %s416 = ssub.s32 %s28, %s35
      %p417 = scmp.eq.s32.totalorder %s416, 0
      %s419 = sadd.s32 %s418, 1
      %s420 = scalar_select %p417, %s418, %s419
      %p423 = pneg %p417
      %p424 = scmp.eq.s32.totalorder %s28, 1
      %p425 = por %p423, %p424
      %p426 = scmp.ne.s32.totalorder %s418, %s421
      %p427 = scmp.eq.s32.totalorder %s28, 0
      %p428 = por %p426, %p427
      %p429 = scmp.ne.s32.totalorder %s418, %s421
      %p430 = scmp.eq.s32.totalorder %s33, 1
      %p431 = por %p429, %p430
      %p432 = scmp.ne.s32.totalorder %s421, %s422
      %p433 = scmp.eq.s32.totalorder %s33, 0
      %p434 = por %p432, %p433
      %p435 = scmp.ne.s32.totalorder %s421, %s422
      %p436 = scmp.eq.s32.totalorder %s34, 1
      %p437 = por %p435, %p436
      %p439 = scmp.ne.s32.totalorder %s422, %s438
      %p440 = scmp.eq.s32.totalorder %s34, 0
      %p441 = por %p439, %p440
      %s442 = ssub.s32 %s28, %s35
      %p443 = scmp.eq.s32.totalorder %s442, 0
      %s445 = sadd.s32 %s444, 1
      %s446 = scalar_select %p443, %s444, %s445
      %p449 = pneg %p443
      %p450 = scmp.eq.s32.totalorder %s28, 1
      %p451 = por %p449, %p450
      %p452 = scmp.ne.s32.totalorder %s444, %s447
      %p453 = scmp.eq.s32.totalorder %s28, 0
      %p454 = por %p452, %p453
      %p455 = scmp.ne.s32.totalorder %s444, %s447
      %p456 = scmp.eq.s32.totalorder %s33, 1
      %p457 = por %p455, %p456
      %p458 = scmp.ne.s32.totalorder %s447, %s448
      %p459 = scmp.eq.s32.totalorder %s33, 0
      %p460 = por %p458, %p459
      %p461 = scmp.ne.s32.totalorder %s447, %s448
      %p462 = scmp.eq.s32.totalorder %s34, 1
      %p463 = por %p461, %p462
      %p465 = scmp.ne.s32.totalorder %s448, %s464
      %p466 = scmp.eq.s32.totalorder %s34, 0
      %p467 = por %p465, %p466
      %s468 = ssub.s32 %s28, %s35
      %p469 = scmp.eq.s32.totalorder %s468, 0
      %s471 = sadd.s32 %s470, 1
      %s472 = scalar_select %p469, %s470, %s471
      %p475 = pneg %p469
      %p476 = scmp.eq.s32.totalorder %s28, 1
      %p477 = por %p475, %p476
      %p478 = scmp.ne.s32.totalorder %s470, %s473
      %p479 = scmp.eq.s32.totalorder %s28, 0
      %p480 = por %p478, %p479
      %p481 = scmp.ne.s32.totalorder %s470, %s473
      %p482 = scmp.eq.s32.totalorder %s33, 1
      %p483 = por %p481, %p482
      %p484 = scmp.ne.s32.totalorder %s473, %s474
      %p485 = scmp.eq.s32.totalorder %s33, 0
      %p486 = por %p484, %p485
      %p487 = scmp.ne.s32.totalorder %s473, %s474
      %p488 = scmp.eq.s32.totalorder %s34, 1
      %p489 = por %p487, %p488
      %p491 = scmp.ne.s32.totalorder %s474, %s490
      %p492 = scmp.eq.s32.totalorder %s34, 0
      %p493 = por %p491, %p492
      %s495 = sadd.s32 %s494, 1
      %p498 = scmp.eq.s32.totalorder %s28, 1
      %p499 = scmp.ne.s32.totalorder %s494, %s496
      %p500 = scmp.eq.s32.totalorder %s28, 0
      %p501 = por %p499, %p500
      %p502 = scmp.ne.s32.totalorder %s494, %s496
      %p503 = scmp.eq.s32.totalorder %s33, 1
      %p504 = por %p502, %p503
      %p505 = scmp.ne.s32.totalorder %s496, %s497
      %p506 = scmp.eq.s32.totalorder %s33, 0
      %p507 = por %p505, %p506
      %p508 = scmp.ne.s32.totalorder %s496, %s497
      %p509 = scmp.eq.s32.totalorder %s34, 1
      %p510 = por %p508, %p509
      %p512 = scmp.ne.s32.totalorder %s497, %s511
      %p513 = scmp.eq.s32.totalorder %s34, 0
      %p514 = por %p512, %p513
      %s516 = sadd.s32 %s515, 1
      %p519 = scmp.eq.s32.totalorder %s28, 1
      %p520 = scmp.ne.s32.totalorder %s515, %s517
      %p521 = scmp.eq.s32.totalorder %s28, 0
      %p522 = por %p520, %p521
      %p523 = scmp.ne.s32.totalorder %s515, %s517
      %p524 = scmp.eq.s32.totalorder %s33, 1
      %p525 = por %p523, %p524
      %p526 = scmp.ne.s32.totalorder %s517, %s518
      %p527 = scmp.eq.s32.totalorder %s33, 0
      %p528 = por %p526, %p527
      %p529 = scmp.ne.s32.totalorder %s517, %s518
      %p530 = scmp.eq.s32.totalorder %s34, 1
      %p531 = por %p529, %p530
      %p533 = scmp.ne.s32.totalorder %s518, %s532
      %p534 = scmp.eq.s32.totalorder %s34, 0
      %p535 = por %p533, %p534
      %s537 = sadd.s32 %s536, 1
      %p540 = scmp.eq.s32.totalorder %s28, 1
      %p541 = scmp.ne.s32.totalorder %s536, %s538
      %p542 = scmp.eq.s32.totalorder %s28, 0
      %p543 = por %p541, %p542
      %p544 = scmp.ne.s32.totalorder %s536, %s538
      %p545 = scmp.eq.s32.totalorder %s33, 1
      %p546 = por %p544, %p545
      %p547 = scmp.ne.s32.totalorder %s538, %s539
      %p548 = scmp.eq.s32.totalorder %s33, 0
      %p549 = por %p547, %p548
      %p550 = scmp.ne.s32.totalorder %s538, %s539
      %p551 = scmp.eq.s32.totalorder %s34, 1
      %p552 = por %p550, %p551
      %p554 = scmp.ne.s32.totalorder %s539, %s553
      %p555 = scmp.eq.s32.totalorder %s34, 0
      %p556 = por %p554, %p555
      %s558 = sadd.s32 %s557, 1
      %p561 = scmp.eq.s32.totalorder %s28, 1
      %p562 = scmp.ne.s32.totalorder %s557, %s559
      %p563 = scmp.eq.s32.totalorder %s28, 0
      %p564 = por %p562, %p563
      %p565 = scmp.ne.s32.totalorder %s557, %s559
      %p566 = scmp.eq.s32.totalorder %s33, 1
      %p567 = por %p565, %p566
      %p568 = scmp.ne.s32.totalorder %s559, %s560
      %p569 = scmp.eq.s32.totalorder %s33, 0
      %p570 = por %p568, %p569
      %p571 = scmp.ne.s32.totalorder %s559, %s560
      %p572 = scmp.eq.s32.totalorder %s34, 1
      %p573 = por %p571, %p572
      %p575 = scmp.ne.s32.totalorder %s560, %s574
      %p576 = scmp.eq.s32.totalorder %s34, 0
      %p577 = por %p575, %p576
      %p578 = scmp.le.s32.totalorder 1, %s28
      %p579 = scmp.lt.s32.totalorder %s28, 3
      %p580 = pnand %p578, %p579
      %p581 = pneg %p580
      // Predicated region
      $region9: #{transformer_forward.1} parent=5 // pred_check
        _
      $region10: #{transformer_forward.1} parent=5 // pred_check_branch
        %583 = sbr.rel (%p580) target = $region12
      $region11: #{transformer_forward.1} parent=5 // pred_region
        %s584 = ssub.s32 %s28, 1
        // Predicated region
        $region13: #{transformer_forward.1} parent=11 // pred_check
          %p585 = pneg %p49
        $region14: #{transformer_forward.1} parent=11 // pred_check_branch
          %587 = sbr.rel (%p585) target = $region16
        $region15: #{transformer_forward.1} parent=11 // pred_region
          _
        $region16: #{transformer_forward.1} parent=11 // pred_fallthru
          _
        // Predicated region
        $region17: #{transformer_forward.1} parent=11 // pred_check
          %p588 = pneg %p70
        $region18: #{transformer_forward.1} parent=11 // pred_check_branch
          %590 = sbr.rel (%p588) target = $region20
        $region19: #{transformer_forward.1} parent=11 // pred_region
          _
        $region20: #{transformer_forward.1} parent=11 // pred_fallthru
          _
        // Predicated region
        $region21: #{transformer_forward.1} parent=11 // pred_check
          %p591 = pneg %p507
        $region22: #{transformer_forward.1} parent=11 // pred_check_branch
          %593 = sbr.rel (%p591) target = $region24
        $region23: #{transformer_forward.1} parent=11 // pred_region
          _
        $region24: #{transformer_forward.1} parent=11 // pred_fallthru
          _
        // Predicated region
        $region25: #{transformer_forward.1} parent=11 // pred_check
          %p594 = pneg %p528
        $region26: #{transformer_forward.1} parent=11 // pred_check_branch
          %596 = sbr.rel (%p594) target = $region28
        $region27: #{transformer_forward.1} parent=11 // pred_region
          _
        $region28: #{transformer_forward.1} parent=11 // pred_fallthru
          _
        // Predicated region
        $region29: #{transformer_forward.1} parent=11 // pred_check
          %p597 = pneg %p549
        $region30: #{transformer_forward.1} parent=11 // pred_check_branch
          %599 = sbr.rel (%p597) target = $region32
        $region31: #{transformer_forward.1} parent=11 // pred_region
          _
        $region32: #{transformer_forward.1} parent=11 // pred_fallthru
          _
      $region12: #{transformer_forward.1} parent=5 // pred_fallthru
        _
      %p600 = scmp.lt.s32.totalorder %s28, 2
      // Predicated region
      $region33: #{transformer_forward.1} parent=5 // pred_check
        %p601 = pneg %p600
      $region34: #{transformer_forward.1} parent=5 // pred_check_branch
        %603 = sbr.rel (%p601) target = $region36
      $region35: #{transformer_forward.1} parent=5 // pred_region
        // Predicated region
        $region37: #{transformer_forward.1} parent=35 // pred_check
          %p604 = pneg %p90
        $region38: #{transformer_forward.1} parent=35 // pred_check_branch
          %606 = sbr.rel (%p604) target = $region40
        $region39: #{transformer_forward.1} parent=35 // pred_region
          %p607 = scmp.lt.s32.totalorder %s28, 1
          %s608 = scalar_select %p607, %s28, 1
          %s609 = smul.addr %s608, 2
          %s610 = smul.addr %s609, 8
          %s611 = scalar_lea.vmem %s2, %s610
        $region40: #{transformer_forward.1} parent=35 // pred_fallthru
          _
        // Predicated region
        $region41: #{transformer_forward.1} parent=35 // pred_check
          %p612 = pneg %p116
        $region42: #{transformer_forward.1} parent=35 // pred_check_branch
          %614 = sbr.rel (%p612) target = $region44
        $region43: #{transformer_forward.1} parent=35 // pred_region
          %p615 = scmp.lt.s32.totalorder %s28, 1
          %s616 = scalar_select %p615, %s28, 1
          %s617 = smul.addr %s616, 2
          %s618 = smul.addr %s617, 8
          %s619 = scalar_lea.vmem %s3, %s618
        $region44: #{transformer_forward.1} parent=35 // pred_fallthru
          _
        // Predicated region
        $region45: #{transformer_forward.1} parent=35 // pred_check
          %p620 = pneg %p142
        $region46: #{transformer_forward.1} parent=35 // pred_check_branch
          %622 = sbr.rel (%p620) target = $region48
        $region47: #{transformer_forward.1} parent=35 // pred_region
          %p623 = scmp.lt.s32.totalorder %s28, 1
          %s624 = scalar_select %p623, %s28, 1
          %s625 = smul.addr %s624, 2
          %s626 = smul.addr %s625, 8
          %s627 = scalar_lea.vmem %s4, %s626
        $region48: #{transformer_forward.1} parent=35 // pred_fallthru
          _
        // Predicated region
        $region49: #{transformer_forward.1} parent=35 // pred_check
          %p628 = pneg %p168
        $region50: #{transformer_forward.1} parent=35 // pred_check_branch
          %630 = sbr.rel (%p628) target = $region52
        $region51: #{transformer_forward.1} parent=35 // pred_region
          %p631 = scmp.lt.s32.totalorder %s28, 1
          %s632 = scalar_select %p631, %s28, 1
          %s633 = scalar_lea.vmem %s5, %s632
        $region52: #{transformer_forward.1} parent=35 // pred_fallthru
          _
        // Predicated region
        $region53: #{transformer_forward.1} parent=35 // pred_check
          %p634 = pneg %p194
        $region54: #{transformer_forward.1} parent=35 // pred_check_branch
          %636 = sbr.rel (%p634) target = $region56
        $region55: #{transformer_forward.1} parent=35 // pred_region
          %p637 = scmp.lt.s32.totalorder %s28, 1
          %s638 = scalar_select %p637, %s28, 1
          %s639 = scalar_lea.vmem %s6, %s638
        $region56: #{transformer_forward.1} parent=35 // pred_fallthru
          _
        // Predicated region
        $region57: #{transformer_forward.1} parent=35 // pred_check
          %p640 = pneg %p220
        $region58: #{transformer_forward.1} parent=35 // pred_check_branch
          %642 = sbr.rel (%p640) target = $region60
        $region59: #{transformer_forward.1} parent=35 // pred_region
          %p643 = scmp.lt.s32.totalorder %s28, 1
          %s644 = scalar_select %p643, %s28, 1
          %s645 = scalar_lea.vmem %s7, %s644
        $region60: #{transformer_forward.1} parent=35 // pred_fallthru
          _
        // Predicated region
        $region61: #{transformer_forward.1} parent=35 // pred_check
          %p646 = pneg %p246
        $region62: #{transformer_forward.1} parent=35 // pred_check_branch
          %648 = sbr.rel (%p646) target = $region64
        $region63: #{transformer_forward.1} parent=35 // pred_region
          %p649 = scmp.lt.s32.totalorder %s28, 1
          %s650 = scalar_select %p649, %s28, 1
          %s651 = smul.addr %s650, 2
          %s652 = smul.addr %s651, 8
          %s653 = scalar_lea.vmem %s8, %s652
        $region64: #{transformer_forward.1} parent=35 // pred_fallthru
          _
        // Predicated region
        $region65: #{transformer_forward.1} parent=35 // pred_check
          %p654 = pneg %p272
        $region66: #{transformer_forward.1} parent=35 // pred_check_branch
          %656 = sbr.rel (%p654) target = $region68
        $region67: #{transformer_forward.1} parent=35 // pred_region
          %p657 = scmp.lt.s32.totalorder %s28, 1
          %s658 = scalar_select %p657, %s28, 1
          %s659 = scalar_lea.vmem %s9, %s658
        $region68: #{transformer_forward.1} parent=35 // pred_fallthru
          _
        // Predicated region
        $region69: #{transformer_forward.1} parent=35 // pred_check
          %p660 = pneg %p298
        $region70: #{transformer_forward.1} parent=35 // pred_check_branch
          %662 = sbr.rel (%p660) target = $region72
        $region71: #{transformer_forward.1} parent=35 // pred_region
          %p663 = scmp.lt.s32.totalorder %s28, 1
          %s664 = scalar_select %p663, %s28, 1
          %s665 = scalar_lea.vmem %s10, %s664
        $region72: #{transformer_forward.1} parent=35 // pred_fallthru
          _
        // Predicated region
        $region73: #{transformer_forward.1} parent=35 // pred_check
          %p666 = pneg %p324
        $region74: #{transformer_forward.1} parent=35 // pred_check_branch
          %668 = sbr.rel (%p666) target = $region76
        $region75: #{transformer_forward.1} parent=35 // pred_region
          %p669 = scmp.lt.s32.totalorder %s28, 1
          %s670 = scalar_select %p669, %s28, 1
          %s671 = scalar_lea.vmem %s11, %s670
        $region76: #{transformer_forward.1} parent=35 // pred_fallthru
          _
        // Predicated region
        $region77: #{transformer_forward.1} parent=35 // pred_check
          %p672 = pneg %p350
        $region78: #{transformer_forward.1} parent=35 // pred_check_branch
          %674 = sbr.rel (%p672) target = $region80
        $region79: #{transformer_forward.1} parent=35 // pred_region
          %p675 = scmp.lt.s32.totalorder %s28, 1
          %s676 = scalar_select %p675, %s28, 1
          %s677 = smul.addr %s676, 32
          %s678 = smul.addr %s677, 8
          %s679 = scalar_lea.vmem %s12, %s678
        $region80: #{transformer_forward.1} parent=35 // pred_fallthru
          _
        // Predicated region
        $region81: #{transformer_forward.1} parent=35 // pred_check
          %p680 = pneg %p376
        $region82: #{transformer_forward.1} parent=35 // pred_check_branch
          %682 = sbr.rel (%p680) target = $region84
        $region83: #{transformer_forward.1} parent=35 // pred_region
          %p683 = scmp.lt.s32.totalorder %s28, 1
          %s684 = scalar_select %p683, %s28, 1
          %s685 = smul.addr %s684, 16
          %s686 = scalar_lea.vmem %s13, %s685
        $region84: #{transformer_forward.1} parent=35 // pred_fallthru
          _
        // Predicated region
        $region85: #{transformer_forward.1} parent=35 // pred_check
          %p687 = pneg %p402
        $region86: #{transformer_forward.1} parent=35 // pred_check_branch
          %689 = sbr.rel (%p687) target = $region88
        $region87: #{transformer_forward.1} parent=35 // pred_region
          %p690 = scmp.lt.s32.totalorder %s28, 1
          %s691 = scalar_select %p690, %s28, 1
          %s692 = smul.addr %s691, 256
          %s693 = smul.addr %s692, 8
          %s694 = scalar_lea.vmem %s14, %s693
        $region88: #{transformer_forward.1} parent=35 // pred_fallthru
          _
        // Predicated region
        $region89: #{transformer_forward.1} parent=35 // pred_check
          %p695 = pneg %p428
        $region90: #{transformer_forward.1} parent=35 // pred_check_branch
          %697 = sbr.rel (%p695) target = $region92
        $region91: #{transformer_forward.1} parent=35 // pred_region
          %p698 = scmp.lt.s32.totalorder %s28, 1
          %s699 = scalar_select %p698, %s28, 1
          %s700 = scalar_lea.vmem %s15, %s699
        $region92: #{transformer_forward.1} parent=35 // pred_fallthru
          _
        // Predicated region
        $region93: #{transformer_forward.1} parent=35 // pred_check
          %p701 = pneg %p454
        $region94: #{transformer_forward.1} parent=35 // pred_check_branch
          %703 = sbr.rel (%p701) target = $region96
        $region95: #{transformer_forward.1} parent=35 // pred_region
          %p704 = scmp.lt.s32.totalorder %s28, 1
          %s705 = scalar_select %p704, %s28, 1
          %s706 = scalar_lea.vmem %s16, %s705
        $region96: #{transformer_forward.1} parent=35 // pred_fallthru
          _
        // Predicated region
        $region97: #{transformer_forward.1} parent=35 // pred_check
          %p707 = pneg %p480
        $region98: #{transformer_forward.1} parent=35 // pred_check_branch
          %709 = sbr.rel (%p707) target = $region100
        $region99: #{transformer_forward.1} parent=35 // pred_region
          %p710 = scmp.lt.s32.totalorder %s28, 1
          %s711 = scalar_select %p710, %s28, 1
          %s712 = scalar_lea.vmem %s17, %s711
        $region100: #{transformer_forward.1} parent=35 // pred_fallthru
          _
      $region36: #{transformer_forward.1} parent=5 // pred_fallthru
        _
      %p713 = scmp.le.s32.totalorder 1, %s28
      %p714 = scmp.lt.s32.totalorder %s28, 3
      %p715 = pnand %p713, %p714
      %p716 = pneg %p715
      // Predicated region
      $region101: #{transformer_forward.1} parent=5 // pred_check
        _
      $region102: #{transformer_forward.1} parent=5 // pred_check_branch
        %718 = sbr.rel (%p715) target = $region104
      $region103: #{transformer_forward.1} parent=5 // pred_region
        %s719 = ssub.s32 %s28, 1
        %p720 = pneg %p49
        %p721 = pneg %p46
        %p722 = pneg %p70
        %p723 = pneg %p67
        %p724 = scmp.lt.s32.totalorder %s33, 1
        %s725 = scalar_select %p724, %s33, 1
        %s726 = smul.addr %s725, 2
        %s727 = smul.addr %s726, 8
        %s728 = scalar_lea.vmem %s2, %s727
        %p729 = pneg %p96
        %p730 = pneg %p93
        %p731 = scmp.lt.s32.totalorder %s33, 1
        %s732 = scalar_select %p731, %s33, 1
        %s733 = smul.addr %s732, 2
        %s734 = smul.addr %s733, 8
        %s735 = scalar_lea.vmem %s3, %s734
        %p736 = pneg %p122
        %p737 = pneg %p119
        %p738 = scmp.lt.s32.totalorder %s33, 1
        %s739 = scalar_select %p738, %s33, 1
        %s740 = smul.addr %s739, 2
        %s741 = smul.addr %s740, 8
        %s742 = scalar_lea.vmem %s4, %s741
        %p743 = pneg %p148
        %p744 = pneg %p145
        %p745 = scmp.lt.s32.totalorder %s33, 1
        %s746 = scalar_select %p745, %s33, 1
        %s747 = scalar_lea.vmem %s5, %s746
        %p748 = pneg %p174
        %p749 = pneg %p171
        %p750 = scmp.lt.s32.totalorder %s33, 1
        %s751 = scalar_select %p750, %s33, 1
        %s752 = scalar_lea.vmem %s6, %s751
        %p753 = pneg %p200
        %p754 = pneg %p197
        %p755 = scmp.lt.s32.totalorder %s33, 1
        %s756 = scalar_select %p755, %s33, 1
        %s757 = scalar_lea.vmem %s7, %s756
        %p758 = pneg %p226
        %p759 = pneg %p223
        %p760 = scmp.lt.s32.totalorder %s33, 1
        %s761 = scalar_select %p760, %s33, 1
        %s762 = smul.addr %s761, 2
        %s763 = smul.addr %s762, 8
        %s764 = scalar_lea.vmem %s8, %s763
        %p765 = pneg %p252
        %p766 = pneg %p249
        %p767 = scmp.lt.s32.totalorder %s33, 1
        %s768 = scalar_select %p767, %s33, 1
        %s769 = scalar_lea.vmem %s9, %s768
        %p770 = pneg %p278
        %p771 = pneg %p275
        %p772 = scmp.lt.s32.totalorder %s33, 1
        %s773 = scalar_select %p772, %s33, 1
        %s774 = scalar_lea.vmem %s10, %s773
        %p775 = pneg %p304
        %p776 = pneg %p301
        %p777 = scmp.lt.s32.totalorder %s33, 1
        %s778 = scalar_select %p777, %s33, 1
        %s779 = scalar_lea.vmem %s11, %s778
        %p780 = pneg %p330
        %p781 = pneg %p327
        %p782 = scmp.lt.s32.totalorder %s33, 1
        %s783 = scalar_select %p782, %s33, 1
        %s784 = smul.addr %s783, 32
        %s785 = smul.addr %s784, 8
        %s786 = scalar_lea.vmem %s12, %s785
        %p787 = pneg %p356
        %p788 = pneg %p353
        %p789 = scmp.lt.s32.totalorder %s33, 1
        %s790 = scalar_select %p789, %s33, 1
        %s791 = smul.addr %s790, 16
        %s792 = scalar_lea.vmem %s13, %s791
        %p793 = pneg %p382
        %p794 = pneg %p379
        %p795 = scmp.lt.s32.totalorder %s33, 1
        %s796 = scalar_select %p795, %s33, 1
        %s797 = smul.addr %s796, 256
        %s798 = smul.addr %s797, 8
        %s799 = scalar_lea.vmem %s14, %s798
        %p800 = pneg %p408
        %p801 = pneg %p405
        %p802 = scmp.lt.s32.totalorder %s33, 1
        %s803 = scalar_select %p802, %s33, 1
        %s804 = scalar_lea.vmem %s15, %s803
        %p805 = pneg %p434
        %p806 = pneg %p431
        %p807 = scmp.lt.s32.totalorder %s33, 1
        %s808 = scalar_select %p807, %s33, 1
        %s809 = scalar_lea.vmem %s16, %s808
        %p810 = pneg %p460
        %p811 = pneg %p457
        %p812 = scmp.lt.s32.totalorder %s33, 1
        %s813 = scalar_select %p812, %s33, 1
        %s814 = scalar_lea.vmem %s17, %s813
        %p815 = pneg %p486
        %p816 = pneg %p483
        %p817 = pneg %p507
        %p818 = pneg %p504
        %p819 = pneg %p528
        %p820 = pneg %p525
        %p821 = pneg %p549
        %p822 = pneg %p546
        %p823 = pneg %p570
        %p824 = pneg %p567
        %p825 = scmp.lt.s32.totalorder %s33, 1
        %s826 = scalar_select %p825, %s33, 1
        %s827 = smul.addr %s826, 2
        %s828 = smul.addr %s827, 8
        %s829 = scalar_lea.vmem %s2, %s828
        %p830 = scmp.lt.s32.totalorder %s33, 1
        %s831 = scalar_select %p830, %s33, 1
        %s832 = smul.addr %s831, 2
        %s833 = smul.addr %s832, 8
        %s834 = scalar_lea.vmem %s3, %s833
        %p835 = scmp.lt.s32.totalorder %s33, 1
        %s836 = scalar_select %p835, %s33, 1
        %s837 = smul.addr %s836, 2
        %s838 = smul.addr %s837, 8
        %s839 = scalar_lea.vmem %s4, %s838
        %p840 = scmp.lt.s32.totalorder %s33, 1
        %s841 = scalar_select %p840, %s33, 1
        %s842 = scalar_lea.vmem %s5, %s841
        %p843 = scmp.lt.s32.totalorder %s33, 1
        %s844 = scalar_select %p843, %s33, 1
        %s845 = scalar_lea.vmem %s6, %s844
        %p846 = scmp.lt.s32.totalorder %s33, 1
        %s847 = scalar_select %p846, %s33, 1
        %s848 = scalar_lea.vmem %s7, %s847
        %p849 = scmp.lt.s32.totalorder %s33, 1
        %s850 = scalar_select %p849, %s33, 1
        %s851 = smul.addr %s850, 2
        %s852 = smul.addr %s851, 8
        %s853 = scalar_lea.vmem %s8, %s852
        %p854 = scmp.lt.s32.totalorder %s33, 1
        %s855 = scalar_select %p854, %s33, 1
        %s856 = scalar_lea.vmem %s9, %s855
        %p857 = scmp.lt.s32.totalorder %s33, 1
        %s858 = scalar_select %p857, %s33, 1
        %s859 = scalar_lea.vmem %s10, %s858
        %p860 = scmp.lt.s32.totalorder %s33, 1
        %s861 = scalar_select %p860, %s33, 1
        %s862 = scalar_lea.vmem %s11, %s861
        %p863 = scmp.lt.s32.totalorder %s33, 1
        %s864 = scalar_select %p863, %s33, 1
        %s865 = smul.addr %s864, 32
        %s866 = smul.addr %s865, 8
        %s867 = scalar_lea.vmem %s12, %s866
        %p868 = scmp.lt.s32.totalorder %s33, 1
        %s869 = scalar_select %p868, %s33, 1
        %s870 = smul.addr %s869, 16
        %s871 = scalar_lea.vmem %s13, %s870
        %p872 = scmp.lt.s32.totalorder %s33, 1
        %s873 = scalar_select %p872, %s33, 1
        %s874 = smul.addr %s873, 256
        %s875 = smul.addr %s874, 8
        %s876 = scalar_lea.vmem %s14, %s875
        %p877 = scmp.lt.s32.totalorder %s33, 1
        %s878 = scalar_select %p877, %s33, 1
        %s879 = scalar_lea.vmem %s15, %s878
        %p880 = scmp.lt.s32.totalorder %s33, 1
        %s881 = scalar_select %p880, %s33, 1
        %s882 = scalar_lea.vmem %s16, %s881
        %p883 = scmp.lt.s32.totalorder %s33, 1
        %s884 = scalar_select %p883, %s33, 1
        %s885 = scalar_lea.vmem %s17, %s884
        %p886 = scmp.eq.s32.totalorder %s33, 0
        // Predicated region
        $region105: #{transformer_forward.1} parent=103 // pred_check
          %p887 = pneg %p886
        $region106: #{transformer_forward.1} parent=103 // pred_check_branch
          %889 = sbr.rel (%p887) target = $region108
        $region107: #{transformer_forward.1} parent=103 // pred_region
          %v890 = vld [vmem:[%s0] sm:$0xff]
          %v891 = vld [vmem:[%s0 + $0x8] sm:$0xff]
          %vm892 = vcmask 130048
          %893 = vst.msk [vmem:[#allocation2] sm:$0xff] %vm892, %v890
          %894 = vst.msk [vmem:[#allocation2 + $0x8] sm:$0xff] %vm892, %v891
        $region108: #{transformer_forward.1} parent=103 // pred_fallthru
          _
        %v895 = vld [vmem:[#allocation2] sm:$0xff]
        %v896 = vld [vmem:[#allocation2 + $0x8] sm:$0xff]
        %v897 = vld [vmem:[%s853] sm:$0xff]
        %v898 = vld [vmem:[%s853 + $0x8] sm:$0xff]
        %v899 = vld [vmem:[%s829] sm:$0xff]
        %v900 = vld [vmem:[%s829 + $0x8] sm:$0xff]
        %v901 = vld [vmem:[%s842] sm:$0x1]
        %v903 = vperm.slane %v901, 0
        %vm905 = vcmask 130048
        %v907 = vsel %vm905, %v895, 0
        %v910 = vsel %vm905, %v896, 0
        %912 = vmatpush.msra.mxu0 0.0
        %913 = vmatpush.msra.mxu0 0.0
        %914 = vmatpush.msra.mxu0 0.0
        %915 = vmatpush.msra.mxu0 0.0
        %916 = vmatpush.msra.mxu0 0.0
        %917 = vmatpush.msra.mxu0 0.0
        %918 = vmatpush.msra.mxu0 0.0
        %919 = vmatpush.msra.mxu0 0.0
        %920 = vmatpush.msra.mxu0 0.0
        %921 = vmatpush.msra.mxu0 0.0
        %922 = vmatpush.msra.mxu0 0.0
        %923 = vmatpush.msra.mxu0 0.0
        %924 = vmatpush.msra.mxu0 0.0
        %925 = vmatpush.msra.mxu0 0.0
        %926 = vmatpush.msra.mxu0 %v900
        %927 = vmatpush.msra.mxu0 %v899
        %928 = vmatmul.f32.gmra.mxu0 %v907
        %v929 = vpop.f32.mrf.mxu0
        %v930 = vadd.f32 %v903, %v929
        %931 = vmatmul.f32.gmra.mxu0 %v910
        %v932 = vpop.f32.mrf.mxu0
        %v933 = vadd.f32 %v903, %v932
        %934 = vdwg.mxu0
        %v935 = vld [vmem:[%s834] sm:$0xff]
        %v936 = vld [vmem:[%s834 + $0x8] sm:$0xff]
        %v937 = vld [vmem:[%s845] sm:$0x1]
        %v939 = vperm.slane %v937, 0
        %941 = vmatpush.msra.mxu0 0.0
        %942 = vmatpush.msra.mxu0 0.0
        %943 = vmatpush.msra.mxu0 0.0
        %944 = vmatpush.msra.mxu0 0.0
        %945 = vmatpush.msra.mxu0 0.0
        %946 = vmatpush.msra.mxu0 0.0
        %947 = vmatpush.msra.mxu0 0.0
        %948 = vmatpush.msra.mxu0 0.0
        %949 = vmatpush.msra.mxu0 0.0
        %950 = vmatpush.msra.mxu0 0.0
        %951 = vmatpush.msra.mxu0 0.0
        %952 = vmatpush.msra.mxu0 0.0
        %953 = vmatpush.msra.mxu0 0.0
        %954 = vmatpush.msra.mxu0 0.0
        %955 = vmatpush.msra.mxu0 %v936
        %956 = vmatpush.msra.mxu0 %v935
        %957 = vmatmul.f32.gmra.mxu0 %v907
        %v958 = vpop.f32.mrf.mxu0
        %v959 = vadd.f32 %v939, %v958
        %960 = vmatmul.f32.gmra.mxu0 %v910
        %v961 = vpop.f32.mrf.mxu0
        %v962 = vadd.f32 %v939, %v961
        %963 = vdwg.mxu0
        %v964 = vld [vmem:[%s839] sm:$0xff]
        %v965 = vld [vmem:[%s839 + $0x8] sm:$0xff]
        %v966 = vld [vmem:[%s848] sm:$0x1]
        %v968 = vperm.slane %v966, 0
        %970 = vmatpush.msra.mxu0 0.0
        %971 = vmatpush.msra.mxu0 0.0
        %972 = vmatpush.msra.mxu0 0.0
        %973 = vmatpush.msra.mxu0 0.0
        %974 = vmatpush.msra.mxu0 0.0
        %975 = vmatpush.msra.mxu0 0.0
        %976 = vmatpush.msra.mxu0 0.0
        %977 = vmatpush.msra.mxu0 0.0
        %978 = vmatpush.msra.mxu0 0.0
        %979 = vmatpush.msra.mxu0 0.0
        %980 = vmatpush.msra.mxu0 0.0
        %981 = vmatpush.msra.mxu0 0.0
        %982 = vmatpush.msra.mxu0 0.0
        %983 = vmatpush.msra.mxu0 0.0
        %984 = vmatpush.msra.mxu0 %v965
        %985 = vmatpush.msra.mxu0 %v964
        %986 = vmatmul.f32.gmra.mxu0 %v907
        %v987 = vpop.f32.mrf.mxu0
        %v988 = vadd.f32 %v968, %v987
        %989 = vmatmul.f32.gmra.mxu0 %v910
        %v990 = vpop.f32.mrf.mxu0
        %v991 = vadd.f32 %v968, %v990
        %992 = vdwg.mxu0
        %v993 = vmul.f32 %v930, 0.5
        %v994 = vmul.f32 %v933, 0.5
        %vm995 = vcmask 31744
        %v997 = vsel %vm995, %v993, 0
        %v1000 = vsel %vm995, %v959, 0
        %1002 = vmatpush.xpose.msra.mxu0 0.0
        %1003 = vmatpush.xpose.msra.mxu0 0.0
        %1004 = vmatpush.xpose.msra.mxu0 0.0
        %1005 = vmatpush.xpose.msra.mxu0 0.0
        %1006 = vmatpush.xpose.msra.mxu0 0.0
        %1007 = vmatpush.xpose.msra.mxu0 0.0
        %1008 = vmatpush.xpose.msra.mxu0 0.0
        %1009 = vmatpush.xpose.msra.mxu0 0.0
        %1010 = vmatpush.xpose.msra.mxu0 0.0
        %1011 = vmatpush.xpose.msra.mxu0 0.0
        %1012 = vmatpush.xpose.msra.mxu0 0.0
        %1013 = vmatpush.xpose.msra.mxu0 0.0
        %1014 = vmatpush.xpose.msra.mxu0 0.0
        %1015 = vmatpush.xpose.msra.mxu0 0.0
        %1016 = vmatpush.xpose.msra.mxu0 0.0
        %1017 = vmatpush.xpose.msra.mxu0 %v1000
        %1018 = vmatmul.f32.gmra.mxu0 %v997
        %v1019 = vpop.f32.mrf.mxu0
        %v1020 = vadd.f32 0.0, %v1019
        %1021 = vdwg.mxu0
        %v1023 = vsel %vm995, %v994, 0
        %v1026 = vsel %vm995, %v962, 0
        %1028 = vmatpush.xpose.msra.mxu0 0.0
        %1029 = vmatpush.xpose.msra.mxu0 0.0
        %1030 = vmatpush.xpose.msra.mxu0 0.0
        %1031 = vmatpush.xpose.msra.mxu0 0.0
        %1032 = vmatpush.xpose.msra.mxu0 0.0
        %1033 = vmatpush.xpose.msra.mxu0 0.0
        %1034 = vmatpush.xpose.msra.mxu0 0.0
        %1035 = vmatpush.xpose.msra.mxu0 0.0
        %1036 = vmatpush.xpose.msra.mxu0 0.0
        %1037 = vmatpush.xpose.msra.mxu0 0.0
        %1038 = vmatpush.xpose.msra.mxu0 0.0
        %1039 = vmatpush.xpose.msra.mxu0 0.0
        %1040 = vmatpush.xpose.msra.mxu0 0.0
        %1041 = vmatpush.xpose.msra.mxu0 0.0
        %1042 = vmatpush.xpose.msra.mxu0 0.0
        %1043 = vmatpush.xpose.msra.mxu0 %v1026
        %1044 = vmatmul.f32.gmra.mxu0 %v1023
        %v1045 = vpop.f32.mrf.mxu0
        %v1046 = vadd.f32 0.0, %v1045
        %1047 = vdwg.mxu0
        %vm1048 = vcmask 64512
        %v1049 = vsel %vm1048, %v1020, -inf
        %1050 = vmax.xlane.f32.xlu0 %v1049
        %v1051 = vpop.xlane.xlu0 %1050
        %v1052 = vsel %vm1048, %v1046, -inf
        %1053 = vmax.xlane.f32.xlu0 %v1052
        %v1054 = vpop.xlane.xlu0 %1053
        %v1055 = vsub.f32 %v1020, %v1051
        %v1056 = vsub.f32 %v1046, %v1054
        %v1057 = vmul.f32 %v1055, 1.442695
        %v1058 = vpow.pop %v1057
        %v1059 = vmul.f32 %v1056, 1.442695
        %v1060 = vpow.pop %v1059
        %v1061 = vsel %vm1048, %v1058, 0.0
        %1062 = vadd.xlane.f32.xlu0 %v1061
        %v1063 = vpop.xlane.xlu0 %1062
        %v1064 = vsel %vm1048, %v1060, 0.0
        %1065 = vadd.xlane.f32.xlu0 %v1064
        %v1066 = vpop.xlane.xlu0 %1065
        %v1067 = vrcp.pop %v1063
        %v1068 = vrcp.pop %v1066
        %v1069 = vmul.f32 %v1058, %v1067
        %v1070 = vmul.f32 %v1060, %v1068
        %v1072 = vsel %vm1048, %v1069, 0
        %1074 = vmatpush.msra.mxu0 0.0
        %1075 = vmatpush.msra.mxu0 0.0
        %1076 = vmatpush.msra.mxu0 0.0
        %1077 = vmatpush.msra.mxu0 0.0
        %1078 = vmatpush.msra.mxu0 0.0
        %1079 = vmatpush.msra.mxu0 0.0
        %1080 = vmatpush.msra.mxu0 0.0
        %1081 = vmatpush.msra.mxu0 0.0
        %1082 = vmatpush.msra.mxu0 0.0
        %1083 = vmatpush.msra.mxu0 0.0
        %1084 = vmatpush.msra.mxu0 0.0
        %1085 = vmatpush.msra.mxu0 0.0
        %1086 = vmatpush.msra.mxu0 0.0
        %1087 = vmatpush.msra.mxu0 0.0
        %1088 = vmatpush.msra.mxu0 0.0
        %1089 = vmatpush.msra.mxu0 %v988
        %1090 = vmatmul.f32.gmra.mxu0 %v1072
        %v1091 = vpop.f32.mrf.mxu0
        %v1092 = vadd.f32 0.0, %v1091
        %1093 = vdwg.mxu0
        %v1095 = vsel %vm1048, %v1070, 0
        %1097 = vmatpush.msra.mxu0 0.0
        %1098 = vmatpush.msra.mxu0 0.0
        %1099 = vmatpush.msra.mxu0 0.0
        %1100 = vmatpush.msra.mxu0 0.0
        %1101 = vmatpush.msra.mxu0 0.0
        %1102 = vmatpush.msra.mxu0 0.0
        %1103 = vmatpush.msra.mxu0 0.0
        %1104 = vmatpush.msra.mxu0 0.0
        %1105 = vmatpush.msra.mxu0 0.0
        %1106 = vmatpush.msra.mxu0 0.0
        %1107 = vmatpush.msra.mxu0 0.0
        %1108 = vmatpush.msra.mxu0 0.0
        %1109 = vmatpush.msra.mxu0 0.0
        %1110 = vmatpush.msra.mxu0 0.0
        %1111 = vmatpush.msra.mxu0 0.0
        %1112 = vmatpush.msra.mxu0 %v991
        %1113 = vmatmul.f32.gmra.mxu0 %v1095
        %v1114 = vpop.f32.mrf.mxu0
        %v1115 = vadd.f32 0.0, %v1114
        %1116 = vdwg.mxu0
        %1117 = vrot.lane.b32.xlu0 %v993, 124
        %v1118 = vpop.permute.xlu0 %1117
        %1119 = vrot.lane.b32.xlu0 %v959, 124
        %v1120 = vpop.permute.xlu0 %1119
        %v1121 = vsel %vm995, %v1118, 0
        %v1123 = vsel %vm995, %v1120, 0
        %1125 = vmatpush.xpose.msra.mxu0 0.0
        %1126 = vmatpush.xpose.msra.mxu0 0.0
        %1127 = vmatpush.xpose.msra.mxu0 0.0
        %1128 = vmatpush.xpose.msra.mxu0 0.0
        %1129 = vmatpush.xpose.msra.mxu0 0.0
        %1130 = vmatpush.xpose.msra.mxu0 0.0
        %1131 = vmatpush.xpose.msra.mxu0 0.0
        %1132 = vmatpush.xpose.msra.mxu0 0.0
        %1133 = vmatpush.xpose.msra.mxu0 0.0
        %1134 = vmatpush.xpose.msra.mxu0 0.0
        %1135 = vmatpush.xpose.msra.mxu0 0.0
        %1136 = vmatpush.xpose.msra.mxu0 0.0
        %1137 = vmatpush.xpose.msra.mxu0 0.0
        %1138 = vmatpush.xpose.msra.mxu0 0.0
        %1139 = vmatpush.xpose.msra.mxu0 0.0
        %1140 = vmatpush.xpose.msra.mxu0 %v1123
        %1141 = vmatmul.f32.gmra.mxu0 %v1121
        %v1142 = vpop.f32.mrf.mxu0
        %v1143 = vadd.f32 0.0, %v1142
        %1144 = vdwg.mxu0
        %1145 = vrot.lane.b32.xlu0 %v994, 124
        %v1146 = vpop.permute.xlu0 %1145
        %1147 = vrot.lane.b32.xlu0 %v962, 124
        %v1148 = vpop.permute.xlu0 %1147
        %v1149 = vsel %vm995, %v1146, 0
        %v1151 = vsel %vm995, %v1148, 0
        %1153 = vmatpush.xpose.msra.mxu0 0.0
        %1154 = vmatpush.xpose.msra.mxu0 0.0
        %1155 = vmatpush.xpose.msra.mxu0 0.0
        %1156 = vmatpush.xpose.msra.mxu0 0.0
        %1157 = vmatpush.xpose.msra.mxu0 0.0
        %1158 = vmatpush.xpose.msra.mxu0 0.0
        %1159 = vmatpush.xpose.msra.mxu0 0.0
        %1160 = vmatpush.xpose.msra.mxu0 0.0
        %1161 = vmatpush.xpose.msra.mxu0 0.0
        %1162 = vmatpush.xpose.msra.mxu0 0.0
        %1163 = vmatpush.xpose.msra.mxu0 0.0
        %1164 = vmatpush.xpose.msra.mxu0 0.0
        %1165 = vmatpush.xpose.msra.mxu0 0.0
        %1166 = vmatpush.xpose.msra.mxu0 0.0
        %1167 = vmatpush.xpose.msra.mxu0 0.0
        %1168 = vmatpush.xpose.msra.mxu0 %v1151
        %1169 = vmatmul.f32.gmra.mxu0 %v1149
        %v1170 = vpop.f32.mrf.mxu0
        %v1171 = vadd.f32 0.0, %v1170
        %1172 = vdwg.mxu0
        %v1173 = vsel %vm1048, %v1143, -inf
        %1174 = vmax.xlane.f32.xlu0 %v1173
        %v1175 = vpop.xlane.xlu0 %1174
        %v1176 = vsel %vm1048, %v1171, -inf
        %1177 = vmax.xlane.f32.xlu0 %v1176
        %v1178 = vpop.xlane.xlu0 %1177
        %v1179 = vsub.f32 %v1143, %v1175
        %v1180 = vsub.f32 %v1171, %v1178
        %v1181 = vmul.f32 %v1179, 1.442695
        %v1182 = vpow.pop %v1181
        %v1183 = vmul.f32 %v1180, 1.442695
        %v1184 = vpow.pop %v1183
        %v1185 = vsel %vm1048, %v1182, 0.0
        %1186 = vadd.xlane.f32.xlu0 %v1185
        %v1187 = vpop.xlane.xlu0 %1186
        %v1188 = vsel %vm1048, %v1184, 0.0
        %1189 = vadd.xlane.f32.xlu0 %v1188
        %v1190 = vpop.xlane.xlu0 %1189
        %v1191 = vrcp.pop %v1187
        %v1192 = vrcp.pop %v1190
        %v1193 = vmul.f32 %v1182, %v1191
        %v1194 = vmul.f32 %v1184, %v1192
        %1196 = vrot.lane.b32.xlu0 %v988, 124
        %v1197 = vpop.permute.xlu0 %1196
        %v1200 = vsel %vm1048, %v1193, 0
        %1202 = vmatpush.msra.mxu0 0.0
        %1203 = vmatpush.msra.mxu0 0.0
        %1204 = vmatpush.msra.mxu0 0.0
        %1205 = vmatpush.msra.mxu0 0.0
        %1206 = vmatpush.msra.mxu0 0.0
        %1207 = vmatpush.msra.mxu0 0.0
        %1208 = vmatpush.msra.mxu0 0.0
        %1209 = vmatpush.msra.mxu0 0.0
        %1210 = vmatpush.msra.mxu0 0.0
        %1211 = vmatpush.msra.mxu0 0.0
        %1212 = vmatpush.msra.mxu0 0.0
        %1213 = vmatpush.msra.mxu0 0.0
        %1214 = vmatpush.msra.mxu0 0.0
        %1215 = vmatpush.msra.mxu0 0.0
        %1216 = vmatpush.msra.mxu0 0.0
        %1217 = vmatpush.msra.mxu0 %v1197
        %1218 = vmatmul.f32.gmra.mxu0 %v1200
        %v1219 = vpop.f32.mrf.mxu0
        %v1220 = vadd.f32 0.0, %v1219
        %1221 = vdwg.mxu0
        %1223 = vrot.lane.b32.xlu0 %v991, 124
        %v1224 = vpop.permute.xlu0 %1223
        %v1227 = vsel %vm1048, %v1194, 0
        %1229 = vmatpush.msra.mxu0 0.0
        %1230 = vmatpush.msra.mxu0 0.0
        %1231 = vmatpush.msra.mxu0 0.0
        %1232 = vmatpush.msra.mxu0 0.0
        %1233 = vmatpush.msra.mxu0 0.0
        %1234 = vmatpush.msra.mxu0 0.0
        %1235 = vmatpush.msra.mxu0 0.0
        %1236 = vmatpush.msra.mxu0 0.0
        %1237 = vmatpush.msra.mxu0 0.0
        %1238 = vmatpush.msra.mxu0 0.0
        %1239 = vmatpush.msra.mxu0 0.0
        %1240 = vmatpush.msra.mxu0 0.0
        %1241 = vmatpush.msra.mxu0 0.0
        %1242 = vmatpush.msra.mxu0 0.0
        %1243 = vmatpush.msra.mxu0 0.0
        %1244 = vmatpush.msra.mxu0 %v1224
        %1245 = vmatmul.f32.gmra.mxu0 %v1227
        %v1246 = vpop.f32.mrf.mxu0
        %v1247 = vadd.f32 0.0, %v1246
        %1248 = vdwg.mxu0
        %v1250 = vrot.slane %v897, 4
        %v1252 = vsel %vm995, %v1220, 0
        %v1255 = vsel %vm995, %v1247, 0
        %vm1257 = vcmask 1043456
        %v1258 = vsel %vm1257, %v1250, 0
        %1260 = vmatpush.msra.mxu0 0.0
        %1261 = vmatpush.msra.mxu0 0.0
        %1262 = vmatpush.msra.mxu0 0.0
        %1263 = vmatpush.msra.mxu0 0.0
        %1264 = vmatpush.msra.mxu0 0.0
        %1265 = vmatpush.msra.mxu0 0.0
        %1266 = vmatpush.msra.mxu0 0.0
        %1267 = vmatpush.msra.mxu0 0.0
        %1268 = vmatpush.msra.mxu0 0.0
        %1269 = vmatpush.msra.mxu0 0.0
        %1270 = vmatpush.msra.mxu0 0.0
        %1271 = vmatpush.msra.mxu0 0.0
        %1272 = vmatpush.msra.mxu0 0.0
        %1273 = vmatpush.msra.mxu0 0.0
        %1274 = vmatpush.msra.mxu0 0.0
        %1275 = vmatpush.msra.mxu0 %v1258
        %1276 = vmatmul.f32.gmra.mxu0 %v1252
        %v1277 = vpop.f32.mrf.mxu0
        %v1278 = vadd.f32 0.0, %v1277
        %1279 = vmatmul.f32.gmra.mxu0 %v1255
        %v1280 = vpop.f32.mrf.mxu0
        %v1281 = vadd.f32 0.0, %v1280
        %1282 = vdwg.mxu0
        %v1284 = vsel %vm995, %v1092, 0
        %v1287 = vsel %vm995, %v1115, 0
        %v1289 = vsel %vm1257, %v897, 0
        %1291 = vmatpush.msra.mxu0 0.0
        %1292 = vmatpush.msra.mxu0 0.0
        %1293 = vmatpush.msra.mxu0 0.0
        %1294 = vmatpush.msra.mxu0 0.0
        %1295 = vmatpush.msra.mxu0 0.0
        %1296 = vmatpush.msra.mxu0 0.0
        %1297 = vmatpush.msra.mxu0 0.0
        %1298 = vmatpush.msra.mxu0 0.0
        %1299 = vmatpush.msra.mxu0 0.0
        %1300 = vmatpush.msra.mxu0 0.0
        %1301 = vmatpush.msra.mxu0 0.0
        %1302 = vmatpush.msra.mxu0 0.0
        %1303 = vmatpush.msra.mxu0 0.0
        %1304 = vmatpush.msra.mxu0 0.0
        %1305 = vmatpush.msra.mxu0 0.0
        %1306 = vmatpush.msra.mxu0 %v1289
        %1307 = vmatmul.f32.gmra.mxu0 %v1284
        %v1308 = vpop.f32.mrf.mxu0
        %v1309 = vadd.f32 %v1278, %v1308
        %1310 = vmatmul.f32.gmra.mxu0 %v1287
        %v1311 = vpop.f32.mrf.mxu0
        %v1312 = vadd.f32 %v1281, %v1311
        %1313 = vdwg.mxu0
        %1314 = vrot.lane.b32.xlu0 %v993, 120
        %v1315 = vpop.permute.xlu0 %1314
        %1316 = vrot.lane.b32.xlu0 %v959, 120
        %v1317 = vpop.permute.xlu0 %1316
        %v1318 = vsel %vm995, %v1315, 0
        %v1320 = vsel %vm995, %v1317, 0
        %1322 = vmatpush.xpose.msra.mxu0 0.0
        %1323 = vmatpush.xpose.msra.mxu0 0.0
        %1324 = vmatpush.xpose.msra.mxu0 0.0
        %1325 = vmatpush.xpose.msra.mxu0 0.0
        %1326 = vmatpush.xpose.msra.mxu0 0.0
        %1327 = vmatpush.xpose.msra.mxu0 0.0
        %1328 = vmatpush.xpose.msra.mxu0 0.0
        %1329 = vmatpush.xpose.msra.mxu0 0.0
        %1330 = vmatpush.xpose.msra.mxu0 0.0
        %1331 = vmatpush.xpose.msra.mxu0 0.0
        %1332 = vmatpush.xpose.msra.mxu0 0.0
        %1333 = vmatpush.xpose.msra.mxu0 0.0
        %1334 = vmatpush.xpose.msra.mxu0 0.0
        %1335 = vmatpush.xpose.msra.mxu0 0.0
        %1336 = vmatpush.xpose.msra.mxu0 0.0
        %1337 = vmatpush.xpose.msra.mxu0 %v1320
        %1338 = vmatmul.f32.gmra.mxu0 %v1318
        %v1339 = vpop.f32.mrf.mxu0
        %v1340 = vadd.f32 0.0, %v1339
        %1341 = vdwg.mxu0
        %1342 = vrot.lane.b32.xlu0 %v994, 120
        %v1343 = vpop.permute.xlu0 %1342
        %1344 = vrot.lane.b32.xlu0 %v962, 120
        %v1345 = vpop.permute.xlu0 %1344
        %v1346 = vsel %vm995, %v1343, 0
        %v1348 = vsel %vm995, %v1345, 0
        %1350 = vmatpush.xpose.msra.mxu0 0.0
        %1351 = vmatpush.xpose.msra.mxu0 0.0
        %1352 = vmatpush.xpose.msra.mxu0 0.0
        %1353 = vmatpush.xpose.msra.mxu0 0.0
        %1354 = vmatpush.xpose.msra.mxu0 0.0
        %1355 = vmatpush.xpose.msra.mxu0 0.0
        %1356 = vmatpush.xpose.msra.mxu0 0.0
        %1357 = vmatpush.xpose.msra.mxu0 0.0
        %1358 = vmatpush.xpose.msra.mxu0 0.0
        %1359 = vmatpush.xpose.msra.mxu0 0.0
        %1360 = vmatpush.xpose.msra.mxu0 0.0
        %1361 = vmatpush.xpose.msra.mxu0 0.0
        %1362 = vmatpush.xpose.msra.mxu0 0.0
        %1363 = vmatpush.xpose.msra.mxu0 0.0
        %1364 = vmatpush.xpose.msra.mxu0 0.0
        %1365 = vmatpush.xpose.msra.mxu0 %v1348
        %1366 = vmatmul.f32.gmra.mxu0 %v1346
        %v1367 = vpop.f32.mrf.mxu0
        %v1368 = vadd.f32 0.0, %v1367
        %1369 = vdwg.mxu0
        %v1370 = vsel %vm1048, %v1340, -inf
        %1371 = vmax.xlane.f32.xlu0 %v1370
        %v1372 = vpop.xlane.xlu0 %1371
        %v1373 = vsel %vm1048, %v1368, -inf
        %1374 = vmax.xlane.f32.xlu0 %v1373
        %v1375 = vpop.xlane.xlu0 %1374
        %v1376 = vsub.f32 %v1340, %v1372
        %v1377 = vsub.f32 %v1368, %v1375
        %v1378 = vmul.f32 %v1376, 1.442695
        %v1379 = vpow.pop %v1378
        %v1380 = vmul.f32 %v1377, 1.442695
        %v1381 = vpow.pop %v1380
        %v1382 = vsel %vm1048, %v1379, 0.0
        %1383 = vadd.xlane.f32.xlu0 %v1382
        %v1384 = vpop.xlane.xlu0 %1383
        %v1385 = vsel %vm1048, %v1381, 0.0
        %1386 = vadd.xlane.f32.xlu0 %v1385
        %v1387 = vpop.xlane.xlu0 %1386
        %v1388 = vrcp.pop %v1384
        %v1389 = vrcp.pop %v1387
        %v1390 = vmul.f32 %v1379, %v1388
        %v1391 = vmul.f32 %v1381, %v1389
        %1392 = vrot.lane.b32.xlu0 %v988, 120
        %v1393 = vpop.permute.xlu0 %1392
        %v1396 = vsel %vm1048, %v1390, 0
        %1398 = vmatpush.msra.mxu0 0.0
        %1399 = vmatpush.msra.mxu0 0.0
        %1400 = vmatpush.msra.mxu0 0.0
        %1401 = vmatpush.msra.mxu0 0.0
        %1402 = vmatpush.msra.mxu0 0.0
        %1403 = vmatpush.msra.mxu0 0.0
        %1404 = vmatpush.msra.mxu0 0.0
        %1405 = vmatpush.msra.mxu0 0.0
        %1406 = vmatpush.msra.mxu0 0.0
        %1407 = vmatpush.msra.mxu0 0.0
        %1408 = vmatpush.msra.mxu0 0.0
        %1409 = vmatpush.msra.mxu0 0.0
        %1410 = vmatpush.msra.mxu0 0.0
        %1411 = vmatpush.msra.mxu0 0.0
        %1412 = vmatpush.msra.mxu0 0.0
        %1413 = vmatpush.msra.mxu0 %v1393
        %1414 = vmatmul.f32.gmra.mxu0 %v1396
        %v1415 = vpop.f32.mrf.mxu0
        %v1416 = vadd.f32 0.0, %v1415
        %1417 = vdwg.mxu0
        %1418 = vrot.lane.b32.xlu0 %v991, 120
        %v1419 = vpop.permute.xlu0 %1418
        %v1422 = vsel %vm1048, %v1391, 0
        %1424 = vmatpush.msra.mxu0 0.0
        %1425 = vmatpush.msra.mxu0 0.0
        %1426 = vmatpush.msra.mxu0 0.0
        %1427 = vmatpush.msra.mxu0 0.0
        %1428 = vmatpush.msra.mxu0 0.0
        %1429 = vmatpush.msra.mxu0 0.0
        %1430 = vmatpush.msra.mxu0 0.0
        %1431 = vmatpush.msra.mxu0 0.0
        %1432 = vmatpush.msra.mxu0 0.0
        %1433 = vmatpush.msra.mxu0 0.0
        %1434 = vmatpush.msra.mxu0 0.0
        %1435 = vmatpush.msra.mxu0 0.0
        %1436 = vmatpush.msra.mxu0 0.0
        %1437 = vmatpush.msra.mxu0 0.0
        %1438 = vmatpush.msra.mxu0 0.0
        %1439 = vmatpush.msra.mxu0 %v1419
        %1440 = vmatmul.f32.gmra.mxu0 %v1422
        %v1441 = vpop.f32.mrf.mxu0
        %v1442 = vadd.f32 0.0, %v1441
        %1443 = vdwg.mxu0
        %v1445 = vsel %vm995, %v1416, 0
        %v1448 = vsel %vm995, %v1442, 0
        %v1451 = vsel %vm1257, %v898, 0
        %1453 = vmatpush.msra.mxu0 0.0
        %1454 = vmatpush.msra.mxu0 0.0
        %1455 = vmatpush.msra.mxu0 0.0
        %1456 = vmatpush.msra.mxu0 0.0
        %1457 = vmatpush.msra.mxu0 0.0
        %1458 = vmatpush.msra.mxu0 0.0
        %1459 = vmatpush.msra.mxu0 0.0
        %1460 = vmatpush.msra.mxu0 0.0
        %1461 = vmatpush.msra.mxu0 0.0
        %1462 = vmatpush.msra.mxu0 0.0
        %1463 = vmatpush.msra.mxu0 0.0
        %1464 = vmatpush.msra.mxu0 0.0
        %1465 = vmatpush.msra.mxu0 0.0
        %1466 = vmatpush.msra.mxu0 0.0
        %1467 = vmatpush.msra.mxu0 0.0
        %1468 = vmatpush.msra.mxu0 %v1451
        %1469 = vmatmul.f32.gmra.mxu0 %v1445
        %v1470 = vpop.f32.mrf.mxu0
        %v1471 = vadd.f32 0.0, %v1470
        %1472 = vmatmul.f32.gmra.mxu0 %v1448
        %v1473 = vpop.f32.mrf.mxu0
        %v1474 = vadd.f32 0.0, %v1473
        %1475 = vdwg.mxu0
        %v1476 = vadd.f32 %v1309, %v1471
        %v1477 = vadd.f32 %v1312, %v1474
        %1478 = vrot.lane.b32.xlu0 %v993, 116
        %v1479 = vpop.permute.xlu0 %1478
        %1480 = vrot.lane.b32.xlu0 %v959, 116
        %v1481 = vpop.permute.xlu0 %1480
        %v1482 = vsel %vm995, %v1479, 0
        %v1484 = vsel %vm995, %v1481, 0
        %1486 = vmatpush.xpose.msra.mxu0 0.0
        %1487 = vmatpush.xpose.msra.mxu0 0.0
        %1488 = vmatpush.xpose.msra.mxu0 0.0
        %1489 = vmatpush.xpose.msra.mxu0 0.0
        %1490 = vmatpush.xpose.msra.mxu0 0.0
        %1491 = vmatpush.xpose.msra.mxu0 0.0
        %1492 = vmatpush.xpose.msra.mxu0 0.0
        %1493 = vmatpush.xpose.msra.mxu0 0.0
        %1494 = vmatpush.xpose.msra.mxu0 0.0
        %1495 = vmatpush.xpose.msra.mxu0 0.0
        %1496 = vmatpush.xpose.msra.mxu0 0.0
        %1497 = vmatpush.xpose.msra.mxu0 0.0
        %1498 = vmatpush.xpose.msra.mxu0 0.0
        %1499 = vmatpush.xpose.msra.mxu0 0.0
        %1500 = vmatpush.xpose.msra.mxu0 0.0
        %1501 = vmatpush.xpose.msra.mxu0 %v1484
        %1502 = vmatmul.f32.gmra.mxu0 %v1482
        %v1503 = vpop.f32.mrf.mxu0
        %v1504 = vadd.f32 0.0, %v1503
        %1505 = vdwg.mxu0
        %1506 = vrot.lane.b32.xlu0 %v994, 116
        %v1507 = vpop.permute.xlu0 %1506
        %1508 = vrot.lane.b32.xlu0 %v962, 116
        %v1509 = vpop.permute.xlu0 %1508
        %v1510 = vsel %vm995, %v1507, 0
        %v1512 = vsel %vm995, %v1509, 0
        %1514 = vmatpush.xpose.msra.mxu0 0.0
        %1515 = vmatpush.xpose.msra.mxu0 0.0
        %1516 = vmatpush.xpose.msra.mxu0 0.0
        %1517 = vmatpush.xpose.msra.mxu0 0.0
        %1518 = vmatpush.xpose.msra.mxu0 0.0
        %1519 = vmatpush.xpose.msra.mxu0 0.0
        %1520 = vmatpush.xpose.msra.mxu0 0.0
        %1521 = vmatpush.xpose.msra.mxu0 0.0
        %1522 = vmatpush.xpose.msra.mxu0 0.0
        %1523 = vmatpush.xpose.msra.mxu0 0.0
        %1524 = vmatpush.xpose.msra.mxu0 0.0
        %1525 = vmatpush.xpose.msra.mxu0 0.0
        %1526 = vmatpush.xpose.msra.mxu0 0.0
        %1527 = vmatpush.xpose.msra.mxu0 0.0
        %1528 = vmatpush.xpose.msra.mxu0 0.0
        %1529 = vmatpush.xpose.msra.mxu0 %v1512
        %1530 = vmatmul.f32.gmra.mxu0 %v1510
        %v1531 = vpop.f32.mrf.mxu0
        %v1532 = vadd.f32 0.0, %v1531
        %1533 = vdwg.mxu0
        %v1534 = vsel %vm1048, %v1504, -inf
        %1535 = vmax.xlane.f32.xlu0 %v1534
        %v1536 = vpop.xlane.xlu0 %1535
        %v1537 = vsel %vm1048, %v1532, -inf
        %1538 = vmax.xlane.f32.xlu0 %v1537
        %v1539 = vpop.xlane.xlu0 %1538
        %v1540 = vsub.f32 %v1504, %v1536
        %v1541 = vsub.f32 %v1532, %v1539
        %v1542 = vmul.f32 %v1540, 1.442695
        %v1543 = vpow.pop %v1542
        %v1544 = vmul.f32 %v1541, 1.442695
        %v1545 = vpow.pop %v1544
        %v1546 = vsel %vm1048, %v1543, 0.0
        %1547 = vadd.xlane.f32.xlu0 %v1546
        %v1548 = vpop.xlane.xlu0 %1547
        %v1549 = vsel %vm1048, %v1545, 0.0
        %1550 = vadd.xlane.f32.xlu0 %v1549
        %v1551 = vpop.xlane.xlu0 %1550
        %v1552 = vrcp.pop %v1548
        %v1553 = vrcp.pop %v1551
        %v1554 = vmul.f32 %v1543, %v1552
        %v1555 = vmul.f32 %v1545, %v1553
        %1556 = vrot.lane.b32.xlu0 %v988, 116
        %v1557 = vpop.permute.xlu0 %1556
        %v1560 = vsel %vm1048, %v1554, 0
        %1562 = vmatpush.msra.mxu0 0.0
        %1563 = vmatpush.msra.mxu0 0.0
        %1564 = vmatpush.msra.mxu0 0.0
        %1565 = vmatpush.msra.mxu0 0.0
        %1566 = vmatpush.msra.mxu0 0.0
        %1567 = vmatpush.msra.mxu0 0.0
        %1568 = vmatpush.msra.mxu0 0.0
        %1569 = vmatpush.msra.mxu0 0.0
        %1570 = vmatpush.msra.mxu0 0.0
        %1571 = vmatpush.msra.mxu0 0.0
        %1572 = vmatpush.msra.mxu0 0.0
        %1573 = vmatpush.msra.mxu0 0.0
        %1574 = vmatpush.msra.mxu0 0.0
        %1575 = vmatpush.msra.mxu0 0.0
        %1576 = vmatpush.msra.mxu0 0.0
        %1577 = vmatpush.msra.mxu0 %v1557
        %1578 = vmatmul.f32.gmra.mxu0 %v1560
        %v1579 = vpop.f32.mrf.mxu0
        %v1580 = vadd.f32 0.0, %v1579
        %1581 = vdwg.mxu0
        %1582 = vrot.lane.b32.xlu0 %v991, 116
        %v1583 = vpop.permute.xlu0 %1582
        %v1586 = vsel %vm1048, %v1555, 0
        %1588 = vmatpush.msra.mxu0 0.0
        %1589 = vmatpush.msra.mxu0 0.0
        %1590 = vmatpush.msra.mxu0 0.0
        %1591 = vmatpush.msra.mxu0 0.0
        %1592 = vmatpush.msra.mxu0 0.0
        %1593 = vmatpush.msra.mxu0 0.0
        %1594 = vmatpush.msra.mxu0 0.0
        %1595 = vmatpush.msra.mxu0 0.0
        %1596 = vmatpush.msra.mxu0 0.0
        %1597 = vmatpush.msra.mxu0 0.0
        %1598 = vmatpush.msra.mxu0 0.0
        %1599 = vmatpush.msra.mxu0 0.0
        %1600 = vmatpush.msra.mxu0 0.0
        %1601 = vmatpush.msra.mxu0 0.0
        %1602 = vmatpush.msra.mxu0 0.0
        %1603 = vmatpush.msra.mxu0 %v1583
        %1604 = vmatmul.f32.gmra.mxu0 %v1586
        %v1605 = vpop.f32.mrf.mxu0
        %v1606 = vadd.f32 0.0, %v1605
        %1607 = vdwg.mxu0
        %v1608 = vrot.slane %v898, 4
        %v1610 = vsel %vm995, %v1580, 0
        %v1613 = vsel %vm995, %v1606, 0
        %v1615 = vsel %vm1257, %v1608, 0
        %1617 = vmatpush.msra.mxu0 0.0
        %1618 = vmatpush.msra.mxu0 0.0
        %1619 = vmatpush.msra.mxu0 0.0
        %1620 = vmatpush.msra.mxu0 0.0
        %1621 = vmatpush.msra.mxu0 0.0
        %1622 = vmatpush.msra.mxu0 0.0
        %1623 = vmatpush.msra.mxu0 0.0
        %1624 = vmatpush.msra.mxu0 0.0
        %1625 = vmatpush.msra.mxu0 0.0
        %1626 = vmatpush.msra.mxu0 0.0
        %1627 = vmatpush.msra.mxu0 0.0
        %1628 = vmatpush.msra.mxu0 0.0
        %1629 = vmatpush.msra.mxu0 0.0
        %1630 = vmatpush.msra.mxu0 0.0
        %1631 = vmatpush.msra.mxu0 0.0
        %1632 = vmatpush.msra.mxu0 %v1615
        %1633 = vmatmul.f32.gmra.mxu0 %v1610
        %v1634 = vpop.f32.mrf.mxu0
        %v1635 = vadd.f32 0.0, %v1634
        %1636 = vmatmul.f32.gmra.mxu0 %v1613
        %v1637 = vpop.f32.mrf.mxu0
        %v1638 = vadd.f32 0.0, %v1637
        %1639 = vdwg.mxu0
        %v1640 = vadd.f32 %v1476, %v1635
        %v1641 = vadd.f32 %v1477, %v1638
        %v1642 = vld [vmem:[%s856] sm:$0x1]
        %v1644 = vperm.slane %v1642, 0
        %v1646 = vadd.f32 %v1640, %v1644
        %v1647 = vadd.f32 %v1641, %v1644
        %v1648 = vadd.f32 %v895, %v1646
        %v1649 = vadd.f32 %v896, %v1647
        %v1650 = vsel %vm905, %v1648, 0.0
        %1651 = vadd.xlane.f32.xlu0 %v1650
        %v1652 = vpop.xlane.xlu0 %1651
        %v1653 = vsel %vm905, %v1649, 0.0
        %1654 = vadd.xlane.f32.xlu0 %v1653
        %v1655 = vpop.xlane.xlu0 %1654
        %v1656 = vrcp.pop 16.0
        %v1657 = vmul.f32 16.0, %v1656
        %v1658 = vsub.f32 1.0, %v1657
        %v1659 = vmul.f32 %v1656, %v1658
        %v1660 = vadd.f32 %v1656, %v1659
        %vm1661 = vweird.f32 %v1656
        %v1662 = vsel %vm1661, %v1656, %v1660
        %v1663 = vmul.f32 %v1652, %v1662
        %v1664 = vmul.f32 %v1655, %v1662
        %v1665 = vsub.f32 %v1648, %v1663
        %v1666 = vsub.f32 %v1649, %v1664
        %v1667 = vmul.f32 %v1665, %v1665
        %v1668 = vmul.f32 %v1666, %v1666
        %v1669 = vsel %vm905, %v1667, 0.0
        %1670 = vadd.xlane.f32.xlu0 %v1669
        %v1671 = vpop.xlane.xlu0 %1670
        %v1672 = vsel %vm905, %v1668, 0.0
        %1673 = vadd.xlane.f32.xlu0 %v1672
        %v1674 = vpop.xlane.xlu0 %1673
        %v1675 = vmul.f32 %v1671, %v1662
        %v1676 = vmul.f32 %v1674, %v1662
        %v1677 = vadd.f32 %v1675, 1e-05
        %v1678 = vadd.f32 %v1676, 1e-05
        %v1679 = vrsqrt.pop %v1677
        %v1680 = vmul.f32 %v1679, %v1677
        %v1681 = vmul.f32 %v1680, %v1679
        %v1682 = vmul.f32 0.5, %v1681
        %v1683 = vsub.f32 1.5, %v1682
        %v1684 = vmul.f32 %v1679, %v1683
        %vm1685 = vweird.f32 %v1677
        %vm1686 = vweird.f32 %v1679
        %vm1687 = vmor %vm1685, %vm1686
        %v1688 = vsel %vm1687, %v1679, %v1684
        %v1689 = vrsqrt.pop %v1678
        %v1690 = vmul.f32 %v1689, %v1678
        %v1691 = vmul.f32 %v1690, %v1689
        %v1692 = vmul.f32 0.5, %v1691
        %v1693 = vsub.f32 1.5, %v1692
        %v1694 = vmul.f32 %v1689, %v1693
        %vm1695 = vweird.f32 %v1678
        %vm1696 = vweird.f32 %v1689
        %vm1697 = vmor %vm1695, %vm1696
        %v1698 = vsel %vm1697, %v1689, %v1694
        %v1699 = vmul.f32 %v1665, %v1688
        %v1700 = vmul.f32 %v1666, %v1698
        %v1701 = vld [vmem:[%s859] sm:$0x1]
        %v1703 = vperm.slane %v1701, 0
        %v1705 = vmul.f32 %v1699, %v1703
        %v1706 = vmul.f32 %v1700, %v1703
        %v1707 = vld [vmem:[%s862] sm:$0x1]
        %v1709 = vperm.slane %v1707, 0
        %v1711 = vadd.f32 %v1705, %v1709
        %v1712 = vadd.f32 %v1706, %v1709
        %v1713 = vld [vmem:[%s867] sm:$0xff]
        %v1714 = vld [vmem:[%s867 + $0x8] sm:$0xff]
        %v1715 = vld [vmem:[%s867 + $0x10] sm:$0xff]
        %v1716 = vld [vmem:[%s867 + $0x18] sm:$0xff]
        %v1717 = vld [vmem:[%s867 + $0x20] sm:$0xff]
        %v1718 = vld [vmem:[%s867 + $0x28] sm:$0xff]
        %v1719 = vld [vmem:[%s867 + $0x30] sm:$0xff]
        %v1720 = vld [vmem:[%s867 + $0x38] sm:$0xff]
        %v1721 = vld [vmem:[%s867 + $0x40] sm:$0xff]
        %v1722 = vld [vmem:[%s867 + $0x48] sm:$0xff]
        %v1723 = vld [vmem:[%s867 + $0x50] sm:$0xff]
        %v1724 = vld [vmem:[%s867 + $0x58] sm:$0xff]
        %v1725 = vld [vmem:[%s867 + $0x60] sm:$0xff]
        %v1726 = vld [vmem:[%s867 + $0x68] sm:$0xff]
        %v1727 = vld [vmem:[%s867 + $0x70] sm:$0xff]
        %v1728 = vld [vmem:[%s867 + $0x78] sm:$0xff]
        %v1729 = vld [vmem:[%s867 + $0x80] sm:$0xff]
        %v1730 = vld [vmem:[%s867 + $0x88] sm:$0xff]
        %v1731 = vld [vmem:[%s867 + $0x90] sm:$0xff]
        %v1732 = vld [vmem:[%s867 + $0x98] sm:$0xff]
        %v1733 = vld [vmem:[%s867 + $0xa0] sm:$0xff]
        %v1734 = vld [vmem:[%s867 + $0xa8] sm:$0xff]
        %v1735 = vld [vmem:[%s867 + $0xb0] sm:$0xff]
        %v1736 = vld [vmem:[%s867 + $0xb8] sm:$0xff]
        %v1737 = vld [vmem:[%s867 + $0xc0] sm:$0xff]
        %v1738 = vld [vmem:[%s867 + $0xc8] sm:$0xff]
        %v1739 = vld [vmem:[%s867 + $0xd0] sm:$0xff]
        %v1740 = vld [vmem:[%s867 + $0xd8] sm:$0xff]
        %v1741 = vld [vmem:[%s867 + $0xe0] sm:$0xff]
        %v1742 = vld [vmem:[%s867 + $0xe8] sm:$0xff]
        %v1743 = vld [vmem:[%s867 + $0xf0] sm:$0xff]
        %v1744 = vld [vmem:[%s867 + $0xf8] sm:$0xff]
        %v1745 = vld [vmem:[%s871] sm:$0xff]
        %v1746 = vld [vmem:[%s871 + $0x8] sm:$0xff]
        %v1749 = vperm.slane %v1745, 0
        %v1750 = vperm.slane %v1745, 1
        %v1751 = vperm.slane %v1745, 2
        %v1752 = vperm.slane %v1745, 3
        %v1753 = vperm.slane %v1745, 4
        %v1754 = vperm.slane %v1745, 5
        %v1755 = vperm.slane %v1745, 6
        %v1756 = vperm.slane %v1745, 7
        %v1757 = vperm.slane %v1746, 0
        %v1758 = vperm.slane %v1746, 1
        %v1759 = vperm.slane %v1746, 2
        %v1760 = vperm.slane %v1746, 3
        %v1761 = vperm.slane %v1746, 4
        %v1762 = vperm.slane %v1746, 5
        %v1763 = vperm.slane %v1746, 6
        %v1764 = vperm.slane %v1746, 7
        %v1782 = vsel %vm905, %v1711, 0
        %v1785 = vsel %vm905, %v1712, 0
        %1787 = vmatpush.msra.mxu0 0.0
        %1788 = vmatpush.msra.mxu0 0.0
        %1789 = vmatpush.msra.mxu0 0.0
        %1790 = vmatpush.msra.mxu0 0.0
        %1791 = vmatpush.msra.mxu0 0.0
        %1792 = vmatpush.msra.mxu0 0.0
        %1793 = vmatpush.msra.mxu0 0.0
        %1794 = vmatpush.msra.mxu0 0.0
        %1795 = vmatpush.msra.mxu0 0.0
        %1796 = vmatpush.msra.mxu0 0.0
        %1797 = vmatpush.msra.mxu0 0.0
        %1798 = vmatpush.msra.mxu0 0.0
        %1799 = vmatpush.msra.mxu0 0.0
        %1800 = vmatpush.msra.mxu0 0.0
        %1801 = vmatpush.msra.mxu0 %v1729
        %1802 = vmatpush.msra.mxu0 %v1713
        %1803 = vmatmul.f32.gmra.mxu0 %v1782
        %v1804 = vpop.f32.mrf.mxu0
        %v1805 = vadd.f32 %v1749, %v1804
        %1806 = vmatmul.f32.gmra.mxu0 %v1785
        %v1807 = vpop.f32.mrf.mxu0
        %v1808 = vadd.f32 %v1749, %v1807
        %1809 = vdwg.mxu0
        %1810 = vmatpush.msra.mxu0 0.0
        %1811 = vmatpush.msra.mxu0 0.0
        %1812 = vmatpush.msra.mxu0 0.0
        %1813 = vmatpush.msra.mxu0 0.0
        %1814 = vmatpush.msra.mxu0 0.0
        %1815 = vmatpush.msra.mxu0 0.0
        %1816 = vmatpush.msra.mxu0 0.0
        %1817 = vmatpush.msra.mxu0 0.0
        %1818 = vmatpush.msra.mxu0 0.0
        %1819 = vmatpush.msra.mxu0 0.0
        %1820 = vmatpush.msra.mxu0 0.0
        %1821 = vmatpush.msra.mxu0 0.0
        %1822 = vmatpush.msra.mxu0 0.0
        %1823 = vmatpush.msra.mxu0 0.0
        %1824 = vmatpush.msra.mxu0 %v1730
        %1825 = vmatpush.msra.mxu0 %v1714
        %1826 = vmatmul.f32.gmra.mxu0 %v1782
        %v1827 = vpop.f32.mrf.mxu0
        %v1828 = vadd.f32 %v1750, %v1827
        %1829 = vmatmul.f32.gmra.mxu0 %v1785
        %v1830 = vpop.f32.mrf.mxu0
        %v1831 = vadd.f32 %v1750, %v1830
        %1832 = vdwg.mxu0
        %1833 = vmatpush.msra.mxu0 0.0
        %1834 = vmatpush.msra.mxu0 0.0
        %1835 = vmatpush.msra.mxu0 0.0
        %1836 = vmatpush.msra.mxu0 0.0
        %1837 = vmatpush.msra.mxu0 0.0
        %1838 = vmatpush.msra.mxu0 0.0
        %1839 = vmatpush.msra.mxu0 0.0
        %1840 = vmatpush.msra.mxu0 0.0
        %1841 = vmatpush.msra.mxu0 0.0
        %1842 = vmatpush.msra.mxu0 0.0
        %1843 = vmatpush.msra.mxu0 0.0
        %1844 = vmatpush.msra.mxu0 0.0
        %1845 = vmatpush.msra.mxu0 0.0
        %1846 = vmatpush.msra.mxu0 0.0
        %1847 = vmatpush.msra.mxu0 %v1731
        %1848 = vmatpush.msra.mxu0 %v1715
        %1849 = vmatmul.f32.gmra.mxu0 %v1782
        %v1850 = vpop.f32.mrf.mxu0
        %v1851 = vadd.f32 %v1751, %v1850
        %1852 = vmatmul.f32.gmra.mxu0 %v1785
        %v1853 = vpop.f32.mrf.mxu0
        %v1854 = vadd.f32 %v1751, %v1853
        %1855 = vdwg.mxu0
        %1856 = vmatpush.msra.mxu0 0.0
        %1857 = vmatpush.msra.mxu0 0.0
        %1858 = vmatpush.msra.mxu0 0.0
        %1859 = vmatpush.msra.mxu0 0.0
        %1860 = vmatpush.msra.mxu0 0.0
        %1861 = vmatpush.msra.mxu0 0.0
        %1862 = vmatpush.msra.mxu0 0.0
        %1863 = vmatpush.msra.mxu0 0.0
        %1864 = vmatpush.msra.mxu0 0.0
        %1865 = vmatpush.msra.mxu0 0.0
        %1866 = vmatpush.msra.mxu0 0.0
        %1867 = vmatpush.msra.mxu0 0.0
        %1868 = vmatpush.msra.mxu0 0.0
        %1869 = vmatpush.msra.mxu0 0.0
        %1870 = vmatpush.msra.mxu0 %v1732
        %1871 = vmatpush.msra.mxu0 %v1716
        %1872 = vmatmul.f32.gmra.mxu0 %v1782
        %v1873 = vpop.f32.mrf.mxu0
        %v1874 = vadd.f32 %v1752, %v1873
        %1875 = vmatmul.f32.gmra.mxu0 %v1785
        %v1876 = vpop.f32.mrf.mxu0
        %v1877 = vadd.f32 %v1752, %v1876
        %1878 = vdwg.mxu0
        %1879 = vmatpush.msra.mxu0 0.0
        %1880 = vmatpush.msra.mxu0 0.0
        %1881 = vmatpush.msra.mxu0 0.0
        %1882 = vmatpush.msra.mxu0 0.0
        %1883 = vmatpush.msra.mxu0 0.0
        %1884 = vmatpush.msra.mxu0 0.0
        %1885 = vmatpush.msra.mxu0 0.0
        %1886 = vmatpush.msra.mxu0 0.0
        %1887 = vmatpush.msra.mxu0 0.0
        %1888 = vmatpush.msra.mxu0 0.0
        %1889 = vmatpush.msra.mxu0 0.0
        %1890 = vmatpush.msra.mxu0 0.0
        %1891 = vmatpush.msra.mxu0 0.0
        %1892 = vmatpush.msra.mxu0 0.0
        %1893 = vmatpush.msra.mxu0 %v1733
        %1894 = vmatpush.msra.mxu0 %v1717
        %1895 = vmatmul.f32.gmra.mxu0 %v1782
        %v1896 = vpop.f32.mrf.mxu0
        %v1897 = vadd.f32 %v1753, %v1896
        %1898 = vmatmul.f32.gmra.mxu0 %v1785
        %v1899 = vpop.f32.mrf.mxu0
        %v1900 = vadd.f32 %v1753, %v1899
        %1901 = vdwg.mxu0
        %1902 = vmatpush.msra.mxu0 0.0
        %1903 = vmatpush.msra.mxu0 0.0
        %1904 = vmatpush.msra.mxu0 0.0
        %1905 = vmatpush.msra.mxu0 0.0
        %1906 = vmatpush.msra.mxu0 0.0
        %1907 = vmatpush.msra.mxu0 0.0
        %1908 = vmatpush.msra.mxu0 0.0
        %1909 = vmatpush.msra.mxu0 0.0
        %1910 = vmatpush.msra.mxu0 0.0
        %1911 = vmatpush.msra.mxu0 0.0
        %1912 = vmatpush.msra.mxu0 0.0
        %1913 = vmatpush.msra.mxu0 0.0
        %1914 = vmatpush.msra.mxu0 0.0
        %1915 = vmatpush.msra.mxu0 0.0
        %1916 = vmatpush.msra.mxu0 %v1734
        %1917 = vmatpush.msra.mxu0 %v1718
        %1918 = vmatmul.f32.gmra.mxu0 %v1782
        %v1919 = vpop.f32.mrf.mxu0
        %v1920 = vadd.f32 %v1754, %v1919
        %1921 = vmatmul.f32.gmra.mxu0 %v1785
        %v1922 = vpop.f32.mrf.mxu0
        %v1923 = vadd.f32 %v1754, %v1922
        %1924 = vdwg.mxu0
        %1925 = vmatpush.msra.mxu0 0.0
        %1926 = vmatpush.msra.mxu0 0.0
        %1927 = vmatpush.msra.mxu0 0.0
        %1928 = vmatpush.msra.mxu0 0.0
        %1929 = vmatpush.msra.mxu0 0.0
        %1930 = vmatpush.msra.mxu0 0.0
        %1931 = vmatpush.msra.mxu0 0.0
        %1932 = vmatpush.msra.mxu0 0.0
        %1933 = vmatpush.msra.mxu0 0.0
        %1934 = vmatpush.msra.mxu0 0.0
        %1935 = vmatpush.msra.mxu0 0.0
        %1936 = vmatpush.msra.mxu0 0.0
        %1937 = vmatpush.msra.mxu0 0.0
        %1938 = vmatpush.msra.mxu0 0.0
        %1939 = vmatpush.msra.mxu0 %v1735
        %1940 = vmatpush.msra.mxu0 %v1719
        %1941 = vmatmul.f32.gmra.mxu0 %v1782
        %v1942 = vpop.f32.mrf.mxu0
        %v1943 = vadd.f32 %v1755, %v1942
        %1944 = vmatmul.f32.gmra.mxu0 %v1785
        %v1945 = vpop.f32.mrf.mxu0
        %v1946 = vadd.f32 %v1755, %v1945
        %1947 = vdwg.mxu0
        %1948 = vmatpush.msra.mxu0 0.0
        %1949 = vmatpush.msra.mxu0 0.0
        %1950 = vmatpush.msra.mxu0 0.0
        %1951 = vmatpush.msra.mxu0 0.0
        %1952 = vmatpush.msra.mxu0 0.0
        %1953 = vmatpush.msra.mxu0 0.0
        %1954 = vmatpush.msra.mxu0 0.0
        %1955 = vmatpush.msra.mxu0 0.0
        %1956 = vmatpush.msra.mxu0 0.0
        %1957 = vmatpush.msra.mxu0 0.0
        %1958 = vmatpush.msra.mxu0 0.0
        %1959 = vmatpush.msra.mxu0 0.0
        %1960 = vmatpush.msra.mxu0 0.0
        %1961 = vmatpush.msra.mxu0 0.0
        %1962 = vmatpush.msra.mxu0 %v1736
        %1963 = vmatpush.msra.mxu0 %v1720
        %1964 = vmatmul.f32.gmra.mxu0 %v1782
        %v1965 = vpop.f32.mrf.mxu0
        %v1966 = vadd.f32 %v1756, %v1965
        %1967 = vmatmul.f32.gmra.mxu0 %v1785
        %v1968 = vpop.f32.mrf.mxu0
        %v1969 = vadd.f32 %v1756, %v1968
        %1970 = vdwg.mxu0
        %1971 = vmatpush.msra.mxu0 0.0
        %1972 = vmatpush.msra.mxu0 0.0
        %1973 = vmatpush.msra.mxu0 0.0
        %1974 = vmatpush.msra.mxu0 0.0
        %1975 = vmatpush.msra.mxu0 0.0
        %1976 = vmatpush.msra.mxu0 0.0
        %1977 = vmatpush.msra.mxu0 0.0
        %1978 = vmatpush.msra.mxu0 0.0
        %1979 = vmatpush.msra.mxu0 0.0
        %1980 = vmatpush.msra.mxu0 0.0
        %1981 = vmatpush.msra.mxu0 0.0
        %1982 = vmatpush.msra.mxu0 0.0
        %1983 = vmatpush.msra.mxu0 0.0
        %1984 = vmatpush.msra.mxu0 0.0
        %1985 = vmatpush.msra.mxu0 %v1737
        %1986 = vmatpush.msra.mxu0 %v1721
        %1987 = vmatmul.f32.gmra.mxu0 %v1782
        %v1988 = vpop.f32.mrf.mxu0
        %v1989 = vadd.f32 %v1757, %v1988
        %1990 = vmatmul.f32.gmra.mxu0 %v1785
        %v1991 = vpop.f32.mrf.mxu0
        %v1992 = vadd.f32 %v1757, %v1991
        %1993 = vdwg.mxu0
        %1994 = vmatpush.msra.mxu0 0.0
        %1995 = vmatpush.msra.mxu0 0.0
        %1996 = vmatpush.msra.mxu0 0.0
        %1997 = vmatpush.msra.mxu0 0.0
        %1998 = vmatpush.msra.mxu0 0.0
        %1999 = vmatpush.msra.mxu0 0.0
        %2000 = vmatpush.msra.mxu0 0.0
        %2001 = vmatpush.msra.mxu0 0.0
        %2002 = vmatpush.msra.mxu0 0.0
        %2003 = vmatpush.msra.mxu0 0.0
        %2004 = vmatpush.msra.mxu0 0.0
        %2005 = vmatpush.msra.mxu0 0.0
        %2006 = vmatpush.msra.mxu0 0.0
        %2007 = vmatpush.msra.mxu0 0.0
        %2008 = vmatpush.msra.mxu0 %v1738
        %2009 = vmatpush.msra.mxu0 %v1722
        %2010 = vmatmul.f32.gmra.mxu0 %v1782
        %v2011 = vpop.f32.mrf.mxu0
        %v2012 = vadd.f32 %v1758, %v2011
        %2013 = vmatmul.f32.gmra.mxu0 %v1785
        %v2014 = vpop.f32.mrf.mxu0
        %v2015 = vadd.f32 %v1758, %v2014
        %2016 = vdwg.mxu0
        %2017 = vmatpush.msra.mxu0 0.0
        %2018 = vmatpush.msra.mxu0 0.0
        %2019 = vmatpush.msra.mxu0 0.0
        %2020 = vmatpush.msra.mxu0 0.0
        %2021 = vmatpush.msra.mxu0 0.0
        %2022 = vmatpush.msra.mxu0 0.0
        %2023 = vmatpush.msra.mxu0 0.0
        %2024 = vmatpush.msra.mxu0 0.0
        %2025 = vmatpush.msra.mxu0 0.0
        %2026 = vmatpush.msra.mxu0 0.0
        %2027 = vmatpush.msra.mxu0 0.0
        %2028 = vmatpush.msra.mxu0 0.0
        %2029 = vmatpush.msra.mxu0 0.0
        %2030 = vmatpush.msra.mxu0 0.0
        %2031 = vmatpush.msra.mxu0 %v1739
        %2032 = vmatpush.msra.mxu0 %v1723
        %2033 = vmatmul.f32.gmra.mxu0 %v1782
        %v2034 = vpop.f32.mrf.mxu0
        %v2035 = vadd.f32 %v1759, %v2034
        %2036 = vmatmul.f32.gmra.mxu0 %v1785
        %v2037 = vpop.f32.mrf.mxu0
        %v2038 = vadd.f32 %v1759, %v2037
        %2039 = vdwg.mxu0
        %2040 = vmatpush.msra.mxu0 0.0
        %2041 = vmatpush.msra.mxu0 0.0
        %2042 = vmatpush.msra.mxu0 0.0
        %2043 = vmatpush.msra.mxu0 0.0
        %2044 = vmatpush.msra.mxu0 0.0
        %2045 = vmatpush.msra.mxu0 0.0
        %2046 = vmatpush.msra.mxu0 0.0
        %2047 = vmatpush.msra.mxu0 0.0
        %2048 = vmatpush.msra.mxu0 0.0
        %2049 = vmatpush.msra.mxu0 0.0
        %2050 = vmatpush.msra.mxu0 0.0
        %2051 = vmatpush.msra.mxu0 0.0
        %2052 = vmatpush.msra.mxu0 0.0
        %2053 = vmatpush.msra.mxu0 0.0
        %2054 = vmatpush.msra.mxu0 %v1740
        %2055 = vmatpush.msra.mxu0 %v1724
        %2056 = vmatmul.f32.gmra.mxu0 %v1782
        %v2057 = vpop.f32.mrf.mxu0
        %v2058 = vadd.f32 %v1760, %v2057
        %2059 = vmatmul.f32.gmra.mxu0 %v1785
        %v2060 = vpop.f32.mrf.mxu0
        %v2061 = vadd.f32 %v1760, %v2060
        %2062 = vdwg.mxu0
        %2063 = vmatpush.msra.mxu0 0.0
        %2064 = vmatpush.msra.mxu0 0.0
        %2065 = vmatpush.msra.mxu0 0.0
        %2066 = vmatpush.msra.mxu0 0.0
        %2067 = vmatpush.msra.mxu0 0.0
        %2068 = vmatpush.msra.mxu0 0.0
        %2069 = vmatpush.msra.mxu0 0.0
        %2070 = vmatpush.msra.mxu0 0.0
        %2071 = vmatpush.msra.mxu0 0.0
        %2072 = vmatpush.msra.mxu0 0.0
        %2073 = vmatpush.msra.mxu0 0.0
        %2074 = vmatpush.msra.mxu0 0.0
        %2075 = vmatpush.msra.mxu0 0.0
        %2076 = vmatpush.msra.mxu0 0.0
        %2077 = vmatpush.msra.mxu0 %v1741
        %2078 = vmatpush.msra.mxu0 %v1725
        %2079 = vmatmul.f32.gmra.mxu0 %v1782
        %v2080 = vpop.f32.mrf.mxu0
        %v2081 = vadd.f32 %v1761, %v2080
        %2082 = vmatmul.f32.gmra.mxu0 %v1785
        %v2083 = vpop.f32.mrf.mxu0
        %v2084 = vadd.f32 %v1761, %v2083
        %2085 = vdwg.mxu0
        %2086 = vmatpush.msra.mxu0 0.0
        %2087 = vmatpush.msra.mxu0 0.0
        %2088 = vmatpush.msra.mxu0 0.0
        %2089 = vmatpush.msra.mxu0 0.0
        %2090 = vmatpush.msra.mxu0 0.0
        %2091 = vmatpush.msra.mxu0 0.0
        %2092 = vmatpush.msra.mxu0 0.0
        %2093 = vmatpush.msra.mxu0 0.0
        %2094 = vmatpush.msra.mxu0 0.0
        %2095 = vmatpush.msra.mxu0 0.0
        %2096 = vmatpush.msra.mxu0 0.0
        %2097 = vmatpush.msra.mxu0 0.0
        %2098 = vmatpush.msra.mxu0 0.0
        %2099 = vmatpush.msra.mxu0 0.0
        %2100 = vmatpush.msra.mxu0 %v1742
        %2101 = vmatpush.msra.mxu0 %v1726
        %2102 = vmatmul.f32.gmra.mxu0 %v1782
        %v2103 = vpop.f32.mrf.mxu0
        %v2104 = vadd.f32 %v1762, %v2103
        %2105 = vmatmul.f32.gmra.mxu0 %v1785
        %v2106 = vpop.f32.mrf.mxu0
        %v2107 = vadd.f32 %v1762, %v2106
        %2108 = vdwg.mxu0
        %2109 = vmatpush.msra.mxu0 0.0
        %2110 = vmatpush.msra.mxu0 0.0
        %2111 = vmatpush.msra.mxu0 0.0
        %2112 = vmatpush.msra.mxu0 0.0
        %2113 = vmatpush.msra.mxu0 0.0
        %2114 = vmatpush.msra.mxu0 0.0
        %2115 = vmatpush.msra.mxu0 0.0
        %2116 = vmatpush.msra.mxu0 0.0
        %2117 = vmatpush.msra.mxu0 0.0
        %2118 = vmatpush.msra.mxu0 0.0
        %2119 = vmatpush.msra.mxu0 0.0
        %2120 = vmatpush.msra.mxu0 0.0
        %2121 = vmatpush.msra.mxu0 0.0
        %2122 = vmatpush.msra.mxu0 0.0
        %2123 = vmatpush.msra.mxu0 %v1743
        %2124 = vmatpush.msra.mxu0 %v1727
        %2125 = vmatmul.f32.gmra.mxu0 %v1782
        %v2126 = vpop.f32.mrf.mxu0
        %v2127 = vadd.f32 %v1763, %v2126
        %2128 = vmatmul.f32.gmra.mxu0 %v1785
        %v2129 = vpop.f32.mrf.mxu0
        %v2130 = vadd.f32 %v1763, %v2129
        %2131 = vdwg.mxu0
        %2132 = vmatpush.msra.mxu0 0.0
        %2133 = vmatpush.msra.mxu0 0.0
        %2134 = vmatpush.msra.mxu0 0.0
        %2135 = vmatpush.msra.mxu0 0.0
        %2136 = vmatpush.msra.mxu0 0.0
        %2137 = vmatpush.msra.mxu0 0.0
        %2138 = vmatpush.msra.mxu0 0.0
        %2139 = vmatpush.msra.mxu0 0.0
        %2140 = vmatpush.msra.mxu0 0.0
        %2141 = vmatpush.msra.mxu0 0.0
        %2142 = vmatpush.msra.mxu0 0.0
        %2143 = vmatpush.msra.mxu0 0.0
        %2144 = vmatpush.msra.mxu0 0.0
        %2145 = vmatpush.msra.mxu0 0.0
        %2146 = vmatpush.msra.mxu0 %v1744
        %2147 = vmatpush.msra.mxu0 %v1728
        %2148 = vmatmul.f32.gmra.mxu0 %v1782
        %v2149 = vpop.f32.mrf.mxu0
        %v2150 = vadd.f32 %v1764, %v2149
        %2151 = vmatmul.f32.gmra.mxu0 %v1785
        %v2152 = vpop.f32.mrf.mxu0
        %v2153 = vadd.f32 %v1764, %v2152
        %2154 = vdwg.mxu0
        %v2155 = vmax.f32 %v1805, 0.0
        %v2156 = vmax.f32 %v1828, 0.0
        %v2157 = vmax.f32 %v1851, 0.0
        %v2158 = vmax.f32 %v1874, 0.0
        %v2159 = vmax.f32 %v1897, 0.0
        %v2160 = vmax.f32 %v1920, 0.0
        %v2161 = vmax.f32 %v1943, 0.0
        %v2162 = vmax.f32 %v1966, 0.0
        %v2163 = vmax.f32 %v1989, 0.0
        %v2164 = vmax.f32 %v2012, 0.0
        %v2165 = vmax.f32 %v2035, 0.0
        %v2166 = vmax.f32 %v2058, 0.0
        %v2167 = vmax.f32 %v2081, 0.0
        %v2168 = vmax.f32 %v2104, 0.0
        %v2169 = vmax.f32 %v2127, 0.0
        %v2170 = vmax.f32 %v2150, 0.0
        %v2171 = vmax.f32 %v1808, 0.0
        %v2172 = vmax.f32 %v1831, 0.0
        %v2173 = vmax.f32 %v1854, 0.0
        %v2174 = vmax.f32 %v1877, 0.0
        %v2175 = vmax.f32 %v1900, 0.0
        %v2176 = vmax.f32 %v1923, 0.0
        %v2177 = vmax.f32 %v1946, 0.0
        %v2178 = vmax.f32 %v1969, 0.0
        %v2179 = vmax.f32 %v1992, 0.0
        %v2180 = vmax.f32 %v2015, 0.0
        %v2181 = vmax.f32 %v2038, 0.0
        %v2182 = vmax.f32 %v2061, 0.0
        %v2183 = vmax.f32 %v2084, 0.0
        %v2184 = vmax.f32 %v2107, 0.0
        %v2185 = vmax.f32 %v2130, 0.0
        %v2186 = vmax.f32 %v2153, 0.0
        %v2187 = vld [vmem:[%s876] sm:$0xff]
        %v2188 = vld [vmem:[%s876 + $0x8] sm:$0xff]
        %v2189 = vld [vmem:[%s876 + $0x10] sm:$0xff]
        %v2190 = vld [vmem:[%s876 + $0x18] sm:$0xff]
        %v2191 = vld [vmem:[%s876 + $0x20] sm:$0xff]
        %v2192 = vld [vmem:[%s876 + $0x28] sm:$0xff]
        %v2193 = vld [vmem:[%s876 + $0x30] sm:$0xff]
        %v2194 = vld [vmem:[%s876 + $0x38] sm:$0xff]
        %v2195 = vld [vmem:[%s876 + $0x40] sm:$0xff]
        %v2196 = vld [vmem:[%s876 + $0x48] sm:$0xff]
        %v2197 = vld [vmem:[%s876 + $0x50] sm:$0xff]
        %v2198 = vld [vmem:[%s876 + $0x58] sm:$0xff]
        %v2199 = vld [vmem:[%s876 + $0x60] sm:$0xff]
        %v2200 = vld [vmem:[%s876 + $0x68] sm:$0xff]
        %v2201 = vld [vmem:[%s876 + $0x70] sm:$0xff]
        %v2202 = vld [vmem:[%s876 + $0x78] sm:$0xff]
        %v2203 = vld [vmem:[%s876 + $0x80] sm:$0xff]
        %v2204 = vld [vmem:[%s876 + $0x88] sm:$0xff]
        %v2205 = vld [vmem:[%s876 + $0x90] sm:$0xff]
        %v2206 = vld [vmem:[%s876 + $0x98] sm:$0xff]
        %v2207 = vld [vmem:[%s876 + $0xa0] sm:$0xff]
        %v2208 = vld [vmem:[%s876 + $0xa8] sm:$0xff]
        %v2209 = vld [vmem:[%s876 + $0xb0] sm:$0xff]
        %v2210 = vld [vmem:[%s876 + $0xb8] sm:$0xff]
        %v2211 = vld [vmem:[%s876 + $0xc0] sm:$0xff]
        %v2212 = vld [vmem:[%s876 + $0xc8] sm:$0xff]
        %v2213 = vld [vmem:[%s876 + $0xd0] sm:$0xff]
        %v2214 = vld [vmem:[%s876 + $0xd8] sm:$0xff]
        %v2215 = vld [vmem:[%s876 + $0xe0] sm:$0xff]
        %v2216 = vld [vmem:[%s876 + $0xe8] sm:$0xff]
        %v2217 = vld [vmem:[%s876 + $0xf0] sm:$0xff]
        %v2218 = vld [vmem:[%s876 + $0xf8] sm:$0xff]
        %v2219 = vld [vmem:[%s876 + $0x100] sm:$0xff]
        %v2220 = vld [vmem:[%s876 + $0x108] sm:$0xff]
        %v2221 = vld [vmem:[%s876 + $0x110] sm:$0xff]
        %v2222 = vld [vmem:[%s876 + $0x118] sm:$0xff]
        %v2223 = vld [vmem:[%s876 + $0x120] sm:$0xff]
        %v2224 = vld [vmem:[%s876 + $0x128] sm:$0xff]
        %v2225 = vld [vmem:[%s876 + $0x130] sm:$0xff]
        %v2226 = vld [vmem:[%s876 + $0x138] sm:$0xff]
        %v2227 = vld [vmem:[%s876 + $0x140] sm:$0xff]
        %v2228 = vld [vmem:[%s876 + $0x148] sm:$0xff]
        %v2229 = vld [vmem:[%s876 + $0x150] sm:$0xff]
        %v2230 = vld [vmem:[%s876 + $0x158] sm:$0xff]
        %v2231 = vld [vmem:[%s876 + $0x160] sm:$0xff]
        %v2232 = vld [vmem:[%s876 + $0x168] sm:$0xff]
        %v2233 = vld [vmem:[%s876 + $0x170] sm:$0xff]
        %v2234 = vld [vmem:[%s876 + $0x178] sm:$0xff]
        %v2235 = vld [vmem:[%s876 + $0x180] sm:$0xff]
        %v2236 = vld [vmem:[%s876 + $0x188] sm:$0xff]
        %v2237 = vld [vmem:[%s876 + $0x190] sm:$0xff]
        %v2238 = vld [vmem:[%s876 + $0x198] sm:$0xff]
        %v2239 = vld [vmem:[%s876 + $0x1a0] sm:$0xff]
        %v2240 = vld [vmem:[%s876 + $0x1a8] sm:$0xff]
        %v2241 = vld [vmem:[%s876 + $0x1b0] sm:$0xff]
        %v2242 = vld [vmem:[%s876 + $0x1b8] sm:$0xff]
        %v2243 = vld [vmem:[%s876 + $0x1c0] sm:$0xff]
        %v2244 = vld [vmem:[%s876 + $0x1c8] sm:$0xff]
        %v2245 = vld [vmem:[%s876 + $0x1d0] sm:$0xff]
        %v2246 = vld [vmem:[%s876 + $0x1d8] sm:$0xff]
        %v2247 = vld [vmem:[%s876 + $0x1e0] sm:$0xff]
        %v2248 = vld [vmem:[%s876 + $0x1e8] sm:$0xff]
        %v2249 = vld [vmem:[%s876 + $0x1f0] sm:$0xff]
        %v2250 = vld [vmem:[%s876 + $0x1f8] sm:$0xff]
        %v2251 = vld [vmem:[%s876 + $0x200] sm:$0xff]
        %v2252 = vld [vmem:[%s876 + $0x208] sm:$0xff]
        %v2253 = vld [vmem:[%s876 + $0x210] sm:$0xff]
        %v2254 = vld [vmem:[%s876 + $0x218] sm:$0xff]
        %v2255 = vld [vmem:[%s876 + $0x220] sm:$0xff]
        %v2256 = vld [vmem:[%s876 + $0x228] sm:$0xff]
        %v2257 = vld [vmem:[%s876 + $0x230] sm:$0xff]
        %v2258 = vld [vmem:[%s876 + $0x238] sm:$0xff]
        %v2259 = vld [vmem:[%s876 + $0x240] sm:$0xff]
        %v2260 = vld [vmem:[%s876 + $0x248] sm:$0xff]
        %v2261 = vld [vmem:[%s876 + $0x250] sm:$0xff]
        %v2262 = vld [vmem:[%s876 + $0x258] sm:$0xff]
        %v2263 = vld [vmem:[%s876 + $0x260] sm:$0xff]
        %v2264 = vld [vmem:[%s876 + $0x268] sm:$0xff]
        %v2265 = vld [vmem:[%s876 + $0x270] sm:$0xff]
        %v2266 = vld [vmem:[%s876 + $0x278] sm:$0xff]
        %v2267 = vld [vmem:[%s876 + $0x280] sm:$0xff]
        %v2268 = vld [vmem:[%s876 + $0x288] sm:$0xff]
        %v2269 = vld [vmem:[%s876 + $0x290] sm:$0xff]
        %v2270 = vld [vmem:[%s876 + $0x298] sm:$0xff]
        %v2271 = vld [vmem:[%s876 + $0x2a0] sm:$0xff]
        %v2272 = vld [vmem:[%s876 + $0x2a8] sm:$0xff]
        %v2273 = vld [vmem:[%s876 + $0x2b0] sm:$0xff]
        %v2274 = vld [vmem:[%s876 + $0x2b8] sm:$0xff]
        %v2275 = vld [vmem:[%s876 + $0x2c0] sm:$0xff]
        %v2276 = vld [vmem:[%s876 + $0x2c8] sm:$0xff]
        %v2277 = vld [vmem:[%s876 + $0x2d0] sm:$0xff]
        %v2278 = vld [vmem:[%s876 + $0x2d8] sm:$0xff]
        %v2279 = vld [vmem:[%s876 + $0x2e0] sm:$0xff]
        %v2280 = vld [vmem:[%s876 + $0x2e8] sm:$0xff]
        %v2281 = vld [vmem:[%s876 + $0x2f0] sm:$0xff]
        %v2282 = vld [vmem:[%s876 + $0x2f8] sm:$0xff]
        %v2283 = vld [vmem:[%s876 + $0x300] sm:$0xff]
        %v2284 = vld [vmem:[%s876 + $0x308] sm:$0xff]
        %v2285 = vld [vmem:[%s876 + $0x310] sm:$0xff]
        %v2286 = vld [vmem:[%s876 + $0x318] sm:$0xff]
        %v2287 = vld [vmem:[%s876 + $0x320] sm:$0xff]
        %v2288 = vld [vmem:[%s876 + $0x328] sm:$0xff]
        %v2289 = vld [vmem:[%s876 + $0x330] sm:$0xff]
        %v2290 = vld [vmem:[%s876 + $0x338] sm:$0xff]
        %v2291 = vld [vmem:[%s876 + $0x340] sm:$0xff]
        %v2292 = vld [vmem:[%s876 + $0x348] sm:$0xff]
        %v2293 = vld [vmem:[%s876 + $0x350] sm:$0xff]
        %v2294 = vld [vmem:[%s876 + $0x358] sm:$0xff]
        %v2295 = vld [vmem:[%s876 + $0x360] sm:$0xff]
        %v2296 = vld [vmem:[%s876 + $0x368] sm:$0xff]
        %v2297 = vld [vmem:[%s876 + $0x370] sm:$0xff]
        %v2298 = vld [vmem:[%s876 + $0x378] sm:$0xff]
        %v2299 = vld [vmem:[%s876 + $0x380] sm:$0xff]
        %v2300 = vld [vmem:[%s876 + $0x388] sm:$0xff]
        %v2301 = vld [vmem:[%s876 + $0x390] sm:$0xff]
        %v2302 = vld [vmem:[%s876 + $0x398] sm:$0xff]
        %v2303 = vld [vmem:[%s876 + $0x3a0] sm:$0xff]
        %v2304 = vld [vmem:[%s876 + $0x3a8] sm:$0xff]
        %v2305 = vld [vmem:[%s876 + $0x3b0] sm:$0xff]
        %v2306 = vld [vmem:[%s876 + $0x3b8] sm:$0xff]
        %v2307 = vld [vmem:[%s876 + $0x3c0] sm:$0xff]
        %v2308 = vld [vmem:[%s876 + $0x3c8] sm:$0xff]
        %v2309 = vld [vmem:[%s876 + $0x3d0] sm:$0xff]
        %v2310 = vld [vmem:[%s876 + $0x3d8] sm:$0xff]
        %v2311 = vld [vmem:[%s876 + $0x3e0] sm:$0xff]
        %v2312 = vld [vmem:[%s876 + $0x3e8] sm:$0xff]
        %v2313 = vld [vmem:[%s876 + $0x3f0] sm:$0xff]
        %v2314 = vld [vmem:[%s876 + $0x3f8] sm:$0xff]
        %v2315 = vld [vmem:[%s876 + $0x400] sm:$0xff]
        %v2316 = vld [vmem:[%s876 + $0x408] sm:$0xff]
        %v2317 = vld [vmem:[%s876 + $0x410] sm:$0xff]
        %v2318 = vld [vmem:[%s876 + $0x418] sm:$0xff]
        %v2319 = vld [vmem:[%s876 + $0x420] sm:$0xff]
        %v2320 = vld [vmem:[%s876 + $0x428] sm:$0xff]
        %v2321 = vld [vmem:[%s876 + $0x430] sm:$0xff]
        %v2322 = vld [vmem:[%s876 + $0x438] sm:$0xff]
        %v2323 = vld [vmem:[%s876 + $0x440] sm:$0xff]
        %v2324 = vld [vmem:[%s876 + $0x448] sm:$0xff]
        %v2325 = vld [vmem:[%s876 + $0x450] sm:$0xff]
        %v2326 = vld [vmem:[%s876 + $0x458] sm:$0xff]
        %v2327 = vld [vmem:[%s876 + $0x460] sm:$0xff]
        %v2328 = vld [vmem:[%s876 + $0x468] sm:$0xff]
        %v2329 = vld [vmem:[%s876 + $0x470] sm:$0xff]
        %v2330 = vld [vmem:[%s876 + $0x478] sm:$0xff]
        %v2331 = vld [vmem:[%s876 + $0x480] sm:$0xff]
        %v2332 = vld [vmem:[%s876 + $0x488] sm:$0xff]
        %v2333 = vld [vmem:[%s876 + $0x490] sm:$0xff]
        %v2334 = vld [vmem:[%s876 + $0x498] sm:$0xff]
        %v2335 = vld [vmem:[%s876 + $0x4a0] sm:$0xff]
        %v2336 = vld [vmem:[%s876 + $0x4a8] sm:$0xff]
        %v2337 = vld [vmem:[%s876 + $0x4b0] sm:$0xff]
        %v2338 = vld [vmem:[%s876 + $0x4b8] sm:$0xff]
        %v2339 = vld [vmem:[%s876 + $0x4c0] sm:$0xff]
        %v2340 = vld [vmem:[%s876 + $0x4c8] sm:$0xff]
        %v2341 = vld [vmem:[%s876 + $0x4d0] sm:$0xff]
        %v2342 = vld [vmem:[%s876 + $0x4d8] sm:$0xff]
        %v2343 = vld [vmem:[%s876 + $0x4e0] sm:$0xff]
        %v2344 = vld [vmem:[%s876 + $0x4e8] sm:$0xff]
        %v2345 = vld [vmem:[%s876 + $0x4f0] sm:$0xff]
        %v2346 = vld [vmem:[%s876 + $0x4f8] sm:$0xff]
        %v2347 = vld [vmem:[%s876 + $0x500] sm:$0xff]
        %v2348 = vld [vmem:[%s876 + $0x508] sm:$0xff]
        %v2349 = vld [vmem:[%s876 + $0x510] sm:$0xff]
        %v2350 = vld [vmem:[%s876 + $0x518] sm:$0xff]
        %v2351 = vld [vmem:[%s876 + $0x520] sm:$0xff]
        %v2352 = vld [vmem:[%s876 + $0x528] sm:$0xff]
        %v2353 = vld [vmem:[%s876 + $0x530] sm:$0xff]
        %v2354 = vld [vmem:[%s876 + $0x538] sm:$0xff]
        %v2355 = vld [vmem:[%s876 + $0x540] sm:$0xff]
        %v2356 = vld [vmem:[%s876 + $0x548] sm:$0xff]
        %v2357 = vld [vmem:[%s876 + $0x550] sm:$0xff]
        %v2358 = vld [vmem:[%s876 + $0x558] sm:$0xff]
        %v2359 = vld [vmem:[%s876 + $0x560] sm:$0xff]
        %v2360 = vld [vmem:[%s876 + $0x568] sm:$0xff]
        %v2361 = vld [vmem:[%s876 + $0x570] sm:$0xff]
        %v2362 = vld [vmem:[%s876 + $0x578] sm:$0xff]
        %v2363 = vld [vmem:[%s876 + $0x580] sm:$0xff]
        %v2364 = vld [vmem:[%s876 + $0x588] sm:$0xff]
        %v2365 = vld [vmem:[%s876 + $0x590] sm:$0xff]
        %v2366 = vld [vmem:[%s876 + $0x598] sm:$0xff]
        %v2367 = vld [vmem:[%s876 + $0x5a0] sm:$0xff]
        %v2368 = vld [vmem:[%s876 + $0x5a8] sm:$0xff]
        %v2369 = vld [vmem:[%s876 + $0x5b0] sm:$0xff]
        %v2370 = vld [vmem:[%s876 + $0x5b8] sm:$0xff]
        %v2371 = vld [vmem:[%s876 + $0x5c0] sm:$0xff]
        %v2372 = vld [vmem:[%s876 + $0x5c8] sm:$0xff]
        %v2373 = vld [vmem:[%s876 + $0x5d0] sm:$0xff]
        %v2374 = vld [vmem:[%s876 + $0x5d8] sm:$0xff]
        %v2375 = vld [vmem:[%s876 + $0x5e0] sm:$0xff]
        %v2376 = vld [vmem:[%s876 + $0x5e8] sm:$0xff]
        %v2377 = vld [vmem:[%s876 + $0x5f0] sm:$0xff]
        %v2378 = vld [vmem:[%s876 + $0x5f8] sm:$0xff]
        %v2379 = vld [vmem:[%s876 + $0x600] sm:$0xff]
        %v2380 = vld [vmem:[%s876 + $0x608] sm:$0xff]
        %v2381 = vld [vmem:[%s876 + $0x610] sm:$0xff]
        %v2382 = vld [vmem:[%s876 + $0x618] sm:$0xff]
        %v2383 = vld [vmem:[%s876 + $0x620] sm:$0xff]
        %v2384 = vld [vmem:[%s876 + $0x628] sm:$0xff]
        %v2385 = vld [vmem:[%s876 + $0x630] sm:$0xff]
        %v2386 = vld [vmem:[%s876 + $0x638] sm:$0xff]
        %v2387 = vld [vmem:[%s876 + $0x640] sm:$0xff]
        %v2388 = vld [vmem:[%s876 + $0x648] sm:$0xff]
        %v2389 = vld [vmem:[%s876 + $0x650] sm:$0xff]
        %v2390 = vld [vmem:[%s876 + $0x658] sm:$0xff]
        %v2391 = vld [vmem:[%s876 + $0x660] sm:$0xff]
        %v2392 = vld [vmem:[%s876 + $0x668] sm:$0xff]
        %v2393 = vld [vmem:[%s876 + $0x670] sm:$0xff]
        %v2394 = vld [vmem:[%s876 + $0x678] sm:$0xff]
        %v2395 = vld [vmem:[%s876 + $0x680] sm:$0xff]
        %v2396 = vld [vmem:[%s876 + $0x688] sm:$0xff]
        %v2397 = vld [vmem:[%s876 + $0x690] sm:$0xff]
        %v2398 = vld [vmem:[%s876 + $0x698] sm:$0xff]
        %v2399 = vld [vmem:[%s876 + $0x6a0] sm:$0xff]
        %v2400 = vld [vmem:[%s876 + $0x6a8] sm:$0xff]
        %v2401 = vld [vmem:[%s876 + $0x6b0] sm:$0xff]
        %v2402 = vld [vmem:[%s876 + $0x6b8] sm:$0xff]
        %v2403 = vld [vmem:[%s876 + $0x6c0] sm:$0xff]
        %v2404 = vld [vmem:[%s876 + $0x6c8] sm:$0xff]
        %v2405 = vld [vmem:[%s876 + $0x6d0] sm:$0xff]
        %v2406 = vld [vmem:[%s876 + $0x6d8] sm:$0xff]
        %v2407 = vld [vmem:[%s876 + $0x6e0] sm:$0xff]
        %v2408 = vld [vmem:[%s876 + $0x6e8] sm:$0xff]
        %v2409 = vld [vmem:[%s876 + $0x6f0] sm:$0xff]
        %v2410 = vld [vmem:[%s876 + $0x6f8] sm:$0xff]
        %v2411 = vld [vmem:[%s876 + $0x700] sm:$0xff]
        %v2412 = vld [vmem:[%s876 + $0x708] sm:$0xff]
        %v2413 = vld [vmem:[%s876 + $0x710] sm:$0xff]
        %v2414 = vld [vmem:[%s876 + $0x718] sm:$0xff]
        %v2415 = vld [vmem:[%s876 + $0x720] sm:$0xff]
        %v2416 = vld [vmem:[%s876 + $0x728] sm:$0xff]
        %v2417 = vld [vmem:[%s876 + $0x730] sm:$0xff]
        %v2418 = vld [vmem:[%s876 + $0x738] sm:$0xff]
        %v2419 = vld [vmem:[%s876 + $0x740] sm:$0xff]
        %v2420 = vld [vmem:[%s876 + $0x748] sm:$0xff]
        %v2421 = vld [vmem:[%s876 + $0x750] sm:$0xff]
        %v2422 = vld [vmem:[%s876 + $0x758] sm:$0xff]
        %v2423 = vld [vmem:[%s876 + $0x760] sm:$0xff]
        %v2424 = vld [vmem:[%s876 + $0x768] sm:$0xff]
        %v2425 = vld [vmem:[%s876 + $0x770] sm:$0xff]
        %v2426 = vld [vmem:[%s876 + $0x778] sm:$0xff]
        %v2427 = vld [vmem:[%s876 + $0x780] sm:$0xff]
        %v2428 = vld [vmem:[%s876 + $0x788] sm:$0xff]
        %v2429 = vld [vmem:[%s876 + $0x790] sm:$0xff]
        %v2430 = vld [vmem:[%s876 + $0x798] sm:$0xff]
        %v2431 = vld [vmem:[%s876 + $0x7a0] sm:$0xff]
        %v2432 = vld [vmem:[%s876 + $0x7a8] sm:$0xff]
        %v2433 = vld [vmem:[%s876 + $0x7b0] sm:$0xff]
        %v2434 = vld [vmem:[%s876 + $0x7b8] sm:$0xff]
        %v2435 = vld [vmem:[%s876 + $0x7c0] sm:$0xff]
        %v2436 = vld [vmem:[%s876 + $0x7c8] sm:$0xff]
        %v2437 = vld [vmem:[%s876 + $0x7d0] sm:$0xff]
        %v2438 = vld [vmem:[%s876 + $0x7d8] sm:$0xff]
        %v2439 = vld [vmem:[%s876 + $0x7e0] sm:$0xff]
        %v2440 = vld [vmem:[%s876 + $0x7e8] sm:$0xff]
        %v2441 = vld [vmem:[%s876 + $0x7f0] sm:$0xff]
        %v2442 = vld [vmem:[%s876 + $0x7f8] sm:$0xff]
        %v2443 = vld [vmem:[%s879] sm:$0x1]
        %v2445 = vperm.slane %v2443, 0
        %2447 = vmatpush.msra.mxu0 %v2202
        %2448 = vmatpush.msra.mxu0 %v2201
        %2449 = vmatpush.msra.mxu0 %v2200
        %2450 = vmatpush.msra.mxu0 %v2199
        %2451 = vmatpush.msra.mxu0 %v2198
        %2452 = vmatpush.msra.mxu0 %v2197
        %2453 = vmatpush.msra.mxu0 %v2196
        %2454 = vmatpush.msra.mxu0 %v2195
        %2455 = vmatpush.msra.mxu0 %v2194
        %2456 = vmatpush.msra.mxu0 %v2193
        %2457 = vmatpush.msra.mxu0 %v2192
        %2458 = vmatpush.msra.mxu0 %v2191
        %2459 = vmatpush.msra.mxu0 %v2190
        %2460 = vmatpush.msra.mxu0 %v2189
        %2461 = vmatpush.msra.mxu0 %v2188
        %2462 = vmatpush.msra.mxu0 %v2187
        %2463 = vmatmul.f32.gmra.mxu0 %v2155
        %v2464 = vpop.f32.mrf.mxu0
        %v2465 = vadd.f32 %v2445, %v2464
        %2466 = vmatmul.f32.gmra.mxu0 %v2171
        %v2467 = vpop.f32.mrf.mxu0
        %v2468 = vadd.f32 %v2445, %v2467
        %2469 = vdwg.mxu0
        %2470 = vmatpush.msra.mxu0 %v2218
        %2471 = vmatpush.msra.mxu0 %v2217
        %2472 = vmatpush.msra.mxu0 %v2216
        %2473 = vmatpush.msra.mxu0 %v2215
        %2474 = vmatpush.msra.mxu0 %v2214
        %2475 = vmatpush.msra.mxu0 %v2213
        %2476 = vmatpush.msra.mxu0 %v2212
        %2477 = vmatpush.msra.mxu0 %v2211
        %2478 = vmatpush.msra.mxu0 %v2210
        %2479 = vmatpush.msra.mxu0 %v2209
        %2480 = vmatpush.msra.mxu0 %v2208
        %2481 = vmatpush.msra.mxu0 %v2207
        %2482 = vmatpush.msra.mxu0 %v2206
        %2483 = vmatpush.msra.mxu0 %v2205
        %2484 = vmatpush.msra.mxu0 %v2204
        %2485 = vmatpush.msra.mxu0 %v2203
        %2486 = vmatmul.f32.gmra.mxu0 %v2156
        %v2487 = vpop.f32.mrf.mxu0
        %v2488 = vadd.f32 %v2465, %v2487
        %2489 = vmatmul.f32.gmra.mxu0 %v2172
        %v2490 = vpop.f32.mrf.mxu0
        %v2491 = vadd.f32 %v2468, %v2490
        %2492 = vdwg.mxu0
        %2493 = vmatpush.msra.mxu0 %v2234
        %2494 = vmatpush.msra.mxu0 %v2233
        %2495 = vmatpush.msra.mxu0 %v2232
        %2496 = vmatpush.msra.mxu0 %v2231
        %2497 = vmatpush.msra.mxu0 %v2230
        %2498 = vmatpush.msra.mxu0 %v2229
        %2499 = vmatpush.msra.mxu0 %v2228
        %2500 = vmatpush.msra.mxu0 %v2227
        %2501 = vmatpush.msra.mxu0 %v2226
        %2502 = vmatpush.msra.mxu0 %v2225
        %2503 = vmatpush.msra.mxu0 %v2224
        %2504 = vmatpush.msra.mxu0 %v2223
        %2505 = vmatpush.msra.mxu0 %v2222
        %2506 = vmatpush.msra.mxu0 %v2221
        %2507 = vmatpush.msra.mxu0 %v2220
        %2508 = vmatpush.msra.mxu0 %v2219
        %2509 = vmatmul.f32.gmra.mxu0 %v2157
        %v2510 = vpop.f32.mrf.mxu0
        %v2511 = vadd.f32 %v2488, %v2510
        %2512 = vmatmul.f32.gmra.mxu0 %v2173
        %v2513 = vpop.f32.mrf.mxu0
        %v2514 = vadd.f32 %v2491, %v2513
        %2515 = vdwg.mxu0
        %2516 = vmatpush.msra.mxu0 %v2250
        %2517 = vmatpush.msra.mxu0 %v2249
        %2518 = vmatpush.msra.mxu0 %v2248
        %2519 = vmatpush.msra.mxu0 %v2247
        %2520 = vmatpush.msra.mxu0 %v2246
        %2521 = vmatpush.msra.mxu0 %v2245
        %2522 = vmatpush.msra.mxu0 %v2244
        %2523 = vmatpush.msra.mxu0 %v2243
        %2524 = vmatpush.msra.mxu0 %v2242
        %2525 = vmatpush.msra.mxu0 %v2241
        %2526 = vmatpush.msra.mxu0 %v2240
        %2527 = vmatpush.msra.mxu0 %v2239
        %2528 = vmatpush.msra.mxu0 %v2238
        %2529 = vmatpush.msra.mxu0 %v2237
        %2530 = vmatpush.msra.mxu0 %v2236
        %2531 = vmatpush.msra.mxu0 %v2235
        %2532 = vmatmul.f32.gmra.mxu0 %v2158
        %v2533 = vpop.f32.mrf.mxu0
        %v2534 = vadd.f32 %v2511, %v2533
        %2535 = vmatmul.f32.gmra.mxu0 %v2174
        %v2536 = vpop.f32.mrf.mxu0
        %v2537 = vadd.f32 %v2514, %v2536
        %2538 = vdwg.mxu0
        %2539 = vmatpush.msra.mxu0 %v2266
        %2540 = vmatpush.msra.mxu0 %v2265
        %2541 = vmatpush.msra.mxu0 %v2264
        %2542 = vmatpush.msra.mxu0 %v2263
        %2543 = vmatpush.msra.mxu0 %v2262
        %2544 = vmatpush.msra.mxu0 %v2261
        %2545 = vmatpush.msra.mxu0 %v2260
        %2546 = vmatpush.msra.mxu0 %v2259
        %2547 = vmatpush.msra.mxu0 %v2258
        %2548 = vmatpush.msra.mxu0 %v2257
        %2549 = vmatpush.msra.mxu0 %v2256
        %2550 = vmatpush.msra.mxu0 %v2255
        %2551 = vmatpush.msra.mxu0 %v2254
        %2552 = vmatpush.msra.mxu0 %v2253
        %2553 = vmatpush.msra.mxu0 %v2252
        %2554 = vmatpush.msra.mxu0 %v2251
        %2555 = vmatmul.f32.gmra.mxu0 %v2159
        %v2556 = vpop.f32.mrf.mxu0
        %v2557 = vadd.f32 %v2534, %v2556
        %2558 = vmatmul.f32.gmra.mxu0 %v2175
        %v2559 = vpop.f32.mrf.mxu0
        %v2560 = vadd.f32 %v2537, %v2559
        %2561 = vdwg.mxu0
        %2562 = vmatpush.msra.mxu0 %v2282
        %2563 = vmatpush.msra.mxu0 %v2281
        %2564 = vmatpush.msra.mxu0 %v2280
        %2565 = vmatpush.msra.mxu0 %v2279
        %2566 = vmatpush.msra.mxu0 %v2278
        %2567 = vmatpush.msra.mxu0 %v2277
        %2568 = vmatpush.msra.mxu0 %v2276
        %2569 = vmatpush.msra.mxu0 %v2275
        %2570 = vmatpush.msra.mxu0 %v2274
        %2571 = vmatpush.msra.mxu0 %v2273
        %2572 = vmatpush.msra.mxu0 %v2272
        %2573 = vmatpush.msra.mxu0 %v2271
        %2574 = vmatpush.msra.mxu0 %v2270
        %2575 = vmatpush.msra.mxu0 %v2269
        %2576 = vmatpush.msra.mxu0 %v2268
        %2577 = vmatpush.msra.mxu0 %v2267
        %2578 = vmatmul.f32.gmra.mxu0 %v2160
        %v2579 = vpop.f32.mrf.mxu0
        %v2580 = vadd.f32 %v2557, %v2579
        %2581 = vmatmul.f32.gmra.mxu0 %v2176
        %v2582 = vpop.f32.mrf.mxu0
        %v2583 = vadd.f32 %v2560, %v2582
        %2584 = vdwg.mxu0
        %2585 = vmatpush.msra.mxu0 %v2298
        %2586 = vmatpush.msra.mxu0 %v2297
        %2587 = vmatpush.msra.mxu0 %v2296
        %2588 = vmatpush.msra.mxu0 %v2295
        %2589 = vmatpush.msra.mxu0 %v2294
        %2590 = vmatpush.msra.mxu0 %v2293
        %2591 = vmatpush.msra.mxu0 %v2292
        %2592 = vmatpush.msra.mxu0 %v2291
        %2593 = vmatpush.msra.mxu0 %v2290
        %2594 = vmatpush.msra.mxu0 %v2289
        %2595 = vmatpush.msra.mxu0 %v2288
        %2596 = vmatpush.msra.mxu0 %v2287
        %2597 = vmatpush.msra.mxu0 %v2286
        %2598 = vmatpush.msra.mxu0 %v2285
        %2599 = vmatpush.msra.mxu0 %v2284
        %2600 = vmatpush.msra.mxu0 %v2283
        %2601 = vmatmul.f32.gmra.mxu0 %v2161
        %v2602 = vpop.f32.mrf.mxu0
        %v2603 = vadd.f32 %v2580, %v2602
        %2604 = vmatmul.f32.gmra.mxu0 %v2177
        %v2605 = vpop.f32.mrf.mxu0
        %v2606 = vadd.f32 %v2583, %v2605
        %2607 = vdwg.mxu0
        %2608 = vmatpush.msra.mxu0 %v2314
        %2609 = vmatpush.msra.mxu0 %v2313
        %2610 = vmatpush.msra.mxu0 %v2312
        %2611 = vmatpush.msra.mxu0 %v2311
        %2612 = vmatpush.msra.mxu0 %v2310
        %2613 = vmatpush.msra.mxu0 %v2309
        %2614 = vmatpush.msra.mxu0 %v2308
        %2615 = vmatpush.msra.mxu0 %v2307
        %2616 = vmatpush.msra.mxu0 %v2306
        %2617 = vmatpush.msra.mxu0 %v2305
        %2618 = vmatpush.msra.mxu0 %v2304
        %2619 = vmatpush.msra.mxu0 %v2303
        %2620 = vmatpush.msra.mxu0 %v2302
        %2621 = vmatpush.msra.mxu0 %v2301
        %2622 = vmatpush.msra.mxu0 %v2300
        %2623 = vmatpush.msra.mxu0 %v2299
        %2624 = vmatmul.f32.gmra.mxu0 %v2162
        %v2625 = vpop.f32.mrf.mxu0
        %v2626 = vadd.f32 %v2603, %v2625
        %2627 = vmatmul.f32.gmra.mxu0 %v2178
        %v2628 = vpop.f32.mrf.mxu0
        %v2629 = vadd.f32 %v2606, %v2628
        %2630 = vdwg.mxu0
        %2631 = vmatpush.msra.mxu0 %v2330
        %2632 = vmatpush.msra.mxu0 %v2329
        %2633 = vmatpush.msra.mxu0 %v2328
        %2634 = vmatpush.msra.mxu0 %v2327
        %2635 = vmatpush.msra.mxu0 %v2326
        %2636 = vmatpush.msra.mxu0 %v2325
        %2637 = vmatpush.msra.mxu0 %v2324
        %2638 = vmatpush.msra.mxu0 %v2323
        %2639 = vmatpush.msra.mxu0 %v2322
        %2640 = vmatpush.msra.mxu0 %v2321
        %2641 = vmatpush.msra.mxu0 %v2320
        %2642 = vmatpush.msra.mxu0 %v2319
        %2643 = vmatpush.msra.mxu0 %v2318
        %2644 = vmatpush.msra.mxu0 %v2317
        %2645 = vmatpush.msra.mxu0 %v2316
        %2646 = vmatpush.msra.mxu0 %v2315
        %2647 = vmatmul.f32.gmra.mxu0 %v2163
        %v2648 = vpop.f32.mrf.mxu0
        %v2649 = vadd.f32 %v2626, %v2648
        %2650 = vmatmul.f32.gmra.mxu0 %v2179
        %v2651 = vpop.f32.mrf.mxu0
        %v2652 = vadd.f32 %v2629, %v2651
        %2653 = vdwg.mxu0
        %2654 = vmatpush.msra.mxu0 %v2346
        %2655 = vmatpush.msra.mxu0 %v2345
        %2656 = vmatpush.msra.mxu0 %v2344
        %2657 = vmatpush.msra.mxu0 %v2343
        %2658 = vmatpush.msra.mxu0 %v2342
        %2659 = vmatpush.msra.mxu0 %v2341
        %2660 = vmatpush.msra.mxu0 %v2340
        %2661 = vmatpush.msra.mxu0 %v2339
        %2662 = vmatpush.msra.mxu0 %v2338
        %2663 = vmatpush.msra.mxu0 %v2337
        %2664 = vmatpush.msra.mxu0 %v2336
        %2665 = vmatpush.msra.mxu0 %v2335
        %2666 = vmatpush.msra.mxu0 %v2334
        %2667 = vmatpush.msra.mxu0 %v2333
        %2668 = vmatpush.msra.mxu0 %v2332
        %2669 = vmatpush.msra.mxu0 %v2331
        %2670 = vmatmul.f32.gmra.mxu0 %v2164
        %v2671 = vpop.f32.mrf.mxu0
        %v2672 = vadd.f32 %v2649, %v2671
        %2673 = vmatmul.f32.gmra.mxu0 %v2180
        %v2674 = vpop.f32.mrf.mxu0
        %v2675 = vadd.f32 %v2652, %v2674
        %2676 = vdwg.mxu0
        %2677 = vmatpush.msra.mxu0 %v2362
        %2678 = vmatpush.msra.mxu0 %v2361
        %2679 = vmatpush.msra.mxu0 %v2360
        %2680 = vmatpush.msra.mxu0 %v2359
        %2681 = vmatpush.msra.mxu0 %v2358
        %2682 = vmatpush.msra.mxu0 %v2357
        %2683 = vmatpush.msra.mxu0 %v2356
        %2684 = vmatpush.msra.mxu0 %v2355
        %2685 = vmatpush.msra.mxu0 %v2354
        %2686 = vmatpush.msra.mxu0 %v2353
        %2687 = vmatpush.msra.mxu0 %v2352
        %2688 = vmatpush.msra.mxu0 %v2351
        %2689 = vmatpush.msra.mxu0 %v2350
        %2690 = vmatpush.msra.mxu0 %v2349
        %2691 = vmatpush.msra.mxu0 %v2348
        %2692 = vmatpush.msra.mxu0 %v2347
        %2693 = vmatmul.f32.gmra.mxu0 %v2165
        %v2694 = vpop.f32.mrf.mxu0
        %v2695 = vadd.f32 %v2672, %v2694
        %2696 = vmatmul.f32.gmra.mxu0 %v2181
        %v2697 = vpop.f32.mrf.mxu0
        %v2698 = vadd.f32 %v2675, %v2697
        %2699 = vdwg.mxu0
        %2700 = vmatpush.msra.mxu0 %v2378
        %2701 = vmatpush.msra.mxu0 %v2377
        %2702 = vmatpush.msra.mxu0 %v2376
        %2703 = vmatpush.msra.mxu0 %v2375
        %2704 = vmatpush.msra.mxu0 %v2374
        %2705 = vmatpush.msra.mxu0 %v2373
        %2706 = vmatpush.msra.mxu0 %v2372
        %2707 = vmatpush.msra.mxu0 %v2371
        %2708 = vmatpush.msra.mxu0 %v2370
        %2709 = vmatpush.msra.mxu0 %v2369
        %2710 = vmatpush.msra.mxu0 %v2368
        %2711 = vmatpush.msra.mxu0 %v2367
        %2712 = vmatpush.msra.mxu0 %v2366
        %2713 = vmatpush.msra.mxu0 %v2365
        %2714 = vmatpush.msra.mxu0 %v2364
        %2715 = vmatpush.msra.mxu0 %v2363
        %2716 = vmatmul.f32.gmra.mxu0 %v2166
        %v2717 = vpop.f32.mrf.mxu0
        %v2718 = vadd.f32 %v2695, %v2717
        %2719 = vmatmul.f32.gmra.mxu0 %v2182
        %v2720 = vpop.f32.mrf.mxu0
        %v2721 = vadd.f32 %v2698, %v2720
        %2722 = vdwg.mxu0
        %2723 = vmatpush.msra.mxu0 %v2394
        %2724 = vmatpush.msra.mxu0 %v2393
        %2725 = vmatpush.msra.mxu0 %v2392
        %2726 = vmatpush.msra.mxu0 %v2391
        %2727 = vmatpush.msra.mxu0 %v2390
        %2728 = vmatpush.msra.mxu0 %v2389
        %2729 = vmatpush.msra.mxu0 %v2388
        %2730 = vmatpush.msra.mxu0 %v2387
        %2731 = vmatpush.msra.mxu0 %v2386
        %2732 = vmatpush.msra.mxu0 %v2385
        %2733 = vmatpush.msra.mxu0 %v2384
        %2734 = vmatpush.msra.mxu0 %v2383
        %2735 = vmatpush.msra.mxu0 %v2382
        %2736 = vmatpush.msra.mxu0 %v2381
        %2737 = vmatpush.msra.mxu0 %v2380
        %2738 = vmatpush.msra.mxu0 %v2379
        %2739 = vmatmul.f32.gmra.mxu0 %v2167
        %v2740 = vpop.f32.mrf.mxu0
        %v2741 = vadd.f32 %v2718, %v2740
        %2742 = vmatmul.f32.gmra.mxu0 %v2183
        %v2743 = vpop.f32.mrf.mxu0
        %v2744 = vadd.f32 %v2721, %v2743
        %2745 = vdwg.mxu0
        %2746 = vmatpush.msra.mxu0 %v2410
        %2747 = vmatpush.msra.mxu0 %v2409
        %2748 = vmatpush.msra.mxu0 %v2408
        %2749 = vmatpush.msra.mxu0 %v2407
        %2750 = vmatpush.msra.mxu0 %v2406
        %2751 = vmatpush.msra.mxu0 %v2405
        %2752 = vmatpush.msra.mxu0 %v2404
        %2753 = vmatpush.msra.mxu0 %v2403
        %2754 = vmatpush.msra.mxu0 %v2402
        %2755 = vmatpush.msra.mxu0 %v2401
        %2756 = vmatpush.msra.mxu0 %v2400
        %2757 = vmatpush.msra.mxu0 %v2399
        %2758 = vmatpush.msra.mxu0 %v2398
        %2759 = vmatpush.msra.mxu0 %v2397
        %2760 = vmatpush.msra.mxu0 %v2396
        %2761 = vmatpush.msra.mxu0 %v2395
        %2762 = vmatmul.f32.gmra.mxu0 %v2168
        %v2763 = vpop.f32.mrf.mxu0
        %v2764 = vadd.f32 %v2741, %v2763
        %2765 = vmatmul.f32.gmra.mxu0 %v2184
        %v2766 = vpop.f32.mrf.mxu0
        %v2767 = vadd.f32 %v2744, %v2766
        %2768 = vdwg.mxu0
        %2769 = vmatpush.msra.mxu0 %v2426
        %2770 = vmatpush.msra.mxu0 %v2425
        %2771 = vmatpush.msra.mxu0 %v2424
        %2772 = vmatpush.msra.mxu0 %v2423
        %2773 = vmatpush.msra.mxu0 %v2422
        %2774 = vmatpush.msra.mxu0 %v2421
        %2775 = vmatpush.msra.mxu0 %v2420
        %2776 = vmatpush.msra.mxu0 %v2419
        %2777 = vmatpush.msra.mxu0 %v2418
        %2778 = vmatpush.msra.mxu0 %v2417
        %2779 = vmatpush.msra.mxu0 %v2416
        %2780 = vmatpush.msra.mxu0 %v2415
        %2781 = vmatpush.msra.mxu0 %v2414
        %2782 = vmatpush.msra.mxu0 %v2413
        %2783 = vmatpush.msra.mxu0 %v2412
        %2784 = vmatpush.msra.mxu0 %v2411
        %2785 = vmatmul.f32.gmra.mxu0 %v2169
        %v2786 = vpop.f32.mrf.mxu0
        %v2787 = vadd.f32 %v2764, %v2786
        %2788 = vmatmul.f32.gmra.mxu0 %v2185
        %v2789 = vpop.f32.mrf.mxu0
        %v2790 = vadd.f32 %v2767, %v2789
        %2791 = vdwg.mxu0
        %2792 = vmatpush.msra.mxu0 %v2442
        %2793 = vmatpush.msra.mxu0 %v2441
        %2794 = vmatpush.msra.mxu0 %v2440
        %2795 = vmatpush.msra.mxu0 %v2439
        %2796 = vmatpush.msra.mxu0 %v2438
        %2797 = vmatpush.msra.mxu0 %v2437
        %2798 = vmatpush.msra.mxu0 %v2436
        %2799 = vmatpush.msra.mxu0 %v2435
        %2800 = vmatpush.msra.mxu0 %v2434
        %2801 = vmatpush.msra.mxu0 %v2433
        %2802 = vmatpush.msra.mxu0 %v2432
        %2803 = vmatpush.msra.mxu0 %v2431
        %2804 = vmatpush.msra.mxu0 %v2430
        %2805 = vmatpush.msra.mxu0 %v2429
        %2806 = vmatpush.msra.mxu0 %v2428
        %2807 = vmatpush.msra.mxu0 %v2427
        %2808 = vmatmul.f32.gmra.mxu0 %v2170
        %v2809 = vpop.f32.mrf.mxu0
        %v2810 = vadd.f32 %v2787, %v2809
        %2811 = vmatmul.f32.gmra.mxu0 %v2186
        %v2812 = vpop.f32.mrf.mxu0
        %v2813 = vadd.f32 %v2790, %v2812
        %2814 = vdwg.mxu0
        %v2815 = vadd.f32 %v1711, %v2810
        %v2816 = vadd.f32 %v1712, %v2813
        %v2817 = vsel %vm905, %v2815, 0.0
        %2818 = vadd.xlane.f32.xlu0 %v2817
        %v2819 = vpop.xlane.xlu0 %2818
        %v2820 = vsel %vm905, %v2816, 0.0
        %2821 = vadd.xlane.f32.xlu0 %v2820
        %v2822 = vpop.xlane.xlu0 %2821
        %v2823 = vmul.f32 %v2819, %v1662
        %v2824 = vmul.f32 %v2822, %v1662
        %v2825 = vsub.f32 %v2815, %v2823
        %v2826 = vsub.f32 %v2816, %v2824
        %v2827 = vmul.f32 %v2825, %v2825
        %v2828 = vmul.f32 %v2826, %v2826
        %v2829 = vsel %vm905, %v2827, 0.0
        %2830 = vadd.xlane.f32.xlu0 %v2829
        %v2831 = vpop.xlane.xlu0 %2830
        %v2832 = vsel %vm905, %v2828, 0.0
        %2833 = vadd.xlane.f32.xlu0 %v2832
        %v2834 = vpop.xlane.xlu0 %2833
        %v2835 = vmul.f32 %v2831, %v1662
        %v2836 = vmul.f32 %v2834, %v1662
        %v2837 = vadd.f32 %v2835, 1e-05
        %v2838 = vadd.f32 %v2836, 1e-05
        %v2839 = vrsqrt.pop %v2837
        %v2840 = vmul.f32 %v2839, %v2837
        %v2841 = vmul.f32 %v2840, %v2839
        %v2842 = vmul.f32 0.5, %v2841
        %v2843 = vsub.f32 1.5, %v2842
        %v2844 = vmul.f32 %v2839, %v2843
        %vm2845 = vweird.f32 %v2837
        %vm2846 = vweird.f32 %v2839
        %vm2847 = vmor %vm2845, %vm2846
        %v2848 = vsel %vm2847, %v2839, %v2844
        %v2849 = vrsqrt.pop %v2838
        %v2850 = vmul.f32 %v2849, %v2838
        %v2851 = vmul.f32 %v2850, %v2849
        %v2852 = vmul.f32 0.5, %v2851
        %v2853 = vsub.f32 1.5, %v2852
        %v2854 = vmul.f32 %v2849, %v2853
        %vm2855 = vweird.f32 %v2838
        %vm2856 = vweird.f32 %v2849
        %vm2857 = vmor %vm2855, %vm2856
        %v2858 = vsel %vm2857, %v2849, %v2854
        %v2859 = vmul.f32 %v2825, %v2848
        %v2860 = vmul.f32 %v2826, %v2858
        %v2861 = vld [vmem:[%s882] sm:$0x1]
        %v2863 = vperm.slane %v2861, 0
        %v2865 = vmul.f32 %v2859, %v2863
        %v2866 = vmul.f32 %v2860, %v2863
        %v2867 = vld [vmem:[%s885] sm:$0x1]
        %v2869 = vperm.slane %v2867, 0
        %v2871 = vadd.f32 %v2865, %v2869
        %v2872 = vadd.f32 %v2866, %v2869
        %2873 = vst.msk [vmem:[#allocation2] sm:$0xff] %vm905, %v2871
        %2874 = vst.msk [vmem:[#allocation2 + $0x8] sm:$0xff] %vm905, %v2872
        %p2875 = scmp.eq.s32.totalorder %s33, 1
        // Predicated region
        $region109: #{transformer_forward.1} parent=103 // pred_check
          %p2876 = pneg %p2875
        $region110: #{transformer_forward.1} parent=103 // pred_check_branch
          %2878 = sbr.rel (%p2876) target = $region112
        $region111: #{transformer_forward.1} parent=103 // pred_region
          %v2879 = vld [vmem:[%s1] sm:$0x3]
          %v2880 = vld [vmem:[%s19] sm:$0xff]
          %v2881 = vld [vmem:[%s20] sm:$0x1]
          %v2883 = vperm.slane %v2881, 0
          %v2886 = vsel %vm1048, %v2879, 0
          %2888 = vmatpush.msra.mxu0 0.0
          %2889 = vmatpush.msra.mxu0 0.0
          %2890 = vmatpush.msra.mxu0 0.0
          %2891 = vmatpush.msra.mxu0 0.0
          %2892 = vmatpush.msra.mxu0 0.0
          %2893 = vmatpush.msra.mxu0 0.0
          %2894 = vmatpush.msra.mxu0 0.0
          %2895 = vmatpush.msra.mxu0 0.0
          %2896 = vmatpush.msra.mxu0 0.0
          %2897 = vmatpush.msra.mxu0 0.0
          %2898 = vmatpush.msra.mxu0 0.0
          %2899 = vmatpush.msra.mxu0 0.0
          %2900 = vmatpush.msra.mxu0 0.0
          %2901 = vmatpush.msra.mxu0 0.0
          %2902 = vmatpush.msra.mxu0 0.0
          %2903 = vmatpush.msra.mxu0 %v2880
          %2904 = vmatmul.f32.gmra.mxu0 %v2886
          %v2905 = vpop.f32.mrf.mxu0
          %v2906 = vadd.f32 %v2883, %v2905
          %2907 = vdwg.mxu0
          %v2908 = vld [vmem:[%s18] sm:$0xff]
          %v2909 = vld [vmem:[%s18 + $0x8] sm:$0xff]
          %v2912 = vrot.slane %v2872, 7
          %vm2913 = vcmask 1041409
          %v2914 = vsel %vm2913, %v2912, %v2871
          %v2915 = vsel %vm905, %v2914, 0
          %2917 = vmatpush.msra.mxu0 0.0
          %2918 = vmatpush.msra.mxu0 0.0
          %2919 = vmatpush.msra.mxu0 0.0
          %2920 = vmatpush.msra.mxu0 0.0
          %2921 = vmatpush.msra.mxu0 0.0
          %2922 = vmatpush.msra.mxu0 0.0
          %2923 = vmatpush.msra.mxu0 0.0
          %2924 = vmatpush.msra.mxu0 0.0
          %2925 = vmatpush.msra.mxu0 0.0
          %2926 = vmatpush.msra.mxu0 0.0
          %2927 = vmatpush.msra.mxu0 0.0
          %2928 = vmatpush.msra.mxu0 0.0
          %2929 = vmatpush.msra.mxu0 0.0
          %2930 = vmatpush.msra.mxu0 0.0
          %2931 = vmatpush.msra.mxu0 %v2909
          %2932 = vmatpush.msra.mxu0 %v2908
          %2933 = vmatmul.f32.gmra.mxu0 %v2915
          %v2934 = vpop.f32.mrf.mxu0
          %v2935 = vadd.f32 0.0, %v2934
          %2936 = vdwg.mxu0
          %v2937 = vadd.f32 %v2906, %v2935
          %s2938 = scalar_lea.vmem %s18, 16
          %v2939 = vld [vmem:[%s2938] sm:$0xff]
          %v2940 = vld [vmem:[%s2938 + $0x8] sm:$0xff]
          %v2941 = vrot.slane %v2871, 1
          %v2942 = vsel %vm2913, %v2872, %v2941
          %v2943 = vsel %vm905, %v2942, 0
          %2945 = vmatpush.msra.mxu0 0.0
          %2946 = vmatpush.msra.mxu0 0.0
          %2947 = vmatpush.msra.mxu0 0.0
          %2948 = vmatpush.msra.mxu0 0.0
          %2949 = vmatpush.msra.mxu0 0.0
          %2950 = vmatpush.msra.mxu0 0.0
          %2951 = vmatpush.msra.mxu0 0.0
          %2952 = vmatpush.msra.mxu0 0.0
          %2953 = vmatpush.msra.mxu0 0.0
          %2954 = vmatpush.msra.mxu0 0.0
          %2955 = vmatpush.msra.mxu0 0.0
          %2956 = vmatpush.msra.mxu0 0.0
          %2957 = vmatpush.msra.mxu0 0.0
          %2958 = vmatpush.msra.mxu0 0.0
          %2959 = vmatpush.msra.mxu0 %v2940
          %2960 = vmatpush.msra.mxu0 %v2939
          %2961 = vmatmul.f32.gmra.mxu0 %v2943
          %v2962 = vpop.f32.mrf.mxu0
          %v2963 = vadd.f32 0.0, %v2962
          %2964 = vdwg.mxu0
          %v2965 = vadd.f32 %v2937, %v2963
          %s2966 = scalar_lea.vmem %s18, 32
          %v2967 = vld [vmem:[%s2966] sm:$0xff]
          %v2968 = vld [vmem:[%s2966 + $0x8] sm:$0xff]
          %v2969 = vrot.slane %v2871, 2
          %v2970 = vrot.slane %v2872, 1
          %v2971 = vsel %vm2913, %v2970, %v2969
          %v2972 = vsel %vm905, %v2971, 0
          %2974 = vmatpush.msra.mxu0 0.0
          %2975 = vmatpush.msra.mxu0 0.0
          %2976 = vmatpush.msra.mxu0 0.0
          %2977 = vmatpush.msra.mxu0 0.0
          %2978 = vmatpush.msra.mxu0 0.0
          %2979 = vmatpush.msra.mxu0 0.0
          %2980 = vmatpush.msra.mxu0 0.0
          %2981 = vmatpush.msra.mxu0 0.0
          %2982 = vmatpush.msra.mxu0 0.0
          %2983 = vmatpush.msra.mxu0 0.0
          %2984 = vmatpush.msra.mxu0 0.0
          %2985 = vmatpush.msra.mxu0 0.0
          %2986 = vmatpush.msra.mxu0 0.0
          %2987 = vmatpush.msra.mxu0 0.0
          %2988 = vmatpush.msra.mxu0 %v2968
          %2989 = vmatpush.msra.mxu0 %v2967
          %2990 = vmatmul.f32.gmra.mxu0 %v2972
          %v2991 = vpop.f32.mrf.mxu0
          %v2992 = vadd.f32 0.0, %v2991
          %2993 = vdwg.mxu0
          %v2994 = vadd.f32 %v2965, %v2992
          %s2995 = scalar_lea.vmem %s18, 48
          %v2996 = vld [vmem:[%s2995] sm:$0xff]
          %v2997 = vld [vmem:[%s2995 + $0x8] sm:$0xff]
          %v2998 = vrot.slane %v2871, 3
          %v2999 = vrot.slane %v2872, 2
          %v3000 = vsel %vm2913, %v2999, %v2998
          %v3001 = vsel %vm905, %v3000, 0
          %3003 = vmatpush.msra.mxu0 0.0
          %3004 = vmatpush.msra.mxu0 0.0
          %3005 = vmatpush.msra.mxu0 0.0
          %3006 = vmatpush.msra.mxu0 0.0
          %3007 = vmatpush.msra.mxu0 0.0
          %3008 = vmatpush.msra.mxu0 0.0
          %3009 = vmatpush.msra.mxu0 0.0
          %3010 = vmatpush.msra.mxu0 0.0
          %3011 = vmatpush.msra.mxu0 0.0
          %3012 = vmatpush.msra.mxu0 0.0
          %3013 = vmatpush.msra.mxu0 0.0
          %3014 = vmatpush.msra.mxu0 0.0
          %3015 = vmatpush.msra.mxu0 0.0
          %3016 = vmatpush.msra.mxu0 0.0
          %3017 = vmatpush.msra.mxu0 %v2997
          %3018 = vmatpush.msra.mxu0 %v2996
          %3019 = vmatmul.f32.gmra.mxu0 %v3001
          %v3020 = vpop.f32.mrf.mxu0
          %v3021 = vadd.f32 0.0, %v3020
          %3022 = vdwg.mxu0
          %v3023 = vadd.f32 %v2994, %v3021
          %s3024 = scalar_lea.vmem %s18, 64
          %v3025 = vld [vmem:[%s3024] sm:$0xff]
          %v3026 = vld [vmem:[%s3024 + $0x8] sm:$0xff]
          %v3027 = vrot.slane %v2871, 4
          %v3028 = vrot.slane %v2872, 3
          %v3029 = vsel %vm2913, %v3028, %v3027
          %v3030 = vsel %vm905, %v3029, 0
          %3032 = vmatpush.msra.mxu0 0.0
          %3033 = vmatpush.msra.mxu0 0.0
          %3034 = vmatpush.msra.mxu0 0.0
          %3035 = vmatpush.msra.mxu0 0.0
          %3036 = vmatpush.msra.mxu0 0.0
          %3037 = vmatpush.msra.mxu0 0.0
          %3038 = vmatpush.msra.mxu0 0.0
          %3039 = vmatpush.msra.mxu0 0.0
          %3040 = vmatpush.msra.mxu0 0.0
          %3041 = vmatpush.msra.mxu0 0.0
          %3042 = vmatpush.msra.mxu0 0.0
          %3043 = vmatpush.msra.mxu0 0.0
          %3044 = vmatpush.msra.mxu0 0.0
          %3045 = vmatpush.msra.mxu0 0.0
          %3046 = vmatpush.msra.mxu0 %v3026
          %3047 = vmatpush.msra.mxu0 %v3025
          %3048 = vmatmul.f32.gmra.mxu0 %v3030
          %v3049 = vpop.f32.mrf.mxu0
          %v3050 = vadd.f32 0.0, %v3049
          %3051 = vdwg.mxu0
          %v3052 = vadd.f32 %v3023, %v3050
          %s3053 = scalar_lea.vmem %s18, 80
          %v3054 = vld [vmem:[%s3053] sm:$0xff]
          %v3055 = vld [vmem:[%s3053 + $0x8] sm:$0xff]
          %v3056 = vrot.slane %v2871, 5
          %v3057 = vrot.slane %v2872, 4
          %v3058 = vsel %vm2913, %v3057, %v3056
          %v3059 = vsel %vm905, %v3058, 0
          %3061 = vmatpush.msra.mxu0 0.0
          %3062 = vmatpush.msra.mxu0 0.0
          %3063 = vmatpush.msra.mxu0 0.0
          %3064 = vmatpush.msra.mxu0 0.0
          %3065 = vmatpush.msra.mxu0 0.0
          %3066 = vmatpush.msra.mxu0 0.0
          %3067 = vmatpush.msra.mxu0 0.0
          %3068 = vmatpush.msra.mxu0 0.0
          %3069 = vmatpush.msra.mxu0 0.0
          %3070 = vmatpush.msra.mxu0 0.0
          %3071 = vmatpush.msra.mxu0 0.0
          %3072 = vmatpush.msra.mxu0 0.0
          %3073 = vmatpush.msra.mxu0 0.0
          %3074 = vmatpush.msra.mxu0 0.0
          %3075 = vmatpush.msra.mxu0 %v3055
          %3076 = vmatpush.msra.mxu0 %v3054
          %3077 = vmatmul.f32.gmra.mxu0 %v3059
          %v3078 = vpop.f32.mrf.mxu0
          %v3079 = vadd.f32 0.0, %v3078
          %3080 = vdwg.mxu0
          %v3081 = vadd.f32 %v3052, %v3079
          %s3082 = scalar_lea.vmem %s18, 96
          %v3083 = vld [vmem:[%s3082] sm:$0xff]
          %v3084 = vld [vmem:[%s3082 + $0x8] sm:$0xff]
          %v3085 = vrot.slane %v2871, 6
          %v3086 = vrot.slane %v2872, 5
          %v3087 = vsel %vm2913, %v3086, %v3085
          %v3088 = vsel %vm905, %v3087, 0
          %3090 = vmatpush.msra.mxu0 0.0
          %3091 = vmatpush.msra.mxu0 0.0
          %3092 = vmatpush.msra.mxu0 0.0
          %3093 = vmatpush.msra.mxu0 0.0
          %3094 = vmatpush.msra.mxu0 0.0
          %3095 = vmatpush.msra.mxu0 0.0
          %3096 = vmatpush.msra.mxu0 0.0
          %3097 = vmatpush.msra.mxu0 0.0
          %3098 = vmatpush.msra.mxu0 0.0
          %3099 = vmatpush.msra.mxu0 0.0
          %3100 = vmatpush.msra.mxu0 0.0
          %3101 = vmatpush.msra.mxu0 0.0
          %3102 = vmatpush.msra.mxu0 0.0
          %3103 = vmatpush.msra.mxu0 0.0
          %3104 = vmatpush.msra.mxu0 %v3084
          %3105 = vmatpush.msra.mxu0 %v3083
          %3106 = vmatmul.f32.gmra.mxu0 %v3088
          %v3107 = vpop.f32.mrf.mxu0
          %v3108 = vadd.f32 0.0, %v3107
          %3109 = vdwg.mxu0
          %v3110 = vadd.f32 %v3081, %v3108
          %s3111 = scalar_lea.vmem %s18, 112
          %v3112 = vld [vmem:[%s3111] sm:$0xff]
          %v3113 = vld [vmem:[%s3111 + $0x8] sm:$0xff]
          %v3114 = vrot.slane %v2871, 7
          %v3115 = vrot.slane %v2872, 6
          %v3116 = vsel %vm2913, %v3115, %v3114
          %v3117 = vsel %vm905, %v3116, 0
          %3119 = vmatpush.msra.mxu0 0.0
          %3120 = vmatpush.msra.mxu0 0.0
          %3121 = vmatpush.msra.mxu0 0.0
          %3122 = vmatpush.msra.mxu0 0.0
          %3123 = vmatpush.msra.mxu0 0.0
          %3124 = vmatpush.msra.mxu0 0.0
          %3125 = vmatpush.msra.mxu0 0.0
          %3126 = vmatpush.msra.mxu0 0.0
          %3127 = vmatpush.msra.mxu0 0.0
          %3128 = vmatpush.msra.mxu0 0.0
          %3129 = vmatpush.msra.mxu0 0.0
          %3130 = vmatpush.msra.mxu0 0.0
          %3131 = vmatpush.msra.mxu0 0.0
          %3132 = vmatpush.msra.mxu0 0.0
          %3133 = vmatpush.msra.mxu0 %v3113
          %3134 = vmatpush.msra.mxu0 %v3112
          %3135 = vmatmul.f32.gmra.mxu0 %v3117
          %v3136 = vpop.f32.mrf.mxu0
          %v3137 = vadd.f32 0.0, %v3136
          %3138 = vdwg.mxu0
          %v3139 = vadd.f32 %v3110, %v3137
          %vm3140 = vcmask 25600
          %3141 = vst.msk [vmem:[#allocation3] sm:$0x3] %vm3140, %v3139
        $region112: #{transformer_forward.1} parent=103 // pred_fallthru
          _
        // Predicated region
        $region113: #{transformer_forward.1} parent=103 // pred_check
          %p3142 = pneg %p567
        $region114: #{transformer_forward.1} parent=103 // pred_check_branch
          %3144 = sbr.rel (%p3142) target = $region116
        $region115: #{transformer_forward.1} parent=103 // pred_region
          %3146 = vsyncadd [#allocation4], 0
          %s3148 = sshll.u32 [#allocation3], 4
          %s3149 = int_to_ptr.vmem [resolvable:$true] %s3148
          %s3150 = sshll.u32 %s21, 4
          %s3151 = int_to_ptr.hbm [resolvable:$true] %s3150
          %3153 = dma.vmem_to_hbm [thread:$0]  %s3149, 32, %s3151, [#allocation4]
        $region116: #{transformer_forward.1} parent=103 // pred_fallthru
          _
        // Predicated region
        $region117: #{transformer_forward.1} parent=103 // pred_check
          %p3154 = pneg %p567
        $region118: #{transformer_forward.1} parent=103 // pred_check_branch
          %3156 = sbr.rel (%p3154) target = $region120
        $region119: #{transformer_forward.1} parent=103 // pred_region
          %3158 = dma.done [#allocation4], 32
        $region120: #{transformer_forward.1} parent=103 // pred_fallthru
          _
      $region104: #{transformer_forward.1} parent=5 // pred_fallthru
        _
      %p3159 = scmp.le.s32.totalorder 2, %s28
      // Predicated region
      $region121: #{transformer_forward.1} parent=5 // pred_check
        %p3160 = pneg %p3159
      $region122: #{transformer_forward.1} parent=5 // pred_check_branch
        %3162 = sbr.rel (%p3160) target = $region124
      $region123: #{transformer_forward.1} parent=5 // pred_region
        %s3163 = ssub.s32 %s28, 2
      $region124: #{transformer_forward.1} parent=5 // pred_fallthru
        _
    $region6: #{transformer_forward.1} parent=1 // loop_footer
      %s32 = sadd.s32 1, %s28
    $region7: #{transformer_forward.1} parent=1 // loop_footer_branch
      %27 = sbr.rel target = $region3
    $region8: #{transformer_forward.1} parent=1 // loop_exit
      _
    %3164 = vsyncpa [#allocation4], 1
    %s3165 = scalar_lea.sflag [#allocation4], 1
    %3166 = vsyncpa %s3165, 1

</llo_original>
